<compile_context>
chip_gen: v7x
topology: tpu7x:2x2x1
jax: 0.10.0
libtpu: 0.0.40
codegen_flags: <defaults>
</compile_context>

<pallas_src>
import functools

import jax
import jax.numpy as jnp
from jax.experimental import pallas as pl
from jax.experimental.pallas import tpu as pltpu


def _round_up(x, m):
    return ((x + m - 1) // m) * m


def _double_q_kernel(obs_ref, act_ref, w1o_ref, w1a_ref, w2_ref, w3_ref, b_ref,
                     out_ref, *, apply_tanh, inv_one_minus_gamma):
    """Fused double-critic MLP on one [TB, .] batch tile."""
    b = b_ref[...]               # [3, 2H] packed biases (static slices below)
    b1 = b[0:1, :]               # [1, 2H]  layer-1 bias  (q1 || q2)
    b2 = b[1:2, :]               # [1, 2H]  layer-2 bias  (q1 || q2)
    b3 = b[2:3, 0:2]             # [1, 2]   output bias   (q1, q2)

    # Layer 1: obs@W1_obs + act@W1_act  (== cat(obs,act) @ W1, without the concat)
    h = (jnp.dot(obs_ref[...], w1o_ref[...], preferred_element_type=jnp.float32)
         + jnp.dot(act_ref[...], w1a_ref[...], preferred_element_type=jnp.float32)
         + b1)
    h = jnp.maximum(h, 0.0)                                               # [TB, 2H]

    # Layer 2: block-diagonal W2 keeps the two critics independent.
    h = jnp.dot(h, w2_ref[...], preferred_element_type=jnp.float32) + b2
    h = jnp.maximum(h, 0.0)                                               # [TB, 2H]

    # Layer 3: [2H, 2] -> column 0 is q1, column 1 is q2.
    q = jnp.dot(h, w3_ref[...], preferred_element_type=jnp.float32) + b3  # [TB, 2]

    if apply_tanh:
        q = jnp.tanh(q) * inv_one_minus_gamma     # EUP tanh, free vs MXU/VPU slots

    out_ref[...] = jnp.min(q, axis=-1, keepdims=True)                     # [TB, 1]


def make_mlp_params(key, in_dim, hidden_dim, out_dim):
    """Orthogonal weights (stored [in, out]), zero biases (as 2-D rows)."""
    k1, k2, k3 = jax.random.split(key, 3)
    ortho = jax.nn.initializers.orthogonal()
    w1 = ortho(k1, (in_dim, hidden_dim), jnp.float32)
    w2 = ortho(k2, (hidden_dim, hidden_dim), jnp.float32)
    w3 = ortho(k3, (hidden_dim, out_dim), jnp.float32)
    b1 = jnp.zeros((1, hidden_dim), jnp.float32)
    b2 = jnp.zeros((1, hidden_dim), jnp.float32)
    b3 = jnp.zeros((1, out_dim), jnp.float32)
    return (w1, b1, w2, b2, w3, b3)


def fuse_double_q_params(q1_params, q2_params, obs_dim):
    """Pack the two critic MLPs into one stacked weight set + one bias block."""
    w1a, b1a, w2a, b2a, w3a, b3a = q1_params
    w1b, b1b, w2b, b2b, w3b, b3b = q2_params
    H = w1a.shape[1]

    w1 = jnp.concatenate([w1a, w1b], axis=1)                  # [D, 2H]
    w1_obs = w1[:obs_dim, :]                                  # [obs_dim, 2H]
    w1_act = w1[obs_dim:, :]                                  # [act_dim, 2H]

    w2 = jnp.zeros((2 * H, 2 * H), jnp.float32)               # block-diagonal
    w2 = w2.at[:H, :H].set(w2a).at[H:, H:].set(w2b)

    w3 = jnp.zeros((2 * H, 2), jnp.float32)                   # [2H, 2]
    w3 = w3.at[:H, 0:1].set(w3a).at[H:, 1:2].set(w3b)

    b_all = jnp.zeros((3, 2 * H), jnp.float32)                 # packed biases
    b_all = b_all.at[0, :].set(jnp.concatenate([b1a[0], b1b[0]]))
    b_all = b_all.at[1, :].set(jnp.concatenate([b2a[0], b2b[0]]))
    b_all = b_all.at[2, 0].set(b3a[0, 0]).at[2, 1].set(b3b[0, 0])

    return w1_obs, w1_act, w2, w3, b_all


def double_q_forward(obs, action, q1_params, q2_params, *,
                     apply_tanh=True, gamma=0.99, tile_b=512):
    """min(Q1(obs, action), Q2(obs, action)) -> [B, 1] float32."""
    assert obs.shape[0] == action.shape[0]
    B, obs_dim = obs.shape
    act_dim = action.shape[1]

    w1_obs, w1_act, w2, w3, b_all = fuse_double_q_params(
        q1_params, q2_params, obs_dim)

    # Batch tile: as large as possible (amortize ~0.35us/grid-step overhead),
    # multiple of 8 on the sublane axis, never larger than the padded batch.
    tb = min(tile_b, _round_up(B, 8))
    tb = _round_up(tb, 8)
    B_pad = _round_up(B, tb)
    if B_pad != B:
        pad = B_pad - B
        obs = jnp.pad(obs, ((0, pad), (0, 0)))
        action = jnp.pad(action, ((0, pad), (0, 0)))

    kernel = functools.partial(
        _double_q_kernel,
        apply_tanh=apply_tanh,
        inv_one_minus_gamma=1.0 / (1.0 - gamma),
    )

    def full(shape):
        # Whole (small) array every grid step; constant block index -> resident.
        return pl.BlockSpec(shape, lambda i: (0, 0))

    out = pl.pallas_call(
        kernel,
        out_shape=jax.ShapeDtypeStruct((B_pad, 1), jnp.float32),
        grid_spec=pltpu.PrefetchScalarGridSpec(
            num_scalar_prefetch=0,
            grid=(B_pad // tb,),
            in_specs=[
                pl.BlockSpec((tb, obs_dim), lambda i: (i, 0)),   # obs tile
                pl.BlockSpec((tb, act_dim), lambda i: (i, 0)),   # action tile
                full(w1_obs.shape),                              # [obs_dim, 2H]
                full(w1_act.shape),                              # [act_dim, 2H]
                full(w2.shape),                                  # [2H, 2H]
                full(w3.shape),                                  # [2H, 2]
                full(b_all.shape),                               # [3, 2H]
            ],
            out_specs=pl.BlockSpec((tb, 1), lambda i: (i, 0)),
        ),
        compiler_params=pltpu.CompilerParams(
            dimension_semantics=("parallel",)),
    )(obs, action, w1_obs, w1_act, w2, w3, b_all)

    return out[:B]


def double_q_reference(obs, action, q1_params, q2_params, *,
                       apply_tanh=True, gamma=0.99):
    """Plain-JAX reference with the original (unfused) per-critic params."""
    xa = jnp.concatenate([obs, action], axis=-1)

    def mlp(p, x):
        w1, b1, w2, b2, w3, b3 = p
        h = jnp.maximum(x @ w1 + b1, 0.0)
        h = jnp.maximum(h @ w2 + b2, 0.0)
        return h @ w3 + b3

    q1 = mlp(q1_params, xa)
    q2 = mlp(q2_params, xa)
    if apply_tanh:
        q1 = jnp.tanh(q1) / (1.0 - gamma)
        q2 = jnp.tanh(q2) / (1.0 - gamma)
    return jnp.minimum(q1, q2)


if __name__ == "__main__":
    # Deterministic problem: obs_dim=11, action_dim=3, hidden_dim=32,
    # hidden_depth=2; args.method.tanh=True, args.gamma=0.99.
    # batch=1000 exercises both the tail-padding path and a 2-step parallel
    # grid (tile_b=512) so the v7x megacore can use both TensorCores.
    obs_dim, action_dim, hidden_dim = 11, 3, 32
    batch = 1000

    root = jax.random.PRNGKey(0)
    k_obs, k_act, k_q1, k_q2 = jax.random.split(root, 4)

    obs = jax.random.normal(k_obs, (batch, obs_dim), jnp.float32)
    action = jax.random.normal(k_act, (batch, action_dim), jnp.float32)

    q1_params = make_mlp_params(k_q1, obs_dim + action_dim, hidden_dim, 1)
    q2_params = make_mlp_params(k_q2, obs_dim + action_dim, hidden_dim, 1)

    out = double_q_forward(obs, action, q1_params, q2_params,
                           apply_tanh=True, gamma=0.99, tile_b=512)
    out = jax.block_until_ready(out)

    ref = double_q_reference(obs, action, q1_params, q2_params,
                             apply_tanh=True, gamma=0.99)
    assert out.shape == (batch, 1)
    assert jnp.allclose(out, ref, atol=1e-4, rtol=1e-5), "mismatch vs JAX reference"

    # TODO(synk): grad_pen (autograd gradient penalty) is a backward-mode
    # feature, not part of the forward kernel; it is not implemented here.
    print("KERNEL_OK")
</pallas_src>

<mosaic_0001>
module attributes {stable_mosaic.version = 11 : i64} {
  func.func @_double_q_kernel(%arg0: i32, %arg1: memref<512x11xf32, #tpu.memory_space<vmem>>, %arg2: memref<512x3xf32, #tpu.memory_space<vmem>>, %arg3: memref<11x64xf32, #tpu.memory_space<vmem>>, %arg4: memref<3x64xf32, #tpu.memory_space<vmem>>, %arg5: memref<64x64xf32, #tpu.memory_space<vmem>>, %arg6: memref<64x2xf32, #tpu.memory_space<vmem>>, %arg7: memref<3x64xf32, #tpu.memory_space<vmem>>, %arg8: memref<512x1xf32, #tpu.memory_space<vmem>>) attributes {dimension_semantics = [#tpu.dimension_semantics<parallel>], iteration_bounds = array<i64: 2>, scalar_prefetch = 0 : i64, scratch_operands = 0 : i64, tpu.core_type = #tpu.core_type<tc>, window_params = [{transform_indices = @transform_0, window_bounds = array<i64: 512, 11>}, {transform_indices = @transform_1, window_bounds = array<i64: 512, 3>}, {pipeline_mode = #tpu.pipeline_mode<synchronous>, transform_indices = @transform_2, window_bounds = array<i64: 11, 64>}, {pipeline_mode = #tpu.pipeline_mode<synchronous>, transform_indices = @transform_3, window_bounds = array<i64: 3, 64>}, {pipeline_mode = #tpu.pipeline_mode<synchronous>, transform_indices = @transform_4, window_bounds = array<i64: 64, 64>}, {pipeline_mode = #tpu.pipeline_mode<synchronous>, transform_indices = @transform_5, window_bounds = array<i64: 64, 2>}, {pipeline_mode = #tpu.pipeline_mode<synchronous>, transform_indices = @transform_6, window_bounds = array<i64: 3, 64>}, {transform_indices = @transform_7, window_bounds = array<i64: 512, 1>}]} {
    %c0 = arith.constant 0 : index
    %c0_0 = arith.constant 0 : index
    %0 = vector.load %arg7[%c0, %c0_0] : memref<3x64xf32, #tpu.memory_space<vmem>>, vector<3x64xf32>
    %1 = vector.extract_strided_slice %0 {offsets = [0, 0], sizes = [1, 64], strides = [1, 1]} : vector<3x64xf32> to vector<1x64xf32>
    %2 = vector.extract_strided_slice %0 {offsets = [1, 0], sizes = [1, 64], strides = [1, 1]} : vector<3x64xf32> to vector<1x64xf32>
    %3 = vector.extract_strided_slice %0 {offsets = [2, 0], sizes = [1, 2], strides = [1, 1]} : vector<3x64xf32> to vector<1x2xf32>
    %c0_1 = arith.constant 0 : index
    %c0_2 = arith.constant 0 : index
    %4 = vector.load %arg1[%c0_1, %c0_2] : memref<512x11xf32, #tpu.memory_space<vmem>>, vector<512x11xf32>
    %c0_3 = arith.constant 0 : index
    %c0_4 = arith.constant 0 : index
    %5 = vector.load %arg3[%c0_3, %c0_4] : memref<11x64xf32, #tpu.memory_space<vmem>>, vector<11x64xf32>
    %cst = arith.constant dense<0.000000e+00> : vector<512x64xf32>
    %6 = tpu.matmul %4, %5, %cst {dimension_numbers = #tpu.dot_dimension_numbers<[1], [0], [0], [1], [0, 0, 1, 1], [], []>} : vector<512x11xf32>, vector<11x64xf32>, vector<512x64xf32> -> vector<512x64xf32>
    %c0_5 = arith.constant 0 : index
    %c0_6 = arith.constant 0 : index
    %7 = vector.load %arg2[%c0_5, %c0_6] : memref<512x3xf32, #tpu.memory_space<vmem>>, vector<512x3xf32>
    %c0_7 = arith.constant 0 : index
    %c0_8 = arith.constant 0 : index
    %8 = vector.load %arg4[%c0_7, %c0_8] : memref<3x64xf32, #tpu.memory_space<vmem>>, vector<3x64xf32>
    %cst_9 = arith.constant dense<0.000000e+00> : vector<512x64xf32>
    %9 = tpu.matmul %7, %8, %cst_9 {dimension_numbers = #tpu.dot_dimension_numbers<[1], [0], [0], [1], [0, 0, 1, 1], [], []>} : vector<512x3xf32>, vector<3x64xf32>, vector<512x64xf32> -> vector<512x64xf32>
    %10 = arith.addf %6, %9 : vector<512x64xf32>
    %11 = vector.broadcast %1 : vector<1x64xf32> to vector<512x64xf32>
    %12 = arith.addf %10, %11 : vector<512x64xf32>
    %cst_10 = arith.constant 0.000000e+00 : f32
    %13 = vector.broadcast %cst_10 : f32 to vector<512x64xf32>
    %14 = arith.maximumf %12, %13 : vector<512x64xf32>
    %c0_11 = arith.constant 0 : index
    %c0_12 = arith.constant 0 : index
    %15 = vector.load %arg5[%c0_11, %c0_12] : memref<64x64xf32, #tpu.memory_space<vmem>>, vector<64x64xf32>
    %cst_13 = arith.constant dense<0.000000e+00> : vector<512x64xf32>
    %16 = tpu.matmul %14, %15, %cst_13 {dimension_numbers = #tpu.dot_dimension_numbers<[1], [0], [0], [1], [0, 0, 1, 1], [], []>} : vector<512x64xf32>, vector<64x64xf32>, vector<512x64xf32> -> vector<512x64xf32>
    %17 = vector.broadcast %2 : vector<1x64xf32> to vector<512x64xf32>
    %18 = arith.addf %16, %17 : vector<512x64xf32>
    %cst_14 = arith.constant 0.000000e+00 : f32
    %19 = vector.broadcast %cst_14 : f32 to vector<512x64xf32>
    %20 = arith.maximumf %18, %19 : vector<512x64xf32>
    %c0_15 = arith.constant 0 : index
    %c0_16 = arith.constant 0 : index
    %21 = vector.load %arg6[%c0_15, %c0_16] : memref<64x2xf32, #tpu.memory_space<vmem>>, vector<64x2xf32>
    %cst_17 = arith.constant dense<0.000000e+00> : vector<512x2xf32>
    %22 = tpu.matmul %20, %21, %cst_17 {dimension_numbers = #tpu.dot_dimension_numbers<[1], [0], [0], [1], [0, 0, 1, 1], [], []>} : vector<512x64xf32>, vector<64x2xf32>, vector<512x2xf32> -> vector<512x2xf32>
    %23 = vector.broadcast %3 : vector<1x2xf32> to vector<512x2xf32>
    %24 = arith.addf %22, %23 : vector<512x2xf32>
    %25 = math.tanh %24 : vector<512x2xf32>
    %cst_18 = arith.constant 1.000000e+02 : f32
    %26 = vector.broadcast %cst_18 : f32 to vector<512x2xf32>
    %27 = arith.mulf %25, %26 : vector<512x2xf32>
    %cst_19 = arith.constant dense<0x7F800000> : vector<512xf32>
    %28 = vector.multi_reduction <minimumf>, %27, %cst_19 [1] : vector<512x2xf32> to vector<512xf32>
    %29 = vector.shape_cast %28 : vector<512xf32> to vector<512x1xf32>
    %c0_20 = arith.constant 0 : index
    %c0_21 = arith.constant 0 : index
    %30 = vector.load %arg8[%c0_20, %c0_21] : memref<512x1xf32, #tpu.memory_space<vmem>>, vector<512x1xf32>
    tpu.vector_store %arg8[%c0_20, %c0_21], %29 {strides = array<i32>} : memref<512x1xf32, #tpu.memory_space<vmem>>, vector<512x1xf32>,
    return
  }
  func.func @transform_0(%arg0: i32) -> (i32, i32) {
    %c0_i32 = arith.constant 0 : i32
    %c0_i32_0 = arith.constant 0 : i32
    return %arg0, %c0_i32 : i32, i32
  }
  func.func @transform_1(%arg0: i32) -> (i32, i32) {
    %c0_i32 = arith.constant 0 : i32
    %c0_i32_0 = arith.constant 0 : i32
    return %arg0, %c0_i32 : i32, i32
  }
  func.func @transform_2(%arg0: i32) -> (i32, i32) {
    %c0_i32 = arith.constant 0 : i32
    %c0_i32_0 = arith.constant 0 : i32
    %c0_i32_1 = arith.constant 0 : i32
    return %c0_i32, %c0_i32_0 : i32, i32
  }
  func.func @transform_3(%arg0: i32) -> (i32, i32) {
    %c0_i32 = arith.constant 0 : i32
    %c0_i32_0 = arith.constant 0 : i32
    %c0_i32_1 = arith.constant 0 : i32
    return %c0_i32, %c0_i32_0 : i32, i32
  }
  func.func @transform_4(%arg0: i32) -> (i32, i32) {
    %c0_i32 = arith.constant 0 : i32
    %c0_i32_0 = arith.constant 0 : i32
    %c0_i32_1 = arith.constant 0 : i32
    return %c0_i32, %c0_i32_0 : i32, i32
  }
  func.func @transform_5(%arg0: i32) -> (i32, i32) {
    %c0_i32 = arith.constant 0 : i32
    %c0_i32_0 = arith.constant 0 : i32
    %c0_i32_1 = arith.constant 0 : i32
    return %c0_i32, %c0_i32_0 : i32, i32
  }
  func.func @transform_6(%arg0: i32) -> (i32, i32) {
    %c0_i32 = arith.constant 0 : i32
    %c0_i32_0 = arith.constant 0 : i32
    %c0_i32_1 = arith.constant 0 : i32
    return %c0_i32, %c0_i32_0 : i32, i32
  }
  func.func @transform_7(%arg0: i32) -> (i32, i32) {
    %c0_i32 = arith.constant 0 : i32
    %c0_i32_0 = arith.constant 0 : i32
    return %arg0, %c0_i32 : i32, i32
  }
}

</mosaic_0001>

<llo_original>
// kernel: tpu_custom_call.1
$region0: #{tpu_custom_call.1}
  #allocation0 [shape = 'u32[]', space=smem, size = 0x4, offset = 0x4, fixed_abs, tag = 'smem constant byte address 0x4 - core index']
  #allocation1 [shape = 'u32[144,128]{1,0:T(1,128)}', space=vmem, size = 0x12000, scoped, tag = 'internal scratch']
  %s0 = inlined_call_operand.vmem [shape: f32[1024,11], index: 0, kind: input, shape index: {}]
  %s1 = inlined_call_operand.vmem [shape: f32[1024,3], index: 1, kind: input, shape index: {}]
  %s2 = inlined_call_operand.vmem [shape: f32[11,64], index: 2, kind: input, shape index: {}]
  %s3 = inlined_call_operand.vmem [shape: f32[3,64], index: 3, kind: input, shape index: {}]
  %s4 = inlined_call_operand.vmem [shape: f32[64,64], index: 4, kind: input, shape index: {}]
  %s5 = inlined_call_operand.vmem [shape: f32[64,2], index: 5, kind: input, shape index: {}]
  %s6 = inlined_call_operand.vmem [shape: f32[3,64], index: 6, kind: input, shape index: {}]
  %s7 = inlined_call_operand.vmem [shape: f32[1024,1], index: 7, kind: output, shape index: {}]
  %s8 = sld [smem:[#allocation0]]
  $region61: #{tpu_custom_call.1} parent=0
    _
  %s10 = ssub.s32 1, %s8
  %s11 = scalar_select 0, %s10, %s8
  loop: start=0, step=1, limit=4
  $region2: #{tpu_custom_call.1} parent=0 // loop_pre_header
    _
  $region3: #{tpu_custom_call.1} parent=0 // loop_header
    %s13 = sphi 0, %s17
    %p14 = scmp.ge.s32.totalorder %s13, 4
    %s23 = sphi 0, %s25
    %s26 = sphi 0, %s23
    %s27 = sphi 0, %s26
    %s43 = sphi 0, %s27
    %s49 = sphi 0, %s51
    %s52 = sphi 0, %s49
    %s53 = sphi 0, %s52
    %s69 = sphi 0, %s53
    %s73 = sphi 0, %s73
    %s75 = sphi 0, %s73
    %s76 = sphi 0, %s75
    %s90 = sphi 0, %s76
    %s94 = sphi 0, %s94
    %s96 = sphi 0, %s94
    %s97 = sphi 0, %s96
    %s111 = sphi 0, %s97
    %s115 = sphi 0, %s115
    %s117 = sphi 0, %s115
    %s118 = sphi 0, %s117
    %s132 = sphi 0, %s118
    %s136 = sphi 0, %s136
    %s138 = sphi 0, %s136
    %s139 = sphi 0, %s138
    %s153 = sphi 0, %s139
    %s157 = sphi 0, %s157
    %s159 = sphi 0, %s157
    %s160 = sphi 0, %s159
    %s174 = sphi 0, %s160
    %s180 = sphi 0, %s182
    %s183 = sphi 0, %s180
    %s184 = sphi 0, %s183
    %s200 = sphi 0, %s184
  $region4: #{tpu_custom_call.1} parent=0 // loop_header_branch
    %16 = sbr.rel (%p14) target = $region8
  $region5: #{tpu_custom_call.1} parent=0 // loop_body
    %s18 = ssub.s32 %s13, 1
    %s19 = ssub.s32 %s13, 2
    %s20 = sadd.s32 %s13, 1
    %s21 = ssub.s32 %s13, %s20
    %p22 = scmp.eq.s32.totalorder %s21, 0
    %s24 = sadd.s32 %s23, 1
    %s25 = scalar_select %p22, %s23, %s24
    %p28 = pneg %p22
    %p29 = scmp.eq.s32.totalorder %s13, 1
    %p30 = por %p28, %p29
    %p31 = scmp.ne.s32.totalorder %s23, %s26
    %p32 = scmp.eq.s32.totalorder %s13, 0
    %p33 = por %p31, %p32
    %p34 = scmp.ne.s32.totalorder %s23, %s26
    %p35 = scmp.eq.s32.totalorder %s18, 1
    %p36 = por %p34, %p35
    %p37 = scmp.ne.s32.totalorder %s26, %s27
    %p38 = scmp.eq.s32.totalorder %s18, 0
    %p39 = por %p37, %p38
    %p40 = scmp.ne.s32.totalorder %s26, %s27
    %p41 = scmp.eq.s32.totalorder %s19, 1
    %p42 = por %p40, %p41
    %p44 = scmp.ne.s32.totalorder %s27, %s43
    %p45 = scmp.eq.s32.totalorder %s19, 0
    %p46 = por %p44, %p45
    %s47 = ssub.s32 %s13, %s20
    %p48 = scmp.eq.s32.totalorder %s47, 0
    %s50 = sadd.s32 %s49, 1
    %s51 = scalar_select %p48, %s49, %s50
    %p54 = pneg %p48
    %p55 = scmp.eq.s32.totalorder %s13, 1
    %p56 = por %p54, %p55
    %p57 = scmp.ne.s32.totalorder %s49, %s52
    %p58 = scmp.eq.s32.totalorder %s13, 0
    %p59 = por %p57, %p58
    %p60 = scmp.ne.s32.totalorder %s49, %s52
    %p61 = scmp.eq.s32.totalorder %s18, 1
    %p62 = por %p60, %p61
    %p63 = scmp.ne.s32.totalorder %s52, %s53
    %p64 = scmp.eq.s32.totalorder %s18, 0
    %p65 = por %p63, %p64
    %p66 = scmp.ne.s32.totalorder %s52, %s53
    %p67 = scmp.eq.s32.totalorder %s19, 1
    %p68 = por %p66, %p67
    %p70 = scmp.ne.s32.totalorder %s53, %s69
    %p71 = scmp.eq.s32.totalorder %s19, 0
    %p72 = por %p70, %p71
    %s74 = sadd.s32 %s73, 1
    %p77 = scmp.eq.s32.totalorder %s13, 1
    %p78 = scmp.ne.s32.totalorder %s73, %s75
    %p79 = scmp.eq.s32.totalorder %s13, 0
    %p80 = por %p78, %p79
    %p81 = scmp.ne.s32.totalorder %s73, %s75
    %p82 = scmp.eq.s32.totalorder %s18, 1
    %p83 = por %p81, %p82
    %p84 = scmp.ne.s32.totalorder %s75, %s76
    %p85 = scmp.eq.s32.totalorder %s18, 0
    %p86 = por %p84, %p85
    %p87 = scmp.ne.s32.totalorder %s75, %s76
    %p88 = scmp.eq.s32.totalorder %s19, 1
    %p89 = por %p87, %p88
    %p91 = scmp.ne.s32.totalorder %s76, %s90
    %p92 = scmp.eq.s32.totalorder %s19, 0
    %p93 = por %p91, %p92
    %s95 = sadd.s32 %s94, 1
    %p98 = scmp.eq.s32.totalorder %s13, 1
    %p99 = scmp.ne.s32.totalorder %s94, %s96
    %p100 = scmp.eq.s32.totalorder %s13, 0
    %p101 = por %p99, %p100
    %p102 = scmp.ne.s32.totalorder %s94, %s96
    %p103 = scmp.eq.s32.totalorder %s18, 1
    %p104 = por %p102, %p103
    %p105 = scmp.ne.s32.totalorder %s96, %s97
    %p106 = scmp.eq.s32.totalorder %s18, 0
    %p107 = por %p105, %p106
    %p108 = scmp.ne.s32.totalorder %s96, %s97
    %p109 = scmp.eq.s32.totalorder %s19, 1
    %p110 = por %p108, %p109
    %p112 = scmp.ne.s32.totalorder %s97, %s111
    %p113 = scmp.eq.s32.totalorder %s19, 0
    %p114 = por %p112, %p113
    %s116 = sadd.s32 %s115, 1
    %p119 = scmp.eq.s32.totalorder %s13, 1
    %p120 = scmp.ne.s32.totalorder %s115, %s117
    %p121 = scmp.eq.s32.totalorder %s13, 0
    %p122 = por %p120, %p121
    %p123 = scmp.ne.s32.totalorder %s115, %s117
    %p124 = scmp.eq.s32.totalorder %s18, 1
    %p125 = por %p123, %p124
    %p126 = scmp.ne.s32.totalorder %s117, %s118
    %p127 = scmp.eq.s32.totalorder %s18, 0
    %p128 = por %p126, %p127
    %p129 = scmp.ne.s32.totalorder %s117, %s118
    %p130 = scmp.eq.s32.totalorder %s19, 1
    %p131 = por %p129, %p130
    %p133 = scmp.ne.s32.totalorder %s118, %s132
    %p134 = scmp.eq.s32.totalorder %s19, 0
    %p135 = por %p133, %p134
    %s137 = sadd.s32 %s136, 1
    %p140 = scmp.eq.s32.totalorder %s13, 1
    %p141 = scmp.ne.s32.totalorder %s136, %s138
    %p142 = scmp.eq.s32.totalorder %s13, 0
    %p143 = por %p141, %p142
    %p144 = scmp.ne.s32.totalorder %s136, %s138
    %p145 = scmp.eq.s32.totalorder %s18, 1
    %p146 = por %p144, %p145
    %p147 = scmp.ne.s32.totalorder %s138, %s139
    %p148 = scmp.eq.s32.totalorder %s18, 0
    %p149 = por %p147, %p148
    %p150 = scmp.ne.s32.totalorder %s138, %s139
    %p151 = scmp.eq.s32.totalorder %s19, 1
    %p152 = por %p150, %p151
    %p154 = scmp.ne.s32.totalorder %s139, %s153
    %p155 = scmp.eq.s32.totalorder %s19, 0
    %p156 = por %p154, %p155
    %s158 = sadd.s32 %s157, 1
    %p161 = scmp.eq.s32.totalorder %s13, 1
    %p162 = scmp.ne.s32.totalorder %s157, %s159
    %p163 = scmp.eq.s32.totalorder %s13, 0
    %p164 = por %p162, %p163
    %p165 = scmp.ne.s32.totalorder %s157, %s159
    %p166 = scmp.eq.s32.totalorder %s18, 1
    %p167 = por %p165, %p166
    %p168 = scmp.ne.s32.totalorder %s159, %s160
    %p169 = scmp.eq.s32.totalorder %s18, 0
    %p170 = por %p168, %p169
    %p171 = scmp.ne.s32.totalorder %s159, %s160
    %p172 = scmp.eq.s32.totalorder %s19, 1
    %p173 = por %p171, %p172
    %p175 = scmp.ne.s32.totalorder %s160, %s174
    %p176 = scmp.eq.s32.totalorder %s19, 0
    %p177 = por %p175, %p176
    %s178 = ssub.s32 %s13, %s20
    %p179 = scmp.eq.s32.totalorder %s178, 0
    %s181 = sadd.s32 %s180, 1
    %s182 = scalar_select %p179, %s180, %s181
    %p185 = pneg %p179
    %p186 = scmp.eq.s32.totalorder %s13, 1
    %p187 = por %p185, %p186
    %p188 = scmp.ne.s32.totalorder %s180, %s183
    %p189 = scmp.eq.s32.totalorder %s13, 0
    %p190 = por %p188, %p189
    %p191 = scmp.ne.s32.totalorder %s180, %s183
    %p192 = scmp.eq.s32.totalorder %s18, 1
    %p193 = por %p191, %p192
    %p194 = scmp.ne.s32.totalorder %s183, %s184
    %p195 = scmp.eq.s32.totalorder %s18, 0
    %p196 = por %p194, %p195
    %p197 = scmp.ne.s32.totalorder %s183, %s184
    %p198 = scmp.eq.s32.totalorder %s19, 1
    %p199 = por %p197, %p198
    %p201 = scmp.ne.s32.totalorder %s184, %s200
    %p202 = scmp.eq.s32.totalorder %s19, 0
    %p203 = por %p201, %p202
    %p204 = scmp.le.s32.totalorder 1, %s13
    %p205 = scmp.lt.s32.totalorder %s13, 3
    %p206 = pnand %p204, %p205
    %p207 = pneg %p206
    // Predicated region
    $region9: #{tpu_custom_call.1} parent=5 // pred_check
      _
    $region10: #{tpu_custom_call.1} parent=5 // pred_check_branch
      %209 = sbr.rel (%p206) target = $region12
    $region11: #{tpu_custom_call.1} parent=5 // pred_region
      %s210 = ssub.s32 %s13, 1
      // Predicated region
      $region13: #{tpu_custom_call.1} parent=11 // pred_check
        %p211 = pneg %p86
      $region14: #{tpu_custom_call.1} parent=11 // pred_check_branch
        %213 = sbr.rel (%p211) target = $region16
      $region15: #{tpu_custom_call.1} parent=11 // pred_region
        _
      $region16: #{tpu_custom_call.1} parent=11 // pred_fallthru
        _
      // Predicated region
      $region17: #{tpu_custom_call.1} parent=11 // pred_check
        %p214 = pneg %p107
      $region18: #{tpu_custom_call.1} parent=11 // pred_check_branch
        %216 = sbr.rel (%p214) target = $region20
      $region19: #{tpu_custom_call.1} parent=11 // pred_region
        _
      $region20: #{tpu_custom_call.1} parent=11 // pred_fallthru
        _
      // Predicated region
      $region21: #{tpu_custom_call.1} parent=11 // pred_check
        %p217 = pneg %p128
      $region22: #{tpu_custom_call.1} parent=11 // pred_check_branch
        %219 = sbr.rel (%p217) target = $region24
      $region23: #{tpu_custom_call.1} parent=11 // pred_region
        _
      $region24: #{tpu_custom_call.1} parent=11 // pred_fallthru
        _
      // Predicated region
      $region25: #{tpu_custom_call.1} parent=11 // pred_check
        %p220 = pneg %p149
      $region26: #{tpu_custom_call.1} parent=11 // pred_check_branch
        %222 = sbr.rel (%p220) target = $region28
      $region27: #{tpu_custom_call.1} parent=11 // pred_region
        _
      $region28: #{tpu_custom_call.1} parent=11 // pred_fallthru
        _
      // Predicated region
      $region29: #{tpu_custom_call.1} parent=11 // pred_check
        %p223 = pneg %p170
      $region30: #{tpu_custom_call.1} parent=11 // pred_check_branch
        %225 = sbr.rel (%p223) target = $region32
      $region31: #{tpu_custom_call.1} parent=11 // pred_region
        _
      $region32: #{tpu_custom_call.1} parent=11 // pred_fallthru
        _
    $region12: #{tpu_custom_call.1} parent=5 // pred_fallthru
      _
    %p226 = scmp.lt.s32.totalorder %s13, 2
    // Predicated region
    $region33: #{tpu_custom_call.1} parent=5 // pred_check
      %p227 = pneg %p226
    $region34: #{tpu_custom_call.1} parent=5 // pred_check_branch
      %229 = sbr.rel (%p227) target = $region36
    $region35: #{tpu_custom_call.1} parent=5 // pred_region
      // Predicated region
      $region37: #{tpu_custom_call.1} parent=35 // pred_check
        %p230 = pneg %p33
      $region38: #{tpu_custom_call.1} parent=35 // pred_check_branch
        %232 = sbr.rel (%p230) target = $region40
      $region39: #{tpu_custom_call.1} parent=35 // pred_region
        %s233 = smul.u32 64, %s13
        %p234 = scmp.lt.s32.totalorder %s233, 127
        %s235 = scalar_select %p234, %s233, 127
        %s236 = smul.addr %s235, 8
        %s237 = scalar_lea.vmem %s0, %s236
        %s238 = smul.u32 64, %s13
      $region40: #{tpu_custom_call.1} parent=35 // pred_fallthru
        _
      // Predicated region
      $region41: #{tpu_custom_call.1} parent=35 // pred_check
        %p239 = pneg %p59
      $region42: #{tpu_custom_call.1} parent=35 // pred_check_branch
        %241 = sbr.rel (%p239) target = $region44
      $region43: #{tpu_custom_call.1} parent=35 // pred_region
        %s242 = smul.u32 64, %s13
        %p243 = scmp.lt.s32.totalorder %s242, 127
        %s244 = scalar_select %p243, %s242, 127
        %s245 = smul.addr %s244, 8
        %s246 = scalar_lea.vmem %s1, %s245
        %s247 = smul.u32 64, %s13
      $region44: #{tpu_custom_call.1} parent=35 // pred_fallthru
        _
    $region36: #{tpu_custom_call.1} parent=5 // pred_fallthru
      _
    %p248 = scmp.le.s32.totalorder 1, %s13
    %p249 = scmp.lt.s32.totalorder %s13, 3
    %p250 = pnand %p248, %p249
    %p251 = pneg %p250
    // Predicated region
    $region45: #{tpu_custom_call.1} parent=5 // pred_check
      _
    $region46: #{tpu_custom_call.1} parent=5 // pred_check_branch
      %253 = sbr.rel (%p250) target = $region48
    $region47: #{tpu_custom_call.1} parent=5 // pred_region
      %s254 = ssub.s32 %s13, 1
      %s255 = smul.u32 64, %s18
      %p256 = scmp.lt.s32.totalorder %s255, 127
      %s257 = scalar_select %p256, %s255, 127
      %s258 = smul.addr %s257, 8
      %s259 = scalar_lea.vmem %s0, %s258
      %p260 = pneg %p39
      %p261 = pneg %p36
      %s262 = smul.u32 64, %s18
      %p263 = scmp.lt.s32.totalorder %s262, 127
      %s264 = scalar_select %p263, %s262, 127
      %s265 = smul.addr %s264, 8
      %s266 = scalar_lea.vmem %s1, %s265
      %p267 = pneg %p65
      %p268 = pneg %p62
      %p269 = pneg %p86
      %p270 = pneg %p83
      %p271 = pneg %p107
      %p272 = pneg %p104
      %p273 = pneg %p128
      %p274 = pneg %p125
      %p275 = pneg %p149
      %p276 = pneg %p146
      %p277 = pneg %p170
      %p278 = pneg %p167
      %p279 = pneg %p196
      %p280 = pneg %p193
      %s281 = smul.u32 64, %s18
      %p282 = scmp.lt.s32.totalorder %s281, 127
      %s283 = scalar_select %p282, %s281, 127
      %s284 = smul.addr %s283, 8
      %s285 = scalar_lea.vmem %s7, %s284
      %s286 = smul.u32 64, %s18
      %p287 = scmp.lt.s32.totalorder %s286, 127
      %s288 = scalar_select %p287, %s286, 127
      %s289 = smul.addr %s288, 8
      %s290 = scalar_lea.vmem %s0, %s289
      %s291 = smul.u32 64, %s18
      %s292 = smul.u32 64, %s18
      %p293 = scmp.lt.s32.totalorder %s292, 127
      %s294 = scalar_select %p293, %s292, 127
      %s295 = smul.addr %s294, 8
      %s296 = scalar_lea.vmem %s1, %s295
      %s297 = smul.u32 64, %s18
      %s298 = smul.u32 64, %s18
      %p299 = scmp.lt.s32.totalorder %s298, 127
      %s300 = scalar_select %p299, %s298, 127
      %s301 = smul.addr %s300, 8
      %s302 = scalar_lea.vmem %s7, %s301
      %s303 = smul.u32 64, %s18
      %v304 = vld [vmem:[%s6] sm:$0x7]
      %v305 = vld [vmem:[%s290] sm:$0xff]
      %v306 = vld [vmem:[%s290 + $0x8] sm:$0xff]
      %v307 = vld [vmem:[%s290 + $0x10] sm:$0xff]
      %v308 = vld [vmem:[%s290 + $0x18] sm:$0xff]
      %v309 = vld [vmem:[%s290 + $0x20] sm:$0xff]
      %v310 = vld [vmem:[%s290 + $0x28] sm:$0xff]
      %v311 = vld [vmem:[%s290 + $0x30] sm:$0xff]
      %v312 = vld [vmem:[%s290 + $0x38] sm:$0xff]
      %v313 = vld [vmem:[%s290 + $0x40] sm:$0xff]
      %v314 = vld [vmem:[%s290 + $0x48] sm:$0xff]
      %v315 = vld [vmem:[%s290 + $0x50] sm:$0xff]
      %v316 = vld [vmem:[%s290 + $0x58] sm:$0xff]
      %v317 = vld [vmem:[%s290 + $0x60] sm:$0xff]
      %v318 = vld [vmem:[%s290 + $0x68] sm:$0xff]
      %v319 = vld [vmem:[%s290 + $0x70] sm:$0xff]
      %v320 = vld [vmem:[%s290 + $0x78] sm:$0xff]
      %v321 = vld [vmem:[%s290 + $0x80] sm:$0xff]
      %v322 = vld [vmem:[%s290 + $0x88] sm:$0xff]
      %v323 = vld [vmem:[%s290 + $0x90] sm:$0xff]
      %v324 = vld [vmem:[%s290 + $0x98] sm:$0xff]
      %v325 = vld [vmem:[%s290 + $0xa0] sm:$0xff]
      %v326 = vld [vmem:[%s290 + $0xa8] sm:$0xff]
      %v327 = vld [vmem:[%s290 + $0xb0] sm:$0xff]
      %v328 = vld [vmem:[%s290 + $0xb8] sm:$0xff]
      %v329 = vld [vmem:[%s290 + $0xc0] sm:$0xff]
      %v330 = vld [vmem:[%s290 + $0xc8] sm:$0xff]
      %v331 = vld [vmem:[%s290 + $0xd0] sm:$0xff]
      %v332 = vld [vmem:[%s290 + $0xd8] sm:$0xff]
      %v333 = vld [vmem:[%s290 + $0xe0] sm:$0xff]
      %v334 = vld [vmem:[%s290 + $0xe8] sm:$0xff]
      %v335 = vld [vmem:[%s290 + $0xf0] sm:$0xff]
      %v336 = vld [vmem:[%s290 + $0xf8] sm:$0xff]
      %v337 = vld [vmem:[%s290 + $0x100] sm:$0xff]
      %v338 = vld [vmem:[%s290 + $0x108] sm:$0xff]
      %v339 = vld [vmem:[%s290 + $0x110] sm:$0xff]
      %v340 = vld [vmem:[%s290 + $0x118] sm:$0xff]
      %v341 = vld [vmem:[%s290 + $0x120] sm:$0xff]
      %v342 = vld [vmem:[%s290 + $0x128] sm:$0xff]
      %v343 = vld [vmem:[%s290 + $0x130] sm:$0xff]
      %v344 = vld [vmem:[%s290 + $0x138] sm:$0xff]
      %v345 = vld [vmem:[%s290 + $0x140] sm:$0xff]
      %v346 = vld [vmem:[%s290 + $0x148] sm:$0xff]
      %v347 = vld [vmem:[%s290 + $0x150] sm:$0xff]
      %v348 = vld [vmem:[%s290 + $0x158] sm:$0xff]
      %v349 = vld [vmem:[%s290 + $0x160] sm:$0xff]
      %v350 = vld [vmem:[%s290 + $0x168] sm:$0xff]
      %v351 = vld [vmem:[%s290 + $0x170] sm:$0xff]
      %v352 = vld [vmem:[%s290 + $0x178] sm:$0xff]
      %v353 = vld [vmem:[%s290 + $0x180] sm:$0xff]
      %v354 = vld [vmem:[%s290 + $0x188] sm:$0xff]
      %v355 = vld [vmem:[%s290 + $0x190] sm:$0xff]
      %v356 = vld [vmem:[%s290 + $0x198] sm:$0xff]
      %v357 = vld [vmem:[%s290 + $0x1a0] sm:$0xff]
      %v358 = vld [vmem:[%s290 + $0x1a8] sm:$0xff]
      %v359 = vld [vmem:[%s290 + $0x1b0] sm:$0xff]
      %v360 = vld [vmem:[%s290 + $0x1b8] sm:$0xff]
      %v361 = vld [vmem:[%s290 + $0x1c0] sm:$0xff]
      %v362 = vld [vmem:[%s290 + $0x1c8] sm:$0xff]
      %v363 = vld [vmem:[%s290 + $0x1d0] sm:$0xff]
      %v364 = vld [vmem:[%s290 + $0x1d8] sm:$0xff]
      %v365 = vld [vmem:[%s290 + $0x1e0] sm:$0xff]
      %v366 = vld [vmem:[%s290 + $0x1e8] sm:$0xff]
      %v367 = vld [vmem:[%s290 + $0x1f0] sm:$0xff]
      %v368 = vld [vmem:[%s290 + $0x1f8] sm:$0xff]
      %v369 = vld [vmem:[%s2] sm:$0xff]
      %v370 = vld [vmem:[%s2 + $0x8] sm:$0x7]
      %v371 = vld [vmem:[%s296] sm:$0xff]
      %v372 = vld [vmem:[%s296 + $0x8] sm:$0xff]
      %v373 = vld [vmem:[%s296 + $0x10] sm:$0xff]
      %v374 = vld [vmem:[%s296 + $0x18] sm:$0xff]
      %v375 = vld [vmem:[%s296 + $0x20] sm:$0xff]
      %v376 = vld [vmem:[%s296 + $0x28] sm:$0xff]
      %v377 = vld [vmem:[%s296 + $0x30] sm:$0xff]
      %v378 = vld [vmem:[%s296 + $0x38] sm:$0xff]
      %v379 = vld [vmem:[%s296 + $0x40] sm:$0xff]
      %v380 = vld [vmem:[%s296 + $0x48] sm:$0xff]
      %v381 = vld [vmem:[%s296 + $0x50] sm:$0xff]
      %v382 = vld [vmem:[%s296 + $0x58] sm:$0xff]
      %v383 = vld [vmem:[%s296 + $0x60] sm:$0xff]
      %v384 = vld [vmem:[%s296 + $0x68] sm:$0xff]
      %v385 = vld [vmem:[%s296 + $0x70] sm:$0xff]
      %v386 = vld [vmem:[%s296 + $0x78] sm:$0xff]
      %v387 = vld [vmem:[%s296 + $0x80] sm:$0xff]
      %v388 = vld [vmem:[%s296 + $0x88] sm:$0xff]
      %v389 = vld [vmem:[%s296 + $0x90] sm:$0xff]
      %v390 = vld [vmem:[%s296 + $0x98] sm:$0xff]
      %v391 = vld [vmem:[%s296 + $0xa0] sm:$0xff]
      %v392 = vld [vmem:[%s296 + $0xa8] sm:$0xff]
      %v393 = vld [vmem:[%s296 + $0xb0] sm:$0xff]
      %v394 = vld [vmem:[%s296 + $0xb8] sm:$0xff]
      %v395 = vld [vmem:[%s296 + $0xc0] sm:$0xff]
      %v396 = vld [vmem:[%s296 + $0xc8] sm:$0xff]
      %v397 = vld [vmem:[%s296 + $0xd0] sm:$0xff]
      %v398 = vld [vmem:[%s296 + $0xd8] sm:$0xff]
      %v399 = vld [vmem:[%s296 + $0xe0] sm:$0xff]
      %v400 = vld [vmem:[%s296 + $0xe8] sm:$0xff]
      %v401 = vld [vmem:[%s296 + $0xf0] sm:$0xff]
      %v402 = vld [vmem:[%s296 + $0xf8] sm:$0xff]
      %v403 = vld [vmem:[%s296 + $0x100] sm:$0xff]
      %v404 = vld [vmem:[%s296 + $0x108] sm:$0xff]
      %v405 = vld [vmem:[%s296 + $0x110] sm:$0xff]
      %v406 = vld [vmem:[%s296 + $0x118] sm:$0xff]
      %v407 = vld [vmem:[%s296 + $0x120] sm:$0xff]
      %v408 = vld [vmem:[%s296 + $0x128] sm:$0xff]
      %v409 = vld [vmem:[%s296 + $0x130] sm:$0xff]
      %v410 = vld [vmem:[%s296 + $0x138] sm:$0xff]
      %v411 = vld [vmem:[%s296 + $0x140] sm:$0xff]
      %v412 = vld [vmem:[%s296 + $0x148] sm:$0xff]
      %v413 = vld [vmem:[%s296 + $0x150] sm:$0xff]
      %v414 = vld [vmem:[%s296 + $0x158] sm:$0xff]
      %v415 = vld [vmem:[%s296 + $0x160] sm:$0xff]
      %v416 = vld [vmem:[%s296 + $0x168] sm:$0xff]
      %v417 = vld [vmem:[%s296 + $0x170] sm:$0xff]
      %v418 = vld [vmem:[%s296 + $0x178] sm:$0xff]
      %v419 = vld [vmem:[%s296 + $0x180] sm:$0xff]
      %v420 = vld [vmem:[%s296 + $0x188] sm:$0xff]
      %v421 = vld [vmem:[%s296 + $0x190] sm:$0xff]
      %v422 = vld [vmem:[%s296 + $0x198] sm:$0xff]
      %v423 = vld [vmem:[%s296 + $0x1a0] sm:$0xff]
      %v424 = vld [vmem:[%s296 + $0x1a8] sm:$0xff]
      %v425 = vld [vmem:[%s296 + $0x1b0] sm:$0xff]
      %v426 = vld [vmem:[%s296 + $0x1b8] sm:$0xff]
      %v427 = vld [vmem:[%s296 + $0x1c0] sm:$0xff]
      %v428 = vld [vmem:[%s296 + $0x1c8] sm:$0xff]
      %v429 = vld [vmem:[%s296 + $0x1d0] sm:$0xff]
      %v430 = vld [vmem:[%s296 + $0x1d8] sm:$0xff]
      %v431 = vld [vmem:[%s296 + $0x1e0] sm:$0xff]
      %v432 = vld [vmem:[%s296 + $0x1e8] sm:$0xff]
      %v433 = vld [vmem:[%s296 + $0x1f0] sm:$0xff]
      %v434 = vld [vmem:[%s296 + $0x1f8] sm:$0xff]
      %v435 = vld [vmem:[%s3] sm:$0x7]
      %vm436 = vcmask 23552
      %v438 = vsel %vm436, %v371, 0
      %v441 = vsel %vm436, %v372, 0
      %v444 = vsel %vm436, %v373, 0
      %v447 = vsel %vm436, %v374, 0
      %v450 = vsel %vm436, %v375, 0
      %v453 = vsel %vm436, %v376, 0
      %v456 = vsel %vm436, %v377, 0
      %v459 = vsel %vm436, %v378, 0
      %v462 = vsel %vm436, %v379, 0
      %v465 = vsel %vm436, %v380, 0
      %v468 = vsel %vm436, %v381, 0
      %v471 = vsel %vm436, %v382, 0
      %v474 = vsel %vm436, %v383, 0
      %v477 = vsel %vm436, %v384, 0
      %v480 = vsel %vm436, %v385, 0
      %v483 = vsel %vm436, %v386, 0
      %v486 = vsel %vm436, %v387, 0
      %v489 = vsel %vm436, %v388, 0
      %v492 = vsel %vm436, %v389, 0
      %v495 = vsel %vm436, %v390, 0
      %v498 = vsel %vm436, %v391, 0
      %v501 = vsel %vm436, %v392, 0
      %v504 = vsel %vm436, %v393, 0
      %v507 = vsel %vm436, %v394, 0
      %v510 = vsel %vm436, %v395, 0
      %v513 = vsel %vm436, %v396, 0
      %v516 = vsel %vm436, %v397, 0
      %v519 = vsel %vm436, %v398, 0
      %v522 = vsel %vm436, %v399, 0
      %v525 = vsel %vm436, %v400, 0
      %v528 = vsel %vm436, %v401, 0
      %v531 = vsel %vm436, %v402, 0
      %v534 = vsel %vm436, %v403, 0
      %v537 = vsel %vm436, %v404, 0
      %v540 = vsel %vm436, %v405, 0
      %v543 = vsel %vm436, %v406, 0
      %v546 = vsel %vm436, %v407, 0
      %v549 = vsel %vm436, %v408, 0
      %v552 = vsel %vm436, %v409, 0
      %v555 = vsel %vm436, %v410, 0
      %v558 = vsel %vm436, %v411, 0
      %v561 = vsel %vm436, %v412, 0
      %v564 = vsel %vm436, %v413, 0
      %v567 = vsel %vm436, %v414, 0
      %v570 = vsel %vm436, %v415, 0
      %v573 = vsel %vm436, %v416, 0
      %v576 = vsel %vm436, %v417, 0
      %v579 = vsel %vm436, %v418, 0
      %v582 = vsel %vm436, %v419, 0
      %v585 = vsel %vm436, %v420, 0
      %v588 = vsel %vm436, %v421, 0
      %v591 = vsel %vm436, %v422, 0
      %v594 = vsel %vm436, %v423, 0
      %v597 = vsel %vm436, %v424, 0
      %v600 = vsel %vm436, %v425, 0
      %v603 = vsel %vm436, %v426, 0
      %v606 = vsel %vm436, %v427, 0
      %v609 = vsel %vm436, %v428, 0
      %v612 = vsel %vm436, %v429, 0
      %v615 = vsel %vm436, %v430, 0
      %v618 = vsel %vm436, %v431, 0
      %v621 = vsel %vm436, %v432, 0
      %v624 = vsel %vm436, %v433, 0
      %v627 = vsel %vm436, %v434, 0
      %vm629 = vcmask 1042432
      %v631 = vsel %vm629, %v435, 0
      %633 = vmatprep.subr.mxu0 0.0
      %634 = vmatpush1.msra.mxu0 %v631
      %635 = vmatprep.subr.mxu0 0.0
      %636 = vmatpush1.msra.mxu0 0.0
      %637 = vmatprep.subr.mxu0 0.0
      %638 = vmatpush1.msra.mxu0 0.0
      %639 = vmatprep.subr.mxu0 0.0
      %640 = vmatpush1.msra.mxu0 0.0
      %641 = vmatprep.subr.mxu0 0.0
      %642 = vmatpush1.msra.mxu0 0.0
      %643 = vmatprep.subr.mxu0 0.0
      %644 = vmatpush1.msra.mxu0 0.0
      %645 = vmatprep.subr.mxu0 0.0
      %646 = vmatpush1.msra.mxu0 0.0
      %647 = vmatprep.subr.mxu0 0.0
      %648 = vmatpush1.msra.mxu0 0.0
      %649 = vmatprep.subr.mxu0 0.0
      %650 = vmatpush1.msra.mxu0 0.0
      %651 = vmatprep.subr.mxu0 0.0
      %652 = vmatpush1.msra.mxu0 0.0
      %653 = vmatprep.subr.mxu0 0.0
      %654 = vmatpush1.msra.mxu0 0.0
      %655 = vmatprep.subr.mxu0 0.0
      %656 = vmatpush1.msra.mxu0 0.0
      %657 = vmatprep.subr.mxu0 0.0
      %658 = vmatpush1.msra.mxu0 0.0
      %659 = vmatprep.subr.mxu0 0.0
      %660 = vmatpush1.msra.mxu0 0.0
      %661 = vmatprep.subr.mxu0 0.0
      %662 = vmatpush1.msra.mxu0 0.0
      %663 = vmatprep.subr.mxu0 0.0
      %664 = vmatpush1.msra.mxu0 0.0
      %665 = vmatprep.subr.mxu0 0.0
      %666 = vmatpush1.msra.mxu0 0.0
      %667 = vmatprep.subr.mxu0 0.0
      %668 = vmatpush1.msra.mxu0 0.0
      %669 = vmatprep.subr.mxu0 0.0
      %670 = vmatpush1.msra.mxu0 0.0
      %671 = vmatprep.subr.mxu0 0.0
      %672 = vmatpush1.msra.mxu0 0.0
      %673 = vmatprep.subr.mxu0 0.0
      %674 = vmatpush1.msra.mxu0 0.0
      %675 = vmatprep.subr.mxu0 0.0
      %676 = vmatpush1.msra.mxu0 0.0
      %677 = vmatprep.subr.mxu0 0.0
      %678 = vmatpush1.msra.mxu0 0.0
      %679 = vmatprep.subr.mxu0 0.0
      %680 = vmatpush1.msra.mxu0 0.0
      %681 = vmatprep.subr.mxu0 0.0
      %682 = vmatpush1.msra.mxu0 0.0
      %683 = vmatprep.subr.mxu0 0.0
      %684 = vmatpush1.msra.mxu0 0.0
      %685 = vmatprep.subr.mxu0 0.0
      %686 = vmatpush1.msra.mxu0 0.0
      %687 = vmatprep.subr.mxu0 0.0
      %688 = vmatpush1.msra.mxu0 0.0
      %689 = vmatprep.subr.mxu0 0.0
      %690 = vmatpush1.msra.mxu0 0.0
      %691 = vmatprep.subr.mxu0 0.0
      %692 = vmatpush1.msra.mxu0 0.0
      %693 = vmatprep.subr.mxu0 0.0
      %694 = vmatpush1.msra.mxu0 0.0
      %695 = vmatprep.subr.mxu0 0.0
      %696 = vmatpush1.msra.mxu0 0.0
      %697 = vmatprep.mubr.f32.mxu0 0.0
      %698 = vmatmul.mubr.f32.gmra.mrb[0].mxu0 %v438
      %v699 = vpop.f32.mrb[0].mxu0
      %v700 = vadd.f32 0.0, %v699
      %v701 = vpop.f32.mrb[0].mxu0
      %702 = vmatprep.mubr.f32.mxu0 0.0
      %703 = vmatmul.mubr.f32.gmra.mrb[0].mxu0 %v441
      %v704 = vpop.f32.mrb[0].mxu0
      %v705 = vadd.f32 0.0, %v704
      %v706 = vpop.f32.mrb[0].mxu0
      %707 = vmatprep.mubr.f32.mxu0 0.0
      %708 = vmatmul.mubr.f32.gmra.mrb[0].mxu0 %v444
      %v709 = vpop.f32.mrb[0].mxu0
      %v710 = vadd.f32 0.0, %v709
      %v711 = vpop.f32.mrb[0].mxu0
      %712 = vmatprep.mubr.f32.mxu0 0.0
      %713 = vmatmul.mubr.f32.gmra.mrb[0].mxu0 %v447
      %v714 = vpop.f32.mrb[0].mxu0
      %v715 = vadd.f32 0.0, %v714
      %v716 = vpop.f32.mrb[0].mxu0
      %717 = vmatprep.mubr.f32.mxu0 0.0
      %718 = vmatmul.mubr.f32.gmra.mrb[0].mxu0 %v450
      %v719 = vpop.f32.mrb[0].mxu0
      %v720 = vadd.f32 0.0, %v719
      %v721 = vpop.f32.mrb[0].mxu0
      %722 = vmatprep.mubr.f32.mxu0 0.0
      %723 = vmatmul.mubr.f32.gmra.mrb[0].mxu0 %v453
      %v724 = vpop.f32.mrb[0].mxu0
      %v725 = vadd.f32 0.0, %v724
      %v726 = vpop.f32.mrb[0].mxu0
      %727 = vmatprep.mubr.f32.mxu0 0.0
      %728 = vmatmul.mubr.f32.gmra.mrb[0].mxu0 %v456
      %v729 = vpop.f32.mrb[0].mxu0
      %v730 = vadd.f32 0.0, %v729
      %v731 = vpop.f32.mrb[0].mxu0
      %732 = vmatprep.mubr.f32.mxu0 0.0
      %733 = vmatmul.mubr.f32.gmra.mrb[0].mxu0 %v459
      %v734 = vpop.f32.mrb[0].mxu0
      %v735 = vadd.f32 0.0, %v734
      %v736 = vpop.f32.mrb[0].mxu0
      %737 = vmatprep.mubr.f32.mxu0 0.0
      %738 = vmatmul.mubr.f32.gmra.mrb[0].mxu0 %v462
      %v739 = vpop.f32.mrb[0].mxu0
      %v740 = vadd.f32 0.0, %v739
      %v741 = vpop.f32.mrb[0].mxu0
      %742 = vmatprep.mubr.f32.mxu0 0.0
      %743 = vmatmul.mubr.f32.gmra.mrb[0].mxu0 %v465
      %v744 = vpop.f32.mrb[0].mxu0
      %v745 = vadd.f32 0.0, %v744
      %v746 = vpop.f32.mrb[0].mxu0
      %747 = vmatprep.mubr.f32.mxu0 0.0
      %748 = vmatmul.mubr.f32.gmra.mrb[0].mxu0 %v468
      %v749 = vpop.f32.mrb[0].mxu0
      %v750 = vadd.f32 0.0, %v749
      %v751 = vpop.f32.mrb[0].mxu0
      %752 = vmatprep.mubr.f32.mxu0 0.0
      %753 = vmatmul.mubr.f32.gmra.mrb[0].mxu0 %v471
      %v754 = vpop.f32.mrb[0].mxu0
      %v755 = vadd.f32 0.0, %v754
      %v756 = vpop.f32.mrb[0].mxu0
      %757 = vmatprep.mubr.f32.mxu0 0.0
      %758 = vmatmul.mubr.f32.gmra.mrb[0].mxu0 %v474
      %v759 = vpop.f32.mrb[0].mxu0
      %v760 = vadd.f32 0.0, %v759
      %v761 = vpop.f32.mrb[0].mxu0
      %762 = vmatprep.mubr.f32.mxu0 0.0
      %763 = vmatmul.mubr.f32.gmra.mrb[0].mxu0 %v477
      %v764 = vpop.f32.mrb[0].mxu0
      %v765 = vadd.f32 0.0, %v764
      %v766 = vpop.f32.mrb[0].mxu0
      %767 = vmatprep.mubr.f32.mxu0 0.0
      %768 = vmatmul.mubr.f32.gmra.mrb[0].mxu0 %v480
      %v769 = vpop.f32.mrb[0].mxu0
      %v770 = vadd.f32 0.0, %v769
      %v771 = vpop.f32.mrb[0].mxu0
      %772 = vmatprep.mubr.f32.mxu0 0.0
      %773 = vmatmul.mubr.f32.gmra.mrb[0].mxu0 %v483
      %v774 = vpop.f32.mrb[0].mxu0
      %v775 = vadd.f32 0.0, %v774
      %v776 = vpop.f32.mrb[0].mxu0
      %777 = vmatprep.mubr.f32.mxu0 0.0
      %778 = vmatmul.mubr.f32.gmra.mrb[0].mxu0 %v486
      %v779 = vpop.f32.mrb[0].mxu0
      %v780 = vadd.f32 0.0, %v779
      %v781 = vpop.f32.mrb[0].mxu0
      %782 = vmatprep.mubr.f32.mxu0 0.0
      %783 = vmatmul.mubr.f32.gmra.mrb[0].mxu0 %v489
      %v784 = vpop.f32.mrb[0].mxu0
      %v785 = vadd.f32 0.0, %v784
      %v786 = vpop.f32.mrb[0].mxu0
      %787 = vmatprep.mubr.f32.mxu0 0.0
      %788 = vmatmul.mubr.f32.gmra.mrb[0].mxu0 %v492
      %v789 = vpop.f32.mrb[0].mxu0
      %v790 = vadd.f32 0.0, %v789
      %v791 = vpop.f32.mrb[0].mxu0
      %792 = vmatprep.mubr.f32.mxu0 0.0
      %793 = vmatmul.mubr.f32.gmra.mrb[0].mxu0 %v495
      %v794 = vpop.f32.mrb[0].mxu0
      %v795 = vadd.f32 0.0, %v794
      %v796 = vpop.f32.mrb[0].mxu0
      %797 = vmatprep.mubr.f32.mxu0 0.0
      %798 = vmatmul.mubr.f32.gmra.mrb[0].mxu0 %v498
      %v799 = vpop.f32.mrb[0].mxu0
      %v800 = vadd.f32 0.0, %v799
      %v801 = vpop.f32.mrb[0].mxu0
      %802 = vmatprep.mubr.f32.mxu0 0.0
      %803 = vmatmul.mubr.f32.gmra.mrb[0].mxu0 %v501
      %v804 = vpop.f32.mrb[0].mxu0
      %v805 = vadd.f32 0.0, %v804
      %v806 = vpop.f32.mrb[0].mxu0
      %807 = vmatprep.mubr.f32.mxu0 0.0
      %808 = vmatmul.mubr.f32.gmra.mrb[0].mxu0 %v504
      %v809 = vpop.f32.mrb[0].mxu0
      %v810 = vadd.f32 0.0, %v809
      %v811 = vpop.f32.mrb[0].mxu0
      %812 = vmatprep.mubr.f32.mxu0 0.0
      %813 = vmatmul.mubr.f32.gmra.mrb[0].mxu0 %v507
      %v814 = vpop.f32.mrb[0].mxu0
      %v815 = vadd.f32 0.0, %v814
      %v816 = vpop.f32.mrb[0].mxu0
      %817 = vmatprep.mubr.f32.mxu0 0.0
      %818 = vmatmul.mubr.f32.gmra.mrb[0].mxu0 %v510
      %v819 = vpop.f32.mrb[0].mxu0
      %v820 = vadd.f32 0.0, %v819
      %v821 = vpop.f32.mrb[0].mxu0
      %822 = vmatprep.mubr.f32.mxu0 0.0
      %823 = vmatmul.mubr.f32.gmra.mrb[0].mxu0 %v513
      %v824 = vpop.f32.mrb[0].mxu0
      %v825 = vadd.f32 0.0, %v824
      %v826 = vpop.f32.mrb[0].mxu0
      %827 = vmatprep.mubr.f32.mxu0 0.0
      %828 = vmatmul.mubr.f32.gmra.mrb[0].mxu0 %v516
      %v829 = vpop.f32.mrb[0].mxu0
      %v830 = vadd.f32 0.0, %v829
      %v831 = vpop.f32.mrb[0].mxu0
      %832 = vmatprep.mubr.f32.mxu0 0.0
      %833 = vmatmul.mubr.f32.gmra.mrb[0].mxu0 %v519
      %v834 = vpop.f32.mrb[0].mxu0
      %v835 = vadd.f32 0.0, %v834
      %v836 = vpop.f32.mrb[0].mxu0
      %837 = vmatprep.mubr.f32.mxu0 0.0
      %838 = vmatmul.mubr.f32.gmra.mrb[0].mxu0 %v522
      %v839 = vpop.f32.mrb[0].mxu0
      %v840 = vadd.f32 0.0, %v839
      %v841 = vpop.f32.mrb[0].mxu0
      %842 = vmatprep.mubr.f32.mxu0 0.0
      %843 = vmatmul.mubr.f32.gmra.mrb[0].mxu0 %v525
      %v844 = vpop.f32.mrb[0].mxu0
      %v845 = vadd.f32 0.0, %v844
      %v846 = vpop.f32.mrb[0].mxu0
      %847 = vmatprep.mubr.f32.mxu0 0.0
      %848 = vmatmul.mubr.f32.gmra.mrb[0].mxu0 %v528
      %v849 = vpop.f32.mrb[0].mxu0
      %v850 = vadd.f32 0.0, %v849
      %v851 = vpop.f32.mrb[0].mxu0
      %852 = vmatprep.mubr.f32.mxu0 0.0
      %853 = vmatmul.mubr.f32.gmra.mrb[0].mxu0 %v531
      %v854 = vpop.f32.mrb[0].mxu0
      %v855 = vadd.f32 0.0, %v854
      %v856 = vpop.f32.mrb[0].mxu0
      %857 = vmatprep.mubr.f32.mxu0 0.0
      %858 = vmatmul.mubr.f32.gmra.mrb[0].mxu0 %v534
      %v859 = vpop.f32.mrb[0].mxu0
      %v860 = vadd.f32 0.0, %v859
      %v861 = vpop.f32.mrb[0].mxu0
      %862 = vmatprep.mubr.f32.mxu0 0.0
      %863 = vmatmul.mubr.f32.gmra.mrb[0].mxu0 %v537
      %v864 = vpop.f32.mrb[0].mxu0
      %v865 = vadd.f32 0.0, %v864
      %v866 = vpop.f32.mrb[0].mxu0
      %867 = vmatprep.mubr.f32.mxu0 0.0
      %868 = vmatmul.mubr.f32.gmra.mrb[0].mxu0 %v540
      %v869 = vpop.f32.mrb[0].mxu0
      %v870 = vadd.f32 0.0, %v869
      %v871 = vpop.f32.mrb[0].mxu0
      %872 = vmatprep.mubr.f32.mxu0 0.0
      %873 = vmatmul.mubr.f32.gmra.mrb[0].mxu0 %v543
      %v874 = vpop.f32.mrb[0].mxu0
      %v875 = vadd.f32 0.0, %v874
      %v876 = vpop.f32.mrb[0].mxu0
      %877 = vmatprep.mubr.f32.mxu0 0.0
      %878 = vmatmul.mubr.f32.gmra.mrb[0].mxu0 %v546
      %v879 = vpop.f32.mrb[0].mxu0
      %v880 = vadd.f32 0.0, %v879
      %v881 = vpop.f32.mrb[0].mxu0
      %882 = vmatprep.mubr.f32.mxu0 0.0
      %883 = vmatmul.mubr.f32.gmra.mrb[0].mxu0 %v549
      %v884 = vpop.f32.mrb[0].mxu0
      %v885 = vadd.f32 0.0, %v884
      %v886 = vpop.f32.mrb[0].mxu0
      %887 = vmatprep.mubr.f32.mxu0 0.0
      %888 = vmatmul.mubr.f32.gmra.mrb[0].mxu0 %v552
      %v889 = vpop.f32.mrb[0].mxu0
      %v890 = vadd.f32 0.0, %v889
      %v891 = vpop.f32.mrb[0].mxu0
      %892 = vmatprep.mubr.f32.mxu0 0.0
      %893 = vmatmul.mubr.f32.gmra.mrb[0].mxu0 %v555
      %v894 = vpop.f32.mrb[0].mxu0
      %v895 = vadd.f32 0.0, %v894
      %v896 = vpop.f32.mrb[0].mxu0
      %897 = vmatprep.mubr.f32.mxu0 0.0
      %898 = vmatmul.mubr.f32.gmra.mrb[0].mxu0 %v558
      %v899 = vpop.f32.mrb[0].mxu0
      %v900 = vadd.f32 0.0, %v899
      %v901 = vpop.f32.mrb[0].mxu0
      %902 = vmatprep.mubr.f32.mxu0 0.0
      %903 = vmatmul.mubr.f32.gmra.mrb[0].mxu0 %v561
      %v904 = vpop.f32.mrb[0].mxu0
      %v905 = vadd.f32 0.0, %v904
      %v906 = vpop.f32.mrb[0].mxu0
      %907 = vmatprep.mubr.f32.mxu0 0.0
      %908 = vmatmul.mubr.f32.gmra.mrb[0].mxu0 %v564
      %v909 = vpop.f32.mrb[0].mxu0
      %v910 = vadd.f32 0.0, %v909
      %v911 = vpop.f32.mrb[0].mxu0
      %912 = vmatprep.mubr.f32.mxu0 0.0
      %913 = vmatmul.mubr.f32.gmra.mrb[0].mxu0 %v567
      %v914 = vpop.f32.mrb[0].mxu0
      %v915 = vadd.f32 0.0, %v914
      %v916 = vpop.f32.mrb[0].mxu0
      %917 = vmatprep.mubr.f32.mxu0 0.0
      %918 = vmatmul.mubr.f32.gmra.mrb[0].mxu0 %v570
      %v919 = vpop.f32.mrb[0].mxu0
      %v920 = vadd.f32 0.0, %v919
      %v921 = vpop.f32.mrb[0].mxu0
      %922 = vmatprep.mubr.f32.mxu0 0.0
      %923 = vmatmul.mubr.f32.gmra.mrb[0].mxu0 %v573
      %v924 = vpop.f32.mrb[0].mxu0
      %v925 = vadd.f32 0.0, %v924
      %v926 = vpop.f32.mrb[0].mxu0
      %927 = vmatprep.mubr.f32.mxu0 0.0
      %928 = vmatmul.mubr.f32.gmra.mrb[0].mxu0 %v576
      %v929 = vpop.f32.mrb[0].mxu0
      %v930 = vadd.f32 0.0, %v929
      %v931 = vpop.f32.mrb[0].mxu0
      %932 = vmatprep.mubr.f32.mxu0 0.0
      %933 = vmatmul.mubr.f32.gmra.mrb[0].mxu0 %v579
      %v934 = vpop.f32.mrb[0].mxu0
      %v935 = vadd.f32 0.0, %v934
      %v936 = vpop.f32.mrb[0].mxu0
      %937 = vmatprep.mubr.f32.mxu0 0.0
      %938 = vmatmul.mubr.f32.gmra.mrb[0].mxu0 %v582
      %v939 = vpop.f32.mrb[0].mxu0
      %v940 = vadd.f32 0.0, %v939
      %v941 = vpop.f32.mrb[0].mxu0
      %942 = vmatprep.mubr.f32.mxu0 0.0
      %943 = vmatmul.mubr.f32.gmra.mrb[0].mxu0 %v585
      %v944 = vpop.f32.mrb[0].mxu0
      %v945 = vadd.f32 0.0, %v944
      %v946 = vpop.f32.mrb[0].mxu0
      %947 = vmatprep.mubr.f32.mxu0 0.0
      %948 = vmatmul.mubr.f32.gmra.mrb[0].mxu0 %v588
      %v949 = vpop.f32.mrb[0].mxu0
      %v950 = vadd.f32 0.0, %v949
      %v951 = vpop.f32.mrb[0].mxu0
      %952 = vmatprep.mubr.f32.mxu0 0.0
      %953 = vmatmul.mubr.f32.gmra.mrb[0].mxu0 %v591
      %v954 = vpop.f32.mrb[0].mxu0
      %v955 = vadd.f32 0.0, %v954
      %v956 = vpop.f32.mrb[0].mxu0
      %957 = vmatprep.mubr.f32.mxu0 0.0
      %958 = vmatmul.mubr.f32.gmra.mrb[0].mxu0 %v594
      %v959 = vpop.f32.mrb[0].mxu0
      %v960 = vadd.f32 0.0, %v959
      %v961 = vpop.f32.mrb[0].mxu0
      %962 = vmatprep.mubr.f32.mxu0 0.0
      %963 = vmatmul.mubr.f32.gmra.mrb[0].mxu0 %v597
      %v964 = vpop.f32.mrb[0].mxu0
      %v965 = vadd.f32 0.0, %v964
      %v966 = vpop.f32.mrb[0].mxu0
      %967 = vmatprep.mubr.f32.mxu0 0.0
      %968 = vmatmul.mubr.f32.gmra.mrb[0].mxu0 %v600
      %v969 = vpop.f32.mrb[0].mxu0
      %v970 = vadd.f32 0.0, %v969
      %v971 = vpop.f32.mrb[0].mxu0
      %972 = vmatprep.mubr.f32.mxu0 0.0
      %973 = vmatmul.mubr.f32.gmra.mrb[0].mxu0 %v603
      %v974 = vpop.f32.mrb[0].mxu0
      %v975 = vadd.f32 0.0, %v974
      %v976 = vpop.f32.mrb[0].mxu0
      %977 = vmatprep.mubr.f32.mxu0 0.0
      %978 = vmatmul.mubr.f32.gmra.mrb[0].mxu0 %v606
      %v979 = vpop.f32.mrb[0].mxu0
      %v980 = vadd.f32 0.0, %v979
      %v981 = vpop.f32.mrb[0].mxu0
      %982 = vmatprep.mubr.f32.mxu0 0.0
      %983 = vmatmul.mubr.f32.gmra.mrb[0].mxu0 %v609
      %v984 = vpop.f32.mrb[0].mxu0
      %v985 = vadd.f32 0.0, %v984
      %v986 = vpop.f32.mrb[0].mxu0
      %987 = vmatprep.mubr.f32.mxu0 0.0
      %988 = vmatmul.mubr.f32.gmra.mrb[0].mxu0 %v612
      %v989 = vpop.f32.mrb[0].mxu0
      %v990 = vadd.f32 0.0, %v989
      %v991 = vpop.f32.mrb[0].mxu0
      %992 = vmatprep.mubr.f32.mxu0 0.0
      %993 = vmatmul.mubr.f32.gmra.mrb[0].mxu0 %v615
      %v994 = vpop.f32.mrb[0].mxu0
      %v995 = vadd.f32 0.0, %v994
      %v996 = vpop.f32.mrb[0].mxu0
      %997 = vmatprep.mubr.f32.mxu0 0.0
      %998 = vmatmul.mubr.f32.gmra.mrb[0].mxu0 %v618
      %v999 = vpop.f32.mrb[0].mxu0
      %v1000 = vadd.f32 0.0, %v999
      %v1001 = vpop.f32.mrb[0].mxu0
      %1002 = vmatprep.mubr.f32.mxu0 0.0
      %1003 = vmatmul.mubr.f32.gmra.mrb[0].mxu0 %v621
      %v1004 = vpop.f32.mrb[0].mxu0
      %v1005 = vadd.f32 0.0, %v1004
      %v1006 = vpop.f32.mrb[0].mxu0
      %1007 = vmatprep.mubr.f32.mxu0 0.0
      %1008 = vmatmul.mubr.f32.gmra.mrb[0].mxu0 %v624
      %v1009 = vpop.f32.mrb[0].mxu0
      %v1010 = vadd.f32 0.0, %v1009
      %v1011 = vpop.f32.mrb[0].mxu0
      %1012 = vmatprep.mubr.f32.mxu0 0.0
      %1013 = vmatmul.mubr.f32.gmra.mrb[0].mxu0 %v627
      %v1014 = vpop.f32.mrb[0].mxu0
      %v1015 = vadd.f32 0.0, %v1014
      %v1016 = vpop.f32.mrb[0].mxu0
      %1017 = vdwg.mxu0
      %vm1018 = vcmask 89088
      %v1020 = vsel %vm1018, %v305, 0
      %v1023 = vsel %vm1018, %v306, 0
      %v1026 = vsel %vm1018, %v307, 0
      %v1029 = vsel %vm1018, %v308, 0
      %v1032 = vsel %vm1018, %v309, 0
      %v1035 = vsel %vm1018, %v310, 0
      %v1038 = vsel %vm1018, %v311, 0
      %v1041 = vsel %vm1018, %v312, 0
      %v1044 = vsel %vm1018, %v313, 0
      %v1047 = vsel %vm1018, %v314, 0
      %v1050 = vsel %vm1018, %v315, 0
      %v1053 = vsel %vm1018, %v316, 0
      %v1056 = vsel %vm1018, %v317, 0
      %v1059 = vsel %vm1018, %v318, 0
      %v1062 = vsel %vm1018, %v319, 0
      %v1065 = vsel %vm1018, %v320, 0
      %v1068 = vsel %vm1018, %v321, 0
      %v1071 = vsel %vm1018, %v322, 0
      %v1074 = vsel %vm1018, %v323, 0
      %v1077 = vsel %vm1018, %v324, 0
      %v1080 = vsel %vm1018, %v325, 0
      %v1083 = vsel %vm1018, %v326, 0
      %v1086 = vsel %vm1018, %v327, 0
      %v1089 = vsel %vm1018, %v328, 0
      %v1092 = vsel %vm1018, %v329, 0
      %v1095 = vsel %vm1018, %v330, 0
      %v1098 = vsel %vm1018, %v331, 0
      %v1101 = vsel %vm1018, %v332, 0
      %v1104 = vsel %vm1018, %v333, 0
      %v1107 = vsel %vm1018, %v334, 0
      %v1110 = vsel %vm1018, %v335, 0
      %v1113 = vsel %vm1018, %v336, 0
      %v1116 = vsel %vm1018, %v337, 0
      %v1119 = vsel %vm1018, %v338, 0
      %v1122 = vsel %vm1018, %v339, 0
      %v1125 = vsel %vm1018, %v340, 0
      %v1128 = vsel %vm1018, %v341, 0
      %v1131 = vsel %vm1018, %v342, 0
      %v1134 = vsel %vm1018, %v343, 0
      %v1137 = vsel %vm1018, %v344, 0
      %v1140 = vsel %vm1018, %v345, 0
      %v1143 = vsel %vm1018, %v346, 0
      %v1146 = vsel %vm1018, %v347, 0
      %v1149 = vsel %vm1018, %v348, 0
      %v1152 = vsel %vm1018, %v349, 0
      %v1155 = vsel %vm1018, %v350, 0
      %v1158 = vsel %vm1018, %v351, 0
      %v1161 = vsel %vm1018, %v352, 0
      %v1164 = vsel %vm1018, %v353, 0
      %v1167 = vsel %vm1018, %v354, 0
      %v1170 = vsel %vm1018, %v355, 0
      %v1173 = vsel %vm1018, %v356, 0
      %v1176 = vsel %vm1018, %v357, 0
      %v1179 = vsel %vm1018, %v358, 0
      %v1182 = vsel %vm1018, %v359, 0
      %v1185 = vsel %vm1018, %v360, 0
      %v1188 = vsel %vm1018, %v361, 0
      %v1191 = vsel %vm1018, %v362, 0
      %v1194 = vsel %vm1018, %v363, 0
      %v1197 = vsel %vm1018, %v364, 0
      %v1200 = vsel %vm1018, %v365, 0
      %v1203 = vsel %vm1018, %v366, 0
      %v1206 = vsel %vm1018, %v367, 0
      %v1209 = vsel %vm1018, %v368, 0
      %v1212 = vsel %vm629, %v370, 0
      %1214 = vmatprep.subr.mxu0 0.0
      %1215 = vmatpush1.msra.mxu0 %v369
      %1216 = vmatprep.subr.mxu0 0.0
      %1217 = vmatpush1.msra.mxu0 %v1212
      %1218 = vmatprep.subr.mxu0 0.0
      %1219 = vmatpush1.msra.mxu0 0.0
      %1220 = vmatprep.subr.mxu0 0.0
      %1221 = vmatpush1.msra.mxu0 0.0
      %1222 = vmatprep.subr.mxu0 0.0
      %1223 = vmatpush1.msra.mxu0 0.0
      %1224 = vmatprep.subr.mxu0 0.0
      %1225 = vmatpush1.msra.mxu0 0.0
      %1226 = vmatprep.subr.mxu0 0.0
      %1227 = vmatpush1.msra.mxu0 0.0
      %1228 = vmatprep.subr.mxu0 0.0
      %1229 = vmatpush1.msra.mxu0 0.0
      %1230 = vmatprep.subr.mxu0 0.0
      %1231 = vmatpush1.msra.mxu0 0.0
      %1232 = vmatprep.subr.mxu0 0.0
      %1233 = vmatpush1.msra.mxu0 0.0
      %1234 = vmatprep.subr.mxu0 0.0
      %1235 = vmatpush1.msra.mxu0 0.0
      %1236 = vmatprep.subr.mxu0 0.0
      %1237 = vmatpush1.msra.mxu0 0.0
      %1238 = vmatprep.subr.mxu0 0.0
      %1239 = vmatpush1.msra.mxu0 0.0
      %1240 = vmatprep.subr.mxu0 0.0
      %1241 = vmatpush1.msra.mxu0 0.0
      %1242 = vmatprep.subr.mxu0 0.0
      %1243 = vmatpush1.msra.mxu0 0.0
      %1244 = vmatprep.subr.mxu0 0.0
      %1245 = vmatpush1.msra.mxu0 0.0
      %1246 = vmatprep.subr.mxu0 0.0
      %1247 = vmatpush1.msra.mxu0 0.0
      %1248 = vmatprep.subr.mxu0 0.0
      %1249 = vmatpush1.msra.mxu0 0.0
      %1250 = vmatprep.subr.mxu0 0.0
      %1251 = vmatpush1.msra.mxu0 0.0
      %1252 = vmatprep.subr.mxu0 0.0
      %1253 = vmatpush1.msra.mxu0 0.0
      %1254 = vmatprep.subr.mxu0 0.0
      %1255 = vmatpush1.msra.mxu0 0.0
      %1256 = vmatprep.subr.mxu0 0.0
      %1257 = vmatpush1.msra.mxu0 0.0
      %1258 = vmatprep.subr.mxu0 0.0
      %1259 = vmatpush1.msra.mxu0 0.0
      %1260 = vmatprep.subr.mxu0 0.0
      %1261 = vmatpush1.msra.mxu0 0.0
      %1262 = vmatprep.subr.mxu0 0.0
      %1263 = vmatpush1.msra.mxu0 0.0
      %1264 = vmatprep.subr.mxu0 0.0
      %1265 = vmatpush1.msra.mxu0 0.0
      %1266 = vmatprep.subr.mxu0 0.0
      %1267 = vmatpush1.msra.mxu0 0.0
      %1268 = vmatprep.subr.mxu0 0.0
      %1269 = vmatpush1.msra.mxu0 0.0
      %1270 = vmatprep.subr.mxu0 0.0
      %1271 = vmatpush1.msra.mxu0 0.0
      %1272 = vmatprep.subr.mxu0 0.0
      %1273 = vmatpush1.msra.mxu0 0.0
      %1274 = vmatprep.subr.mxu0 0.0
      %1275 = vmatpush1.msra.mxu0 0.0
      %1276 = vmatprep.subr.mxu0 0.0
      %1277 = vmatpush1.msra.mxu0 0.0
      %1278 = vmatprep.mubr.f32.mxu0 0.0
      %1279 = vmatmul.mubr.f32.gmra.mrb[0].mxu0 %v1020
      %v1280 = vpop.f32.mrb[0].mxu0
      %v1281 = vadd.f32 %v700, %v1280
      %v1282 = vpop.f32.mrb[0].mxu0
      %1283 = vmatprep.mubr.f32.mxu0 0.0
      %1284 = vmatmul.mubr.f32.gmra.mrb[0].mxu0 %v1023
      %v1285 = vpop.f32.mrb[0].mxu0
      %v1286 = vadd.f32 %v705, %v1285
      %v1287 = vpop.f32.mrb[0].mxu0
      %1288 = vmatprep.mubr.f32.mxu0 0.0
      %1289 = vmatmul.mubr.f32.gmra.mrb[0].mxu0 %v1026
      %v1290 = vpop.f32.mrb[0].mxu0
      %v1291 = vadd.f32 %v710, %v1290
      %v1292 = vpop.f32.mrb[0].mxu0
      %1293 = vmatprep.mubr.f32.mxu0 0.0
      %1294 = vmatmul.mubr.f32.gmra.mrb[0].mxu0 %v1029
      %v1295 = vpop.f32.mrb[0].mxu0
      %v1296 = vadd.f32 %v715, %v1295
      %v1297 = vpop.f32.mrb[0].mxu0
      %1298 = vmatprep.mubr.f32.mxu0 0.0
      %1299 = vmatmul.mubr.f32.gmra.mrb[0].mxu0 %v1032
      %v1300 = vpop.f32.mrb[0].mxu0
      %v1301 = vadd.f32 %v720, %v1300
      %v1302 = vpop.f32.mrb[0].mxu0
      %1303 = vmatprep.mubr.f32.mxu0 0.0
      %1304 = vmatmul.mubr.f32.gmra.mrb[0].mxu0 %v1035
      %v1305 = vpop.f32.mrb[0].mxu0
      %v1306 = vadd.f32 %v725, %v1305
      %v1307 = vpop.f32.mrb[0].mxu0
      %1308 = vmatprep.mubr.f32.mxu0 0.0
      %1309 = vmatmul.mubr.f32.gmra.mrb[0].mxu0 %v1038
      %v1310 = vpop.f32.mrb[0].mxu0
      %v1311 = vadd.f32 %v730, %v1310
      %v1312 = vpop.f32.mrb[0].mxu0
      %1313 = vmatprep.mubr.f32.mxu0 0.0
      %1314 = vmatmul.mubr.f32.gmra.mrb[0].mxu0 %v1041
      %v1315 = vpop.f32.mrb[0].mxu0
      %v1316 = vadd.f32 %v735, %v1315
      %v1317 = vpop.f32.mrb[0].mxu0
      %1318 = vmatprep.mubr.f32.mxu0 0.0
      %1319 = vmatmul.mubr.f32.gmra.mrb[0].mxu0 %v1044
      %v1320 = vpop.f32.mrb[0].mxu0
      %v1321 = vadd.f32 %v740, %v1320
      %v1322 = vpop.f32.mrb[0].mxu0
      %1323 = vmatprep.mubr.f32.mxu0 0.0
      %1324 = vmatmul.mubr.f32.gmra.mrb[0].mxu0 %v1047
      %v1325 = vpop.f32.mrb[0].mxu0
      %v1326 = vadd.f32 %v745, %v1325
      %v1327 = vpop.f32.mrb[0].mxu0
      %1328 = vmatprep.mubr.f32.mxu0 0.0
      %1329 = vmatmul.mubr.f32.gmra.mrb[0].mxu0 %v1050
      %v1330 = vpop.f32.mrb[0].mxu0
      %v1331 = vadd.f32 %v750, %v1330
      %v1332 = vpop.f32.mrb[0].mxu0
      %1333 = vmatprep.mubr.f32.mxu0 0.0
      %1334 = vmatmul.mubr.f32.gmra.mrb[0].mxu0 %v1053
      %v1335 = vpop.f32.mrb[0].mxu0
      %v1336 = vadd.f32 %v755, %v1335
      %v1337 = vpop.f32.mrb[0].mxu0
      %1338 = vmatprep.mubr.f32.mxu0 0.0
      %1339 = vmatmul.mubr.f32.gmra.mrb[0].mxu0 %v1056
      %v1340 = vpop.f32.mrb[0].mxu0
      %v1341 = vadd.f32 %v760, %v1340
      %v1342 = vpop.f32.mrb[0].mxu0
      %1343 = vmatprep.mubr.f32.mxu0 0.0
      %1344 = vmatmul.mubr.f32.gmra.mrb[0].mxu0 %v1059
      %v1345 = vpop.f32.mrb[0].mxu0
      %v1346 = vadd.f32 %v765, %v1345
      %v1347 = vpop.f32.mrb[0].mxu0
      %1348 = vmatprep.mubr.f32.mxu0 0.0
      %1349 = vmatmul.mubr.f32.gmra.mrb[0].mxu0 %v1062
      %v1350 = vpop.f32.mrb[0].mxu0
      %v1351 = vadd.f32 %v770, %v1350
      %v1352 = vpop.f32.mrb[0].mxu0
      %1353 = vmatprep.mubr.f32.mxu0 0.0
      %1354 = vmatmul.mubr.f32.gmra.mrb[0].mxu0 %v1065
      %v1355 = vpop.f32.mrb[0].mxu0
      %v1356 = vadd.f32 %v775, %v1355
      %v1357 = vpop.f32.mrb[0].mxu0
      %1358 = vmatprep.mubr.f32.mxu0 0.0
      %1359 = vmatmul.mubr.f32.gmra.mrb[0].mxu0 %v1068
      %v1360 = vpop.f32.mrb[0].mxu0
      %v1361 = vadd.f32 %v780, %v1360
      %v1362 = vpop.f32.mrb[0].mxu0
      %1363 = vmatprep.mubr.f32.mxu0 0.0
      %1364 = vmatmul.mubr.f32.gmra.mrb[0].mxu0 %v1071
      %v1365 = vpop.f32.mrb[0].mxu0
      %v1366 = vadd.f32 %v785, %v1365
      %v1367 = vpop.f32.mrb[0].mxu0
      %1368 = vmatprep.mubr.f32.mxu0 0.0
      %1369 = vmatmul.mubr.f32.gmra.mrb[0].mxu0 %v1074
      %v1370 = vpop.f32.mrb[0].mxu0
      %v1371 = vadd.f32 %v790, %v1370
      %v1372 = vpop.f32.mrb[0].mxu0
      %1373 = vmatprep.mubr.f32.mxu0 0.0
      %1374 = vmatmul.mubr.f32.gmra.mrb[0].mxu0 %v1077
      %v1375 = vpop.f32.mrb[0].mxu0
      %v1376 = vadd.f32 %v795, %v1375
      %v1377 = vpop.f32.mrb[0].mxu0
      %1378 = vmatprep.mubr.f32.mxu0 0.0
      %1379 = vmatmul.mubr.f32.gmra.mrb[0].mxu0 %v1080
      %v1380 = vpop.f32.mrb[0].mxu0
      %v1381 = vadd.f32 %v800, %v1380
      %v1382 = vpop.f32.mrb[0].mxu0
      %1383 = vmatprep.mubr.f32.mxu0 0.0
      %1384 = vmatmul.mubr.f32.gmra.mrb[0].mxu0 %v1083
      %v1385 = vpop.f32.mrb[0].mxu0
      %v1386 = vadd.f32 %v805, %v1385
      %v1387 = vpop.f32.mrb[0].mxu0
      %1388 = vmatprep.mubr.f32.mxu0 0.0
      %1389 = vmatmul.mubr.f32.gmra.mrb[0].mxu0 %v1086
      %v1390 = vpop.f32.mrb[0].mxu0
      %v1391 = vadd.f32 %v810, %v1390
      %v1392 = vpop.f32.mrb[0].mxu0
      %1393 = vmatprep.mubr.f32.mxu0 0.0
      %1394 = vmatmul.mubr.f32.gmra.mrb[0].mxu0 %v1089
      %v1395 = vpop.f32.mrb[0].mxu0
      %v1396 = vadd.f32 %v815, %v1395
      %v1397 = vpop.f32.mrb[0].mxu0
      %1398 = vmatprep.mubr.f32.mxu0 0.0
      %1399 = vmatmul.mubr.f32.gmra.mrb[0].mxu0 %v1092
      %v1400 = vpop.f32.mrb[0].mxu0
      %v1401 = vadd.f32 %v820, %v1400
      %v1402 = vpop.f32.mrb[0].mxu0
      %1403 = vmatprep.mubr.f32.mxu0 0.0
      %1404 = vmatmul.mubr.f32.gmra.mrb[0].mxu0 %v1095
      %v1405 = vpop.f32.mrb[0].mxu0
      %v1406 = vadd.f32 %v825, %v1405
      %v1407 = vpop.f32.mrb[0].mxu0
      %1408 = vmatprep.mubr.f32.mxu0 0.0
      %1409 = vmatmul.mubr.f32.gmra.mrb[0].mxu0 %v1098
      %v1410 = vpop.f32.mrb[0].mxu0
      %v1411 = vadd.f32 %v830, %v1410
      %v1412 = vpop.f32.mrb[0].mxu0
      %1413 = vmatprep.mubr.f32.mxu0 0.0
      %1414 = vmatmul.mubr.f32.gmra.mrb[0].mxu0 %v1101
      %v1415 = vpop.f32.mrb[0].mxu0
      %v1416 = vadd.f32 %v835, %v1415
      %v1417 = vpop.f32.mrb[0].mxu0
      %1418 = vmatprep.mubr.f32.mxu0 0.0
      %1419 = vmatmul.mubr.f32.gmra.mrb[0].mxu0 %v1104
      %v1420 = vpop.f32.mrb[0].mxu0
      %v1421 = vadd.f32 %v840, %v1420
      %v1422 = vpop.f32.mrb[0].mxu0
      %1423 = vmatprep.mubr.f32.mxu0 0.0
      %1424 = vmatmul.mubr.f32.gmra.mrb[0].mxu0 %v1107
      %v1425 = vpop.f32.mrb[0].mxu0
      %v1426 = vadd.f32 %v845, %v1425
      %v1427 = vpop.f32.mrb[0].mxu0
      %1428 = vmatprep.mubr.f32.mxu0 0.0
      %1429 = vmatmul.mubr.f32.gmra.mrb[0].mxu0 %v1110
      %v1430 = vpop.f32.mrb[0].mxu0
      %v1431 = vadd.f32 %v850, %v1430
      %v1432 = vpop.f32.mrb[0].mxu0
      %1433 = vmatprep.mubr.f32.mxu0 0.0
      %1434 = vmatmul.mubr.f32.gmra.mrb[0].mxu0 %v1113
      %v1435 = vpop.f32.mrb[0].mxu0
      %v1436 = vadd.f32 %v855, %v1435
      %v1437 = vpop.f32.mrb[0].mxu0
      %1438 = vmatprep.mubr.f32.mxu0 0.0
      %1439 = vmatmul.mubr.f32.gmra.mrb[0].mxu0 %v1116
      %v1440 = vpop.f32.mrb[0].mxu0
      %v1441 = vadd.f32 %v860, %v1440
      %v1442 = vpop.f32.mrb[0].mxu0
      %1443 = vmatprep.mubr.f32.mxu0 0.0
      %1444 = vmatmul.mubr.f32.gmra.mrb[0].mxu0 %v1119
      %v1445 = vpop.f32.mrb[0].mxu0
      %v1446 = vadd.f32 %v865, %v1445
      %v1447 = vpop.f32.mrb[0].mxu0
      %1448 = vmatprep.mubr.f32.mxu0 0.0
      %1449 = vmatmul.mubr.f32.gmra.mrb[0].mxu0 %v1122
      %v1450 = vpop.f32.mrb[0].mxu0
      %v1451 = vadd.f32 %v870, %v1450
      %v1452 = vpop.f32.mrb[0].mxu0
      %1453 = vmatprep.mubr.f32.mxu0 0.0
      %1454 = vmatmul.mubr.f32.gmra.mrb[0].mxu0 %v1125
      %v1455 = vpop.f32.mrb[0].mxu0
      %v1456 = vadd.f32 %v875, %v1455
      %v1457 = vpop.f32.mrb[0].mxu0
      %1458 = vmatprep.mubr.f32.mxu0 0.0
      %1459 = vmatmul.mubr.f32.gmra.mrb[0].mxu0 %v1128
      %v1460 = vpop.f32.mrb[0].mxu0
      %v1461 = vadd.f32 %v880, %v1460
      %v1462 = vpop.f32.mrb[0].mxu0
      %1463 = vmatprep.mubr.f32.mxu0 0.0
      %1464 = vmatmul.mubr.f32.gmra.mrb[0].mxu0 %v1131
      %v1465 = vpop.f32.mrb[0].mxu0
      %v1466 = vadd.f32 %v885, %v1465
      %v1467 = vpop.f32.mrb[0].mxu0
      %1468 = vmatprep.mubr.f32.mxu0 0.0
      %1469 = vmatmul.mubr.f32.gmra.mrb[0].mxu0 %v1134
      %v1470 = vpop.f32.mrb[0].mxu0
      %v1471 = vadd.f32 %v890, %v1470
      %v1472 = vpop.f32.mrb[0].mxu0
      %1473 = vmatprep.mubr.f32.mxu0 0.0
      %1474 = vmatmul.mubr.f32.gmra.mrb[0].mxu0 %v1137
      %v1475 = vpop.f32.mrb[0].mxu0
      %v1476 = vadd.f32 %v895, %v1475
      %v1477 = vpop.f32.mrb[0].mxu0
      %1478 = vmatprep.mubr.f32.mxu0 0.0
      %1479 = vmatmul.mubr.f32.gmra.mrb[0].mxu0 %v1140
      %v1480 = vpop.f32.mrb[0].mxu0
      %v1481 = vadd.f32 %v900, %v1480
      %v1482 = vpop.f32.mrb[0].mxu0
      %1483 = vmatprep.mubr.f32.mxu0 0.0
      %1484 = vmatmul.mubr.f32.gmra.mrb[0].mxu0 %v1143
      %v1485 = vpop.f32.mrb[0].mxu0
      %v1486 = vadd.f32 %v905, %v1485
      %v1487 = vpop.f32.mrb[0].mxu0
      %1488 = vmatprep.mubr.f32.mxu0 0.0
      %1489 = vmatmul.mubr.f32.gmra.mrb[0].mxu0 %v1146
      %v1490 = vpop.f32.mrb[0].mxu0
      %v1491 = vadd.f32 %v910, %v1490
      %v1492 = vpop.f32.mrb[0].mxu0
      %1493 = vmatprep.mubr.f32.mxu0 0.0
      %1494 = vmatmul.mubr.f32.gmra.mrb[0].mxu0 %v1149
      %v1495 = vpop.f32.mrb[0].mxu0
      %v1496 = vadd.f32 %v915, %v1495
      %v1497 = vpop.f32.mrb[0].mxu0
      %1498 = vmatprep.mubr.f32.mxu0 0.0
      %1499 = vmatmul.mubr.f32.gmra.mrb[0].mxu0 %v1152
      %v1500 = vpop.f32.mrb[0].mxu0
      %v1501 = vadd.f32 %v920, %v1500
      %v1502 = vpop.f32.mrb[0].mxu0
      %1503 = vmatprep.mubr.f32.mxu0 0.0
      %1504 = vmatmul.mubr.f32.gmra.mrb[0].mxu0 %v1155
      %v1505 = vpop.f32.mrb[0].mxu0
      %v1506 = vadd.f32 %v925, %v1505
      %v1507 = vpop.f32.mrb[0].mxu0
      %1508 = vmatprep.mubr.f32.mxu0 0.0
      %1509 = vmatmul.mubr.f32.gmra.mrb[0].mxu0 %v1158
      %v1510 = vpop.f32.mrb[0].mxu0
      %v1511 = vadd.f32 %v930, %v1510
      %v1512 = vpop.f32.mrb[0].mxu0
      %1513 = vmatprep.mubr.f32.mxu0 0.0
      %1514 = vmatmul.mubr.f32.gmra.mrb[0].mxu0 %v1161
      %v1515 = vpop.f32.mrb[0].mxu0
      %v1516 = vadd.f32 %v935, %v1515
      %v1517 = vpop.f32.mrb[0].mxu0
      %1518 = vmatprep.mubr.f32.mxu0 0.0
      %1519 = vmatmul.mubr.f32.gmra.mrb[0].mxu0 %v1164
      %v1520 = vpop.f32.mrb[0].mxu0
      %v1521 = vadd.f32 %v940, %v1520
      %v1522 = vpop.f32.mrb[0].mxu0
      %1523 = vmatprep.mubr.f32.mxu0 0.0
      %1524 = vmatmul.mubr.f32.gmra.mrb[0].mxu0 %v1167
      %v1525 = vpop.f32.mrb[0].mxu0
      %v1526 = vadd.f32 %v945, %v1525
      %v1527 = vpop.f32.mrb[0].mxu0
      %1528 = vmatprep.mubr.f32.mxu0 0.0
      %1529 = vmatmul.mubr.f32.gmra.mrb[0].mxu0 %v1170
      %v1530 = vpop.f32.mrb[0].mxu0
      %v1531 = vadd.f32 %v950, %v1530
      %v1532 = vpop.f32.mrb[0].mxu0
      %1533 = vmatprep.mubr.f32.mxu0 0.0
      %1534 = vmatmul.mubr.f32.gmra.mrb[0].mxu0 %v1173
      %v1535 = vpop.f32.mrb[0].mxu0
      %v1536 = vadd.f32 %v955, %v1535
      %v1537 = vpop.f32.mrb[0].mxu0
      %1538 = vmatprep.mubr.f32.mxu0 0.0
      %1539 = vmatmul.mubr.f32.gmra.mrb[0].mxu0 %v1176
      %v1540 = vpop.f32.mrb[0].mxu0
      %v1541 = vadd.f32 %v960, %v1540
      %v1542 = vpop.f32.mrb[0].mxu0
      %1543 = vmatprep.mubr.f32.mxu0 0.0
      %1544 = vmatmul.mubr.f32.gmra.mrb[0].mxu0 %v1179
      %v1545 = vpop.f32.mrb[0].mxu0
      %v1546 = vadd.f32 %v965, %v1545
      %v1547 = vpop.f32.mrb[0].mxu0
      %1548 = vmatprep.mubr.f32.mxu0 0.0
      %1549 = vmatmul.mubr.f32.gmra.mrb[0].mxu0 %v1182
      %v1550 = vpop.f32.mrb[0].mxu0
      %v1551 = vadd.f32 %v970, %v1550
      %v1552 = vpop.f32.mrb[0].mxu0
      %1553 = vmatprep.mubr.f32.mxu0 0.0
      %1554 = vmatmul.mubr.f32.gmra.mrb[0].mxu0 %v1185
      %v1555 = vpop.f32.mrb[0].mxu0
      %v1556 = vadd.f32 %v975, %v1555
      %v1557 = vpop.f32.mrb[0].mxu0
      %1558 = vmatprep.mubr.f32.mxu0 0.0
      %1559 = vmatmul.mubr.f32.gmra.mrb[0].mxu0 %v1188
      %v1560 = vpop.f32.mrb[0].mxu0
      %v1561 = vadd.f32 %v980, %v1560
      %v1562 = vpop.f32.mrb[0].mxu0
      %1563 = vmatprep.mubr.f32.mxu0 0.0
      %1564 = vmatmul.mubr.f32.gmra.mrb[0].mxu0 %v1191
      %v1565 = vpop.f32.mrb[0].mxu0
      %v1566 = vadd.f32 %v985, %v1565
      %v1567 = vpop.f32.mrb[0].mxu0
      %1568 = vmatprep.mubr.f32.mxu0 0.0
      %1569 = vmatmul.mubr.f32.gmra.mrb[0].mxu0 %v1194
      %v1570 = vpop.f32.mrb[0].mxu0
      %v1571 = vadd.f32 %v990, %v1570
      %v1572 = vpop.f32.mrb[0].mxu0
      %1573 = vmatprep.mubr.f32.mxu0 0.0
      %1574 = vmatmul.mubr.f32.gmra.mrb[0].mxu0 %v1197
      %v1575 = vpop.f32.mrb[0].mxu0
      %v1576 = vadd.f32 %v995, %v1575
      %v1577 = vpop.f32.mrb[0].mxu0
      %1578 = vmatprep.mubr.f32.mxu0 0.0
      %1579 = vmatmul.mubr.f32.gmra.mrb[0].mxu0 %v1200
      %v1580 = vpop.f32.mrb[0].mxu0
      %v1581 = vadd.f32 %v1000, %v1580
      %v1582 = vpop.f32.mrb[0].mxu0
      %1583 = vmatprep.mubr.f32.mxu0 0.0
      %1584 = vmatmul.mubr.f32.gmra.mrb[0].mxu0 %v1203
      %v1585 = vpop.f32.mrb[0].mxu0
      %v1586 = vadd.f32 %v1005, %v1585
      %v1587 = vpop.f32.mrb[0].mxu0
      %1588 = vmatprep.mubr.f32.mxu0 0.0
      %1589 = vmatmul.mubr.f32.gmra.mrb[0].mxu0 %v1206
      %v1590 = vpop.f32.mrb[0].mxu0
      %v1591 = vadd.f32 %v1010, %v1590
      %v1592 = vpop.f32.mrb[0].mxu0
      %1593 = vmatprep.mubr.f32.mxu0 0.0
      %1594 = vmatmul.mubr.f32.gmra.mrb[0].mxu0 %v1209
      %v1595 = vpop.f32.mrb[0].mxu0
      %v1596 = vadd.f32 %v1015, %v1595
      %v1597 = vpop.f32.mrb[0].mxu0
      %1598 = vdwg.mxu0
      %v1599 = vlaneseq
      %v1600 = vshrl.u32 %v1599, 7
      %v1601 = vsub.s32 0, %v1600
      %v1602 = vrot.slane %v304, %v1601
      %v1603 = vadd.f32 %v1281, %v1602
      %v1604 = vadd.f32 %v1286, %v1602
      %v1605 = vadd.f32 %v1291, %v1602
      %v1606 = vadd.f32 %v1296, %v1602
      %v1607 = vadd.f32 %v1301, %v1602
      %v1608 = vadd.f32 %v1306, %v1602
      %v1609 = vadd.f32 %v1311, %v1602
      %v1610 = vadd.f32 %v1316, %v1602
      %v1611 = vadd.f32 %v1321, %v1602
      %v1612 = vadd.f32 %v1326, %v1602
      %v1613 = vadd.f32 %v1331, %v1602
      %v1614 = vadd.f32 %v1336, %v1602
      %v1615 = vadd.f32 %v1341, %v1602
      %v1616 = vadd.f32 %v1346, %v1602
      %v1617 = vadd.f32 %v1351, %v1602
      %v1618 = vadd.f32 %v1356, %v1602
      %v1619 = vadd.f32 %v1361, %v1602
      %v1620 = vadd.f32 %v1366, %v1602
      %v1621 = vadd.f32 %v1371, %v1602
      %v1622 = vadd.f32 %v1376, %v1602
      %v1623 = vadd.f32 %v1381, %v1602
      %v1624 = vadd.f32 %v1386, %v1602
      %v1625 = vadd.f32 %v1391, %v1602
      %v1626 = vadd.f32 %v1396, %v1602
      %v1627 = vadd.f32 %v1401, %v1602
      %v1628 = vadd.f32 %v1406, %v1602
      %v1629 = vadd.f32 %v1411, %v1602
      %v1630 = vadd.f32 %v1416, %v1602
      %v1631 = vadd.f32 %v1421, %v1602
      %v1632 = vadd.f32 %v1426, %v1602
      %v1633 = vadd.f32 %v1431, %v1602
      %v1634 = vadd.f32 %v1436, %v1602
      %v1635 = vadd.f32 %v1441, %v1602
      %v1636 = vadd.f32 %v1446, %v1602
      %v1637 = vadd.f32 %v1451, %v1602
      %v1638 = vadd.f32 %v1456, %v1602
      %v1639 = vadd.f32 %v1461, %v1602
      %v1640 = vadd.f32 %v1466, %v1602
      %v1641 = vadd.f32 %v1471, %v1602
      %v1642 = vadd.f32 %v1476, %v1602
      %v1643 = vadd.f32 %v1481, %v1602
      %v1644 = vadd.f32 %v1486, %v1602
      %v1645 = vadd.f32 %v1491, %v1602
      %v1646 = vadd.f32 %v1496, %v1602
      %v1647 = vadd.f32 %v1501, %v1602
      %v1648 = vadd.f32 %v1506, %v1602
      %v1649 = vadd.f32 %v1511, %v1602
      %v1650 = vadd.f32 %v1516, %v1602
      %v1651 = vadd.f32 %v1521, %v1602
      %v1652 = vadd.f32 %v1526, %v1602
      %v1653 = vadd.f32 %v1531, %v1602
      %v1654 = vadd.f32 %v1536, %v1602
      %v1655 = vadd.f32 %v1541, %v1602
      %v1656 = vadd.f32 %v1546, %v1602
      %v1657 = vadd.f32 %v1551, %v1602
      %v1658 = vadd.f32 %v1556, %v1602
      %v1659 = vadd.f32 %v1561, %v1602
      %v1660 = vadd.f32 %v1566, %v1602
      %v1661 = vadd.f32 %v1571, %v1602
      %v1662 = vadd.f32 %v1576, %v1602
      %v1663 = vadd.f32 %v1581, %v1602
      %v1664 = vadd.f32 %v1586, %v1602
      %v1665 = vadd.f32 %v1591, %v1602
      %v1666 = vadd.f32 %v1596, %v1602
      %v1667 = vmax.f32 %v1603, 0.0
      %v1668 = vmax.f32 %v1604, 0.0
      %v1669 = vmax.f32 %v1605, 0.0
      %v1670 = vmax.f32 %v1606, 0.0
      %v1671 = vmax.f32 %v1607, 0.0
      %v1672 = vmax.f32 %v1608, 0.0
      %v1673 = vmax.f32 %v1609, 0.0
      %v1674 = vmax.f32 %v1610, 0.0
      %v1675 = vmax.f32 %v1611, 0.0
      %v1676 = vmax.f32 %v1612, 0.0
      %v1677 = vmax.f32 %v1613, 0.0
      %v1678 = vmax.f32 %v1614, 0.0
      %v1679 = vmax.f32 %v1615, 0.0
      %v1680 = vmax.f32 %v1616, 0.0
      %v1681 = vmax.f32 %v1617, 0.0
      %v1682 = vmax.f32 %v1618, 0.0
      %v1683 = vmax.f32 %v1619, 0.0
      %v1684 = vmax.f32 %v1620, 0.0
      %v1685 = vmax.f32 %v1621, 0.0
      %v1686 = vmax.f32 %v1622, 0.0
      %v1687 = vmax.f32 %v1623, 0.0
      %v1688 = vmax.f32 %v1624, 0.0
      %v1689 = vmax.f32 %v1625, 0.0
      %v1690 = vmax.f32 %v1626, 0.0
      %v1691 = vmax.f32 %v1627, 0.0
      %v1692 = vmax.f32 %v1628, 0.0
      %v1693 = vmax.f32 %v1629, 0.0
      %v1694 = vmax.f32 %v1630, 0.0
      %v1695 = vmax.f32 %v1631, 0.0
      %v1696 = vmax.f32 %v1632, 0.0
      %v1697 = vmax.f32 %v1633, 0.0
      %v1698 = vmax.f32 %v1634, 0.0
      %v1699 = vmax.f32 %v1635, 0.0
      %v1700 = vmax.f32 %v1636, 0.0
      %v1701 = vmax.f32 %v1637, 0.0
      %v1702 = vmax.f32 %v1638, 0.0
      %v1703 = vmax.f32 %v1639, 0.0
      %v1704 = vmax.f32 %v1640, 0.0
      %v1705 = vmax.f32 %v1641, 0.0
      %v1706 = vmax.f32 %v1642, 0.0
      %v1707 = vmax.f32 %v1643, 0.0
      %v1708 = vmax.f32 %v1644, 0.0
      %v1709 = vmax.f32 %v1645, 0.0
      %v1710 = vmax.f32 %v1646, 0.0
      %v1711 = vmax.f32 %v1647, 0.0
      %v1712 = vmax.f32 %v1648, 0.0
      %v1713 = vmax.f32 %v1649, 0.0
      %v1714 = vmax.f32 %v1650, 0.0
      %v1715 = vmax.f32 %v1651, 0.0
      %v1716 = vmax.f32 %v1652, 0.0
      %v1717 = vmax.f32 %v1653, 0.0
      %v1718 = vmax.f32 %v1654, 0.0
      %v1719 = vmax.f32 %v1655, 0.0
      %v1720 = vmax.f32 %v1656, 0.0
      %v1721 = vmax.f32 %v1657, 0.0
      %v1722 = vmax.f32 %v1658, 0.0
      %v1723 = vmax.f32 %v1659, 0.0
      %v1724 = vmax.f32 %v1660, 0.0
      %v1725 = vmax.f32 %v1661, 0.0
      %v1726 = vmax.f32 %v1662, 0.0
      %v1727 = vmax.f32 %v1663, 0.0
      %v1728 = vmax.f32 %v1664, 0.0
      %v1729 = vmax.f32 %v1665, 0.0
      %v1730 = vmax.f32 %v1666, 0.0
      %v1731 = vld [vmem:[%s4] sm:$0xff]
      %v1732 = vld [vmem:[%s4 + $0x8] sm:$0xff]
      %v1733 = vld [vmem:[%s4 + $0x10] sm:$0xff]
      %v1734 = vld [vmem:[%s4 + $0x18] sm:$0xff]
      %v1735 = vld [vmem:[%s4 + $0x20] sm:$0xff]
      %v1736 = vld [vmem:[%s4 + $0x28] sm:$0xff]
      %v1737 = vld [vmem:[%s4 + $0x30] sm:$0xff]
      %v1738 = vld [vmem:[%s4 + $0x38] sm:$0xff]
      %v1739 = vlaneseq
      %v1740 = vshrl.u32 %v1739, 7
      %v1741 = vsub.s32 1, %v1740
      %v1742 = vrot.slane %v304, %v1741
      %vm1743 = vcmask 523264
      %v1745 = vsel %vm1743, %v1667, 0
      %v1748 = vsel %vm1743, %v1668, 0
      %v1751 = vsel %vm1743, %v1669, 0
      %v1754 = vsel %vm1743, %v1670, 0
      %v1757 = vsel %vm1743, %v1671, 0
      %v1760 = vsel %vm1743, %v1672, 0
      %v1763 = vsel %vm1743, %v1673, 0
      %v1766 = vsel %vm1743, %v1674, 0
      %v1769 = vsel %vm1743, %v1675, 0
      %v1772 = vsel %vm1743, %v1676, 0
      %v1775 = vsel %vm1743, %v1677, 0
      %v1778 = vsel %vm1743, %v1678, 0
      %v1781 = vsel %vm1743, %v1679, 0
      %v1784 = vsel %vm1743, %v1680, 0
      %v1787 = vsel %vm1743, %v1681, 0
      %v1790 = vsel %vm1743, %v1682, 0
      %v1793 = vsel %vm1743, %v1683, 0
      %v1796 = vsel %vm1743, %v1684, 0
      %v1799 = vsel %vm1743, %v1685, 0
      %v1802 = vsel %vm1743, %v1686, 0
      %v1805 = vsel %vm1743, %v1687, 0
      %v1808 = vsel %vm1743, %v1688, 0
      %v1811 = vsel %vm1743, %v1689, 0
      %v1814 = vsel %vm1743, %v1690, 0
      %v1817 = vsel %vm1743, %v1691, 0
      %v1820 = vsel %vm1743, %v1692, 0
      %v1823 = vsel %vm1743, %v1693, 0
      %v1826 = vsel %vm1743, %v1694, 0
      %v1829 = vsel %vm1743, %v1695, 0
      %v1832 = vsel %vm1743, %v1696, 0
      %v1835 = vsel %vm1743, %v1697, 0
      %v1838 = vsel %vm1743, %v1698, 0
      %v1841 = vsel %vm1743, %v1699, 0
      %v1844 = vsel %vm1743, %v1700, 0
      %v1847 = vsel %vm1743, %v1701, 0
      %v1850 = vsel %vm1743, %v1702, 0
      %v1853 = vsel %vm1743, %v1703, 0
      %v1856 = vsel %vm1743, %v1704, 0
      %v1859 = vsel %vm1743, %v1705, 0
      %v1862 = vsel %vm1743, %v1706, 0
      %v1865 = vsel %vm1743, %v1707, 0
      %v1868 = vsel %vm1743, %v1708, 0
      %v1871 = vsel %vm1743, %v1709, 0
      %v1874 = vsel %vm1743, %v1710, 0
      %v1877 = vsel %vm1743, %v1711, 0
      %v1880 = vsel %vm1743, %v1712, 0
      %v1883 = vsel %vm1743, %v1713, 0
      %v1886 = vsel %vm1743, %v1714, 0
      %v1889 = vsel %vm1743, %v1715, 0
      %v1892 = vsel %vm1743, %v1716, 0
      %v1895 = vsel %vm1743, %v1717, 0
      %v1898 = vsel %vm1743, %v1718, 0
      %v1901 = vsel %vm1743, %v1719, 0
      %v1904 = vsel %vm1743, %v1720, 0
      %v1907 = vsel %vm1743, %v1721, 0
      %v1910 = vsel %vm1743, %v1722, 0
      %v1913 = vsel %vm1743, %v1723, 0
      %v1916 = vsel %vm1743, %v1724, 0
      %v1919 = vsel %vm1743, %v1725, 0
      %v1922 = vsel %vm1743, %v1726, 0
      %v1925 = vsel %vm1743, %v1727, 0
      %v1928 = vsel %vm1743, %v1728, 0
      %v1931 = vsel %vm1743, %v1729, 0
      %v1934 = vsel %vm1743, %v1730, 0
      %1936 = vmatprep.subr.mxu0 0.0
      %1937 = vmatpush1.msra.mxu0 %v1731
      %1938 = vmatprep.subr.mxu0 0.0
      %1939 = vmatpush1.msra.mxu0 %v1732
      %1940 = vmatprep.subr.mxu0 0.0
      %1941 = vmatpush1.msra.mxu0 %v1733
      %1942 = vmatprep.subr.mxu0 0.0
      %1943 = vmatpush1.msra.mxu0 %v1734
      %1944 = vmatprep.subr.mxu0 0.0
      %1945 = vmatpush1.msra.mxu0 %v1735
      %1946 = vmatprep.subr.mxu0 0.0
      %1947 = vmatpush1.msra.mxu0 %v1736
      %1948 = vmatprep.subr.mxu0 0.0
      %1949 = vmatpush1.msra.mxu0 %v1737
      %1950 = vmatprep.subr.mxu0 0.0
      %1951 = vmatpush1.msra.mxu0 %v1738
      %1952 = vmatprep.subr.mxu0 0.0
      %1953 = vmatpush1.msra.mxu0 0.0
      %1954 = vmatprep.subr.mxu0 0.0
      %1955 = vmatpush1.msra.mxu0 0.0
      %1956 = vmatprep.subr.mxu0 0.0
      %1957 = vmatpush1.msra.mxu0 0.0
      %1958 = vmatprep.subr.mxu0 0.0
      %1959 = vmatpush1.msra.mxu0 0.0
      %1960 = vmatprep.subr.mxu0 0.0
      %1961 = vmatpush1.msra.mxu0 0.0
      %1962 = vmatprep.subr.mxu0 0.0
      %1963 = vmatpush1.msra.mxu0 0.0
      %1964 = vmatprep.subr.mxu0 0.0
      %1965 = vmatpush1.msra.mxu0 0.0
      %1966 = vmatprep.subr.mxu0 0.0
      %1967 = vmatpush1.msra.mxu0 0.0
      %1968 = vmatprep.subr.mxu0 0.0
      %1969 = vmatpush1.msra.mxu0 0.0
      %1970 = vmatprep.subr.mxu0 0.0
      %1971 = vmatpush1.msra.mxu0 0.0
      %1972 = vmatprep.subr.mxu0 0.0
      %1973 = vmatpush1.msra.mxu0 0.0
      %1974 = vmatprep.subr.mxu0 0.0
      %1975 = vmatpush1.msra.mxu0 0.0
      %1976 = vmatprep.subr.mxu0 0.0
      %1977 = vmatpush1.msra.mxu0 0.0
      %1978 = vmatprep.subr.mxu0 0.0
      %1979 = vmatpush1.msra.mxu0 0.0
      %1980 = vmatprep.subr.mxu0 0.0
      %1981 = vmatpush1.msra.mxu0 0.0
      %1982 = vmatprep.subr.mxu0 0.0
      %1983 = vmatpush1.msra.mxu0 0.0
      %1984 = vmatprep.subr.mxu0 0.0
      %1985 = vmatpush1.msra.mxu0 0.0
      %1986 = vmatprep.subr.mxu0 0.0
      %1987 = vmatpush1.msra.mxu0 0.0
      %1988 = vmatprep.subr.mxu0 0.0
      %1989 = vmatpush1.msra.mxu0 0.0
      %1990 = vmatprep.subr.mxu0 0.0
      %1991 = vmatpush1.msra.mxu0 0.0
      %1992 = vmatprep.subr.mxu0 0.0
      %1993 = vmatpush1.msra.mxu0 0.0
      %1994 = vmatprep.subr.mxu0 0.0
      %1995 = vmatpush1.msra.mxu0 0.0
      %1996 = vmatprep.subr.mxu0 0.0
      %1997 = vmatpush1.msra.mxu0 0.0
      %1998 = vmatprep.subr.mxu0 0.0
      %1999 = vmatpush1.msra.mxu0 0.0
      %2000 = vmatprep.mubr.f32.mxu0 0.0
      %2001 = vmatmul.mubr.f32.gmra.mrb[0].mxu0 %v1745
      %v2002 = vpop.f32.mrb[0].mxu0
      %v2003 = vadd.f32 %v1742, %v2002
      %v2004 = vpop.f32.mrb[0].mxu0
      %2005 = vmatprep.mubr.f32.mxu0 0.0
      %2006 = vmatmul.mubr.f32.gmra.mrb[0].mxu0 %v1748
      %v2007 = vpop.f32.mrb[0].mxu0
      %v2008 = vadd.f32 %v1742, %v2007
      %v2009 = vpop.f32.mrb[0].mxu0
      %2010 = vmatprep.mubr.f32.mxu0 0.0
      %2011 = vmatmul.mubr.f32.gmra.mrb[0].mxu0 %v1751
      %v2012 = vpop.f32.mrb[0].mxu0
      %v2013 = vadd.f32 %v1742, %v2012
      %v2014 = vpop.f32.mrb[0].mxu0
      %2015 = vmatprep.mubr.f32.mxu0 0.0
      %2016 = vmatmul.mubr.f32.gmra.mrb[0].mxu0 %v1754
      %v2017 = vpop.f32.mrb[0].mxu0
      %v2018 = vadd.f32 %v1742, %v2017
      %v2019 = vpop.f32.mrb[0].mxu0
      %2020 = vmatprep.mubr.f32.mxu0 0.0
      %2021 = vmatmul.mubr.f32.gmra.mrb[0].mxu0 %v1757
      %v2022 = vpop.f32.mrb[0].mxu0
      %v2023 = vadd.f32 %v1742, %v2022
      %v2024 = vpop.f32.mrb[0].mxu0
      %2025 = vmatprep.mubr.f32.mxu0 0.0
      %2026 = vmatmul.mubr.f32.gmra.mrb[0].mxu0 %v1760
      %v2027 = vpop.f32.mrb[0].mxu0
      %v2028 = vadd.f32 %v1742, %v2027
      %v2029 = vpop.f32.mrb[0].mxu0
      %2030 = vmatprep.mubr.f32.mxu0 0.0
      %2031 = vmatmul.mubr.f32.gmra.mrb[0].mxu0 %v1763
      %v2032 = vpop.f32.mrb[0].mxu0
      %v2033 = vadd.f32 %v1742, %v2032
      %v2034 = vpop.f32.mrb[0].mxu0
      %2035 = vmatprep.mubr.f32.mxu0 0.0
      %2036 = vmatmul.mubr.f32.gmra.mrb[0].mxu0 %v1766
      %v2037 = vpop.f32.mrb[0].mxu0
      %v2038 = vadd.f32 %v1742, %v2037
      %v2039 = vpop.f32.mrb[0].mxu0
      %2040 = vmatprep.mubr.f32.mxu0 0.0
      %2041 = vmatmul.mubr.f32.gmra.mrb[0].mxu0 %v1769
      %v2042 = vpop.f32.mrb[0].mxu0
      %v2043 = vadd.f32 %v1742, %v2042
      %v2044 = vpop.f32.mrb[0].mxu0
      %2045 = vmatprep.mubr.f32.mxu0 0.0
      %2046 = vmatmul.mubr.f32.gmra.mrb[0].mxu0 %v1772
      %v2047 = vpop.f32.mrb[0].mxu0
      %v2048 = vadd.f32 %v1742, %v2047
      %v2049 = vpop.f32.mrb[0].mxu0
      %2050 = vmatprep.mubr.f32.mxu0 0.0
      %2051 = vmatmul.mubr.f32.gmra.mrb[0].mxu0 %v1775
      %v2052 = vpop.f32.mrb[0].mxu0
      %v2053 = vadd.f32 %v1742, %v2052
      %v2054 = vpop.f32.mrb[0].mxu0
      %2055 = vmatprep.mubr.f32.mxu0 0.0
      %2056 = vmatmul.mubr.f32.gmra.mrb[0].mxu0 %v1778
      %v2057 = vpop.f32.mrb[0].mxu0
      %v2058 = vadd.f32 %v1742, %v2057
      %v2059 = vpop.f32.mrb[0].mxu0
      %2060 = vmatprep.mubr.f32.mxu0 0.0
      %2061 = vmatmul.mubr.f32.gmra.mrb[0].mxu0 %v1781
      %v2062 = vpop.f32.mrb[0].mxu0
      %v2063 = vadd.f32 %v1742, %v2062
      %v2064 = vpop.f32.mrb[0].mxu0
      %2065 = vmatprep.mubr.f32.mxu0 0.0
      %2066 = vmatmul.mubr.f32.gmra.mrb[0].mxu0 %v1784
      %v2067 = vpop.f32.mrb[0].mxu0
      %v2068 = vadd.f32 %v1742, %v2067
      %v2069 = vpop.f32.mrb[0].mxu0
      %2070 = vmatprep.mubr.f32.mxu0 0.0
      %2071 = vmatmul.mubr.f32.gmra.mrb[0].mxu0 %v1787
      %v2072 = vpop.f32.mrb[0].mxu0
      %v2073 = vadd.f32 %v1742, %v2072
      %v2074 = vpop.f32.mrb[0].mxu0
      %2075 = vmatprep.mubr.f32.mxu0 0.0
      %2076 = vmatmul.mubr.f32.gmra.mrb[0].mxu0 %v1790
      %v2077 = vpop.f32.mrb[0].mxu0
      %v2078 = vadd.f32 %v1742, %v2077
      %v2079 = vpop.f32.mrb[0].mxu0
      %2080 = vmatprep.mubr.f32.mxu0 0.0
      %2081 = vmatmul.mubr.f32.gmra.mrb[0].mxu0 %v1793
      %v2082 = vpop.f32.mrb[0].mxu0
      %v2083 = vadd.f32 %v1742, %v2082
      %v2084 = vpop.f32.mrb[0].mxu0
      %2085 = vmatprep.mubr.f32.mxu0 0.0
      %2086 = vmatmul.mubr.f32.gmra.mrb[0].mxu0 %v1796
      %v2087 = vpop.f32.mrb[0].mxu0
      %v2088 = vadd.f32 %v1742, %v2087
      %v2089 = vpop.f32.mrb[0].mxu0
      %2090 = vmatprep.mubr.f32.mxu0 0.0
      %2091 = vmatmul.mubr.f32.gmra.mrb[0].mxu0 %v1799
      %v2092 = vpop.f32.mrb[0].mxu0
      %v2093 = vadd.f32 %v1742, %v2092
      %v2094 = vpop.f32.mrb[0].mxu0
      %2095 = vmatprep.mubr.f32.mxu0 0.0
      %2096 = vmatmul.mubr.f32.gmra.mrb[0].mxu0 %v1802
      %v2097 = vpop.f32.mrb[0].mxu0
      %v2098 = vadd.f32 %v1742, %v2097
      %v2099 = vpop.f32.mrb[0].mxu0
      %2100 = vmatprep.mubr.f32.mxu0 0.0
      %2101 = vmatmul.mubr.f32.gmra.mrb[0].mxu0 %v1805
      %v2102 = vpop.f32.mrb[0].mxu0
      %v2103 = vadd.f32 %v1742, %v2102
      %v2104 = vpop.f32.mrb[0].mxu0
      %2105 = vmatprep.mubr.f32.mxu0 0.0
      %2106 = vmatmul.mubr.f32.gmra.mrb[0].mxu0 %v1808
      %v2107 = vpop.f32.mrb[0].mxu0
      %v2108 = vadd.f32 %v1742, %v2107
      %v2109 = vpop.f32.mrb[0].mxu0
      %2110 = vmatprep.mubr.f32.mxu0 0.0
      %2111 = vmatmul.mubr.f32.gmra.mrb[0].mxu0 %v1811
      %v2112 = vpop.f32.mrb[0].mxu0
      %v2113 = vadd.f32 %v1742, %v2112
      %v2114 = vpop.f32.mrb[0].mxu0
      %2115 = vmatprep.mubr.f32.mxu0 0.0
      %2116 = vmatmul.mubr.f32.gmra.mrb[0].mxu0 %v1814
      %v2117 = vpop.f32.mrb[0].mxu0
      %v2118 = vadd.f32 %v1742, %v2117
      %v2119 = vpop.f32.mrb[0].mxu0
      %2120 = vmatprep.mubr.f32.mxu0 0.0
      %2121 = vmatmul.mubr.f32.gmra.mrb[0].mxu0 %v1817
      %v2122 = vpop.f32.mrb[0].mxu0
      %v2123 = vadd.f32 %v1742, %v2122
      %v2124 = vpop.f32.mrb[0].mxu0
      %2125 = vmatprep.mubr.f32.mxu0 0.0
      %2126 = vmatmul.mubr.f32.gmra.mrb[0].mxu0 %v1820
      %v2127 = vpop.f32.mrb[0].mxu0
      %v2128 = vadd.f32 %v1742, %v2127
      %v2129 = vpop.f32.mrb[0].mxu0
      %2130 = vmatprep.mubr.f32.mxu0 0.0
      %2131 = vmatmul.mubr.f32.gmra.mrb[0].mxu0 %v1823
      %v2132 = vpop.f32.mrb[0].mxu0
      %v2133 = vadd.f32 %v1742, %v2132
      %v2134 = vpop.f32.mrb[0].mxu0
      %2135 = vmatprep.mubr.f32.mxu0 0.0
      %2136 = vmatmul.mubr.f32.gmra.mrb[0].mxu0 %v1826
      %v2137 = vpop.f32.mrb[0].mxu0
      %v2138 = vadd.f32 %v1742, %v2137
      %v2139 = vpop.f32.mrb[0].mxu0
      %2140 = vmatprep.mubr.f32.mxu0 0.0
      %2141 = vmatmul.mubr.f32.gmra.mrb[0].mxu0 %v1829
      %v2142 = vpop.f32.mrb[0].mxu0
      %v2143 = vadd.f32 %v1742, %v2142
      %v2144 = vpop.f32.mrb[0].mxu0
      %2145 = vmatprep.mubr.f32.mxu0 0.0
      %2146 = vmatmul.mubr.f32.gmra.mrb[0].mxu0 %v1832
      %v2147 = vpop.f32.mrb[0].mxu0
      %v2148 = vadd.f32 %v1742, %v2147
      %v2149 = vpop.f32.mrb[0].mxu0
      %2150 = vmatprep.mubr.f32.mxu0 0.0
      %2151 = vmatmul.mubr.f32.gmra.mrb[0].mxu0 %v1835
      %v2152 = vpop.f32.mrb[0].mxu0
      %v2153 = vadd.f32 %v1742, %v2152
      %v2154 = vpop.f32.mrb[0].mxu0
      %2155 = vmatprep.mubr.f32.mxu0 0.0
      %2156 = vmatmul.mubr.f32.gmra.mrb[0].mxu0 %v1838
      %v2157 = vpop.f32.mrb[0].mxu0
      %v2158 = vadd.f32 %v1742, %v2157
      %v2159 = vpop.f32.mrb[0].mxu0
      %2160 = vmatprep.mubr.f32.mxu0 0.0
      %2161 = vmatmul.mubr.f32.gmra.mrb[0].mxu0 %v1841
      %v2162 = vpop.f32.mrb[0].mxu0
      %v2163 = vadd.f32 %v1742, %v2162
      %v2164 = vpop.f32.mrb[0].mxu0
      %2165 = vmatprep.mubr.f32.mxu0 0.0
      %2166 = vmatmul.mubr.f32.gmra.mrb[0].mxu0 %v1844
      %v2167 = vpop.f32.mrb[0].mxu0
      %v2168 = vadd.f32 %v1742, %v2167
      %v2169 = vpop.f32.mrb[0].mxu0
      %2170 = vmatprep.mubr.f32.mxu0 0.0
      %2171 = vmatmul.mubr.f32.gmra.mrb[0].mxu0 %v1847
      %v2172 = vpop.f32.mrb[0].mxu0
      %v2173 = vadd.f32 %v1742, %v2172
      %v2174 = vpop.f32.mrb[0].mxu0
      %2175 = vmatprep.mubr.f32.mxu0 0.0
      %2176 = vmatmul.mubr.f32.gmra.mrb[0].mxu0 %v1850
      %v2177 = vpop.f32.mrb[0].mxu0
      %v2178 = vadd.f32 %v1742, %v2177
      %v2179 = vpop.f32.mrb[0].mxu0
      %2180 = vmatprep.mubr.f32.mxu0 0.0
      %2181 = vmatmul.mubr.f32.gmra.mrb[0].mxu0 %v1853
      %v2182 = vpop.f32.mrb[0].mxu0
      %v2183 = vadd.f32 %v1742, %v2182
      %v2184 = vpop.f32.mrb[0].mxu0
      %2185 = vmatprep.mubr.f32.mxu0 0.0
      %2186 = vmatmul.mubr.f32.gmra.mrb[0].mxu0 %v1856
      %v2187 = vpop.f32.mrb[0].mxu0
      %v2188 = vadd.f32 %v1742, %v2187
      %v2189 = vpop.f32.mrb[0].mxu0
      %2190 = vmatprep.mubr.f32.mxu0 0.0
      %2191 = vmatmul.mubr.f32.gmra.mrb[0].mxu0 %v1859
      %v2192 = vpop.f32.mrb[0].mxu0
      %v2193 = vadd.f32 %v1742, %v2192
      %v2194 = vpop.f32.mrb[0].mxu0
      %2195 = vmatprep.mubr.f32.mxu0 0.0
      %2196 = vmatmul.mubr.f32.gmra.mrb[0].mxu0 %v1862
      %v2197 = vpop.f32.mrb[0].mxu0
      %v2198 = vadd.f32 %v1742, %v2197
      %v2199 = vpop.f32.mrb[0].mxu0
      %2200 = vmatprep.mubr.f32.mxu0 0.0
      %2201 = vmatmul.mubr.f32.gmra.mrb[0].mxu0 %v1865
      %v2202 = vpop.f32.mrb[0].mxu0
      %v2203 = vadd.f32 %v1742, %v2202
      %v2204 = vpop.f32.mrb[0].mxu0
      %2205 = vmatprep.mubr.f32.mxu0 0.0
      %2206 = vmatmul.mubr.f32.gmra.mrb[0].mxu0 %v1868
      %v2207 = vpop.f32.mrb[0].mxu0
      %v2208 = vadd.f32 %v1742, %v2207
      %v2209 = vpop.f32.mrb[0].mxu0
      %2210 = vmatprep.mubr.f32.mxu0 0.0
      %2211 = vmatmul.mubr.f32.gmra.mrb[0].mxu0 %v1871
      %v2212 = vpop.f32.mrb[0].mxu0
      %v2213 = vadd.f32 %v1742, %v2212
      %v2214 = vpop.f32.mrb[0].mxu0
      %2215 = vmatprep.mubr.f32.mxu0 0.0
      %2216 = vmatmul.mubr.f32.gmra.mrb[0].mxu0 %v1874
      %v2217 = vpop.f32.mrb[0].mxu0
      %v2218 = vadd.f32 %v1742, %v2217
      %v2219 = vpop.f32.mrb[0].mxu0
      %2220 = vmatprep.mubr.f32.mxu0 0.0
      %2221 = vmatmul.mubr.f32.gmra.mrb[0].mxu0 %v1877
      %v2222 = vpop.f32.mrb[0].mxu0
      %v2223 = vadd.f32 %v1742, %v2222
      %v2224 = vpop.f32.mrb[0].mxu0
      %2225 = vmatprep.mubr.f32.mxu0 0.0
      %2226 = vmatmul.mubr.f32.gmra.mrb[0].mxu0 %v1880
      %v2227 = vpop.f32.mrb[0].mxu0
      %v2228 = vadd.f32 %v1742, %v2227
      %v2229 = vpop.f32.mrb[0].mxu0
      %2230 = vmatprep.mubr.f32.mxu0 0.0
      %2231 = vmatmul.mubr.f32.gmra.mrb[0].mxu0 %v1883
      %v2232 = vpop.f32.mrb[0].mxu0
      %v2233 = vadd.f32 %v1742, %v2232
      %v2234 = vpop.f32.mrb[0].mxu0
      %2235 = vmatprep.mubr.f32.mxu0 0.0
      %2236 = vmatmul.mubr.f32.gmra.mrb[0].mxu0 %v1886
      %v2237 = vpop.f32.mrb[0].mxu0
      %v2238 = vadd.f32 %v1742, %v2237
      %v2239 = vpop.f32.mrb[0].mxu0
      %2240 = vmatprep.mubr.f32.mxu0 0.0
      %2241 = vmatmul.mubr.f32.gmra.mrb[0].mxu0 %v1889
      %v2242 = vpop.f32.mrb[0].mxu0
      %v2243 = vadd.f32 %v1742, %v2242
      %v2244 = vpop.f32.mrb[0].mxu0
      %2245 = vmatprep.mubr.f32.mxu0 0.0
      %2246 = vmatmul.mubr.f32.gmra.mrb[0].mxu0 %v1892
      %v2247 = vpop.f32.mrb[0].mxu0
      %v2248 = vadd.f32 %v1742, %v2247
      %v2249 = vpop.f32.mrb[0].mxu0
      %2250 = vmatprep.mubr.f32.mxu0 0.0
      %2251 = vmatmul.mubr.f32.gmra.mrb[0].mxu0 %v1895
      %v2252 = vpop.f32.mrb[0].mxu0
      %v2253 = vadd.f32 %v1742, %v2252
      %v2254 = vpop.f32.mrb[0].mxu0
      %2255 = vmatprep.mubr.f32.mxu0 0.0
      %2256 = vmatmul.mubr.f32.gmra.mrb[0].mxu0 %v1898
      %v2257 = vpop.f32.mrb[0].mxu0
      %v2258 = vadd.f32 %v1742, %v2257
      %v2259 = vpop.f32.mrb[0].mxu0
      %2260 = vmatprep.mubr.f32.mxu0 0.0
      %2261 = vmatmul.mubr.f32.gmra.mrb[0].mxu0 %v1901
      %v2262 = vpop.f32.mrb[0].mxu0
      %v2263 = vadd.f32 %v1742, %v2262
      %v2264 = vpop.f32.mrb[0].mxu0
      %2265 = vmatprep.mubr.f32.mxu0 0.0
      %2266 = vmatmul.mubr.f32.gmra.mrb[0].mxu0 %v1904
      %v2267 = vpop.f32.mrb[0].mxu0
      %v2268 = vadd.f32 %v1742, %v2267
      %v2269 = vpop.f32.mrb[0].mxu0
      %2270 = vmatprep.mubr.f32.mxu0 0.0
      %2271 = vmatmul.mubr.f32.gmra.mrb[0].mxu0 %v1907
      %v2272 = vpop.f32.mrb[0].mxu0
      %v2273 = vadd.f32 %v1742, %v2272
      %v2274 = vpop.f32.mrb[0].mxu0
      %2275 = vmatprep.mubr.f32.mxu0 0.0
      %2276 = vmatmul.mubr.f32.gmra.mrb[0].mxu0 %v1910
      %v2277 = vpop.f32.mrb[0].mxu0
      %v2278 = vadd.f32 %v1742, %v2277
      %v2279 = vpop.f32.mrb[0].mxu0
      %2280 = vmatprep.mubr.f32.mxu0 0.0
      %2281 = vmatmul.mubr.f32.gmra.mrb[0].mxu0 %v1913
      %v2282 = vpop.f32.mrb[0].mxu0
      %v2283 = vadd.f32 %v1742, %v2282
      %v2284 = vpop.f32.mrb[0].mxu0
      %2285 = vmatprep.mubr.f32.mxu0 0.0
      %2286 = vmatmul.mubr.f32.gmra.mrb[0].mxu0 %v1916
      %v2287 = vpop.f32.mrb[0].mxu0
      %v2288 = vadd.f32 %v1742, %v2287
      %v2289 = vpop.f32.mrb[0].mxu0
      %2290 = vmatprep.mubr.f32.mxu0 0.0
      %2291 = vmatmul.mubr.f32.gmra.mrb[0].mxu0 %v1919
      %v2292 = vpop.f32.mrb[0].mxu0
      %v2293 = vadd.f32 %v1742, %v2292
      %v2294 = vpop.f32.mrb[0].mxu0
      %2295 = vmatprep.mubr.f32.mxu0 0.0
      %2296 = vmatmul.mubr.f32.gmra.mrb[0].mxu0 %v1922
      %v2297 = vpop.f32.mrb[0].mxu0
      %v2298 = vadd.f32 %v1742, %v2297
      %v2299 = vpop.f32.mrb[0].mxu0
      %2300 = vmatprep.mubr.f32.mxu0 0.0
      %2301 = vmatmul.mubr.f32.gmra.mrb[0].mxu0 %v1925
      %v2302 = vpop.f32.mrb[0].mxu0
      %v2303 = vadd.f32 %v1742, %v2302
      %v2304 = vpop.f32.mrb[0].mxu0
      %2305 = vmatprep.mubr.f32.mxu0 0.0
      %2306 = vmatmul.mubr.f32.gmra.mrb[0].mxu0 %v1928
      %v2307 = vpop.f32.mrb[0].mxu0
      %v2308 = vadd.f32 %v1742, %v2307
      %v2309 = vpop.f32.mrb[0].mxu0
      %2310 = vmatprep.mubr.f32.mxu0 0.0
      %2311 = vmatmul.mubr.f32.gmra.mrb[0].mxu0 %v1931
      %v2312 = vpop.f32.mrb[0].mxu0
      %v2313 = vadd.f32 %v1742, %v2312
      %v2314 = vpop.f32.mrb[0].mxu0
      %2315 = vmatprep.mubr.f32.mxu0 0.0
      %2316 = vmatmul.mubr.f32.gmra.mrb[0].mxu0 %v1934
      %v2317 = vpop.f32.mrb[0].mxu0
      %v2318 = vadd.f32 %v1742, %v2317
      %v2319 = vpop.f32.mrb[0].mxu0
      %2320 = vdwg.mxu0
      %v2321 = vmax.f32 %v2003, 0.0
      %v2322 = vmax.f32 %v2008, 0.0
      %v2323 = vmax.f32 %v2013, 0.0
      %v2324 = vmax.f32 %v2018, 0.0
      %v2325 = vmax.f32 %v2023, 0.0
      %v2326 = vmax.f32 %v2028, 0.0
      %v2327 = vmax.f32 %v2033, 0.0
      %v2328 = vmax.f32 %v2038, 0.0
      %v2329 = vmax.f32 %v2043, 0.0
      %v2330 = vmax.f32 %v2048, 0.0
      %v2331 = vmax.f32 %v2053, 0.0
      %v2332 = vmax.f32 %v2058, 0.0
      %v2333 = vmax.f32 %v2063, 0.0
      %v2334 = vmax.f32 %v2068, 0.0
      %v2335 = vmax.f32 %v2073, 0.0
      %v2336 = vmax.f32 %v2078, 0.0
      %v2337 = vmax.f32 %v2083, 0.0
      %v2338 = vmax.f32 %v2088, 0.0
      %v2339 = vmax.f32 %v2093, 0.0
      %v2340 = vmax.f32 %v2098, 0.0
      %v2341 = vmax.f32 %v2103, 0.0
      %v2342 = vmax.f32 %v2108, 0.0
      %v2343 = vmax.f32 %v2113, 0.0
      %v2344 = vmax.f32 %v2118, 0.0
      %v2345 = vmax.f32 %v2123, 0.0
      %v2346 = vmax.f32 %v2128, 0.0
      %v2347 = vmax.f32 %v2133, 0.0
      %v2348 = vmax.f32 %v2138, 0.0
      %v2349 = vmax.f32 %v2143, 0.0
      %v2350 = vmax.f32 %v2148, 0.0
      %v2351 = vmax.f32 %v2153, 0.0
      %v2352 = vmax.f32 %v2158, 0.0
      %v2353 = vmax.f32 %v2163, 0.0
      %v2354 = vmax.f32 %v2168, 0.0
      %v2355 = vmax.f32 %v2173, 0.0
      %v2356 = vmax.f32 %v2178, 0.0
      %v2357 = vmax.f32 %v2183, 0.0
      %v2358 = vmax.f32 %v2188, 0.0
      %v2359 = vmax.f32 %v2193, 0.0
      %v2360 = vmax.f32 %v2198, 0.0
      %v2361 = vmax.f32 %v2203, 0.0
      %v2362 = vmax.f32 %v2208, 0.0
      %v2363 = vmax.f32 %v2213, 0.0
      %v2364 = vmax.f32 %v2218, 0.0
      %v2365 = vmax.f32 %v2223, 0.0
      %v2366 = vmax.f32 %v2228, 0.0
      %v2367 = vmax.f32 %v2233, 0.0
      %v2368 = vmax.f32 %v2238, 0.0
      %v2369 = vmax.f32 %v2243, 0.0
      %v2370 = vmax.f32 %v2248, 0.0
      %v2371 = vmax.f32 %v2253, 0.0
      %v2372 = vmax.f32 %v2258, 0.0
      %v2373 = vmax.f32 %v2263, 0.0
      %v2374 = vmax.f32 %v2268, 0.0
      %v2375 = vmax.f32 %v2273, 0.0
      %v2376 = vmax.f32 %v2278, 0.0
      %v2377 = vmax.f32 %v2283, 0.0
      %v2378 = vmax.f32 %v2288, 0.0
      %v2379 = vmax.f32 %v2293, 0.0
      %v2380 = vmax.f32 %v2298, 0.0
      %v2381 = vmax.f32 %v2303, 0.0
      %v2382 = vmax.f32 %v2308, 0.0
      %v2383 = vmax.f32 %v2313, 0.0
      %v2384 = vmax.f32 %v2318, 0.0
      %v2385 = vld [vmem:[%s5] sm:$0xff]
      %v2386 = vld [vmem:[%s5 + $0x8] sm:$0xff]
      %v2387 = vld [vmem:[%s5 + $0x10] sm:$0xff]
      %v2388 = vld [vmem:[%s5 + $0x18] sm:$0xff]
      %v2389 = vld [vmem:[%s5 + $0x20] sm:$0xff]
      %v2390 = vld [vmem:[%s5 + $0x28] sm:$0xff]
      %v2391 = vld [vmem:[%s5 + $0x30] sm:$0xff]
      %v2392 = vld [vmem:[%s5 + $0x38] sm:$0xff]
      %v2393 = vlaneseq
      %v2394 = vshrl.u32 %v2393, 7
      %v2395 = vsub.s32 2, %v2394
      %v2396 = vrot.slane %v304, %v2395
      %v2398 = vsel %vm1743, %v2321, 0
      %v2401 = vsel %vm1743, %v2322, 0
      %v2404 = vsel %vm1743, %v2323, 0
      %v2407 = vsel %vm1743, %v2324, 0
      %v2410 = vsel %vm1743, %v2325, 0
      %v2413 = vsel %vm1743, %v2326, 0
      %v2416 = vsel %vm1743, %v2327, 0
      %v2419 = vsel %vm1743, %v2328, 0
      %v2422 = vsel %vm1743, %v2329, 0
      %v2425 = vsel %vm1743, %v2330, 0
      %v2428 = vsel %vm1743, %v2331, 0
      %v2431 = vsel %vm1743, %v2332, 0
      %v2434 = vsel %vm1743, %v2333, 0
      %v2437 = vsel %vm1743, %v2334, 0
      %v2440 = vsel %vm1743, %v2335, 0
      %v2443 = vsel %vm1743, %v2336, 0
      %v2446 = vsel %vm1743, %v2337, 0
      %v2449 = vsel %vm1743, %v2338, 0
      %v2452 = vsel %vm1743, %v2339, 0
      %v2455 = vsel %vm1743, %v2340, 0
      %v2458 = vsel %vm1743, %v2341, 0
      %v2461 = vsel %vm1743, %v2342, 0
      %v2464 = vsel %vm1743, %v2343, 0
      %v2467 = vsel %vm1743, %v2344, 0
      %v2470 = vsel %vm1743, %v2345, 0
      %v2473 = vsel %vm1743, %v2346, 0
      %v2476 = vsel %vm1743, %v2347, 0
      %v2479 = vsel %vm1743, %v2348, 0
      %v2482 = vsel %vm1743, %v2349, 0
      %v2485 = vsel %vm1743, %v2350, 0
      %v2488 = vsel %vm1743, %v2351, 0
      %v2491 = vsel %vm1743, %v2352, 0
      %v2494 = vsel %vm1743, %v2353, 0
      %v2497 = vsel %vm1743, %v2354, 0
      %v2500 = vsel %vm1743, %v2355, 0
      %v2503 = vsel %vm1743, %v2356, 0
      %v2506 = vsel %vm1743, %v2357, 0
      %v2509 = vsel %vm1743, %v2358, 0
      %v2512 = vsel %vm1743, %v2359, 0
      %v2515 = vsel %vm1743, %v2360, 0
      %v2518 = vsel %vm1743, %v2361, 0
      %v2521 = vsel %vm1743, %v2362, 0
      %v2524 = vsel %vm1743, %v2363, 0
      %v2527 = vsel %vm1743, %v2364, 0
      %v2530 = vsel %vm1743, %v2365, 0
      %v2533 = vsel %vm1743, %v2366, 0
      %v2536 = vsel %vm1743, %v2367, 0
      %v2539 = vsel %vm1743, %v2368, 0
      %v2542 = vsel %vm1743, %v2369, 0
      %v2545 = vsel %vm1743, %v2370, 0
      %v2548 = vsel %vm1743, %v2371, 0
      %v2551 = vsel %vm1743, %v2372, 0
      %v2554 = vsel %vm1743, %v2373, 0
      %v2557 = vsel %vm1743, %v2374, 0
      %v2560 = vsel %vm1743, %v2375, 0
      %v2563 = vsel %vm1743, %v2376, 0
      %v2566 = vsel %vm1743, %v2377, 0
      %v2569 = vsel %vm1743, %v2378, 0
      %v2572 = vsel %vm1743, %v2379, 0
      %v2575 = vsel %vm1743, %v2380, 0
      %v2578 = vsel %vm1743, %v2381, 0
      %v2581 = vsel %vm1743, %v2382, 0
      %v2584 = vsel %vm1743, %v2383, 0
      %v2587 = vsel %vm1743, %v2384, 0
      %2589 = vmatprep.subr.mxu0 0.0
      %2590 = vmatpush1.msra.mxu0 %v2385
      %2591 = vmatprep.subr.mxu0 0.0
      %2592 = vmatpush1.msra.mxu0 %v2386
      %2593 = vmatprep.subr.mxu0 0.0
      %2594 = vmatpush1.msra.mxu0 %v2387
      %2595 = vmatprep.subr.mxu0 0.0
      %2596 = vmatpush1.msra.mxu0 %v2388
      %2597 = vmatprep.subr.mxu0 0.0
      %2598 = vmatpush1.msra.mxu0 %v2389
      %2599 = vmatprep.subr.mxu0 0.0
      %2600 = vmatpush1.msra.mxu0 %v2390
      %2601 = vmatprep.subr.mxu0 0.0
      %2602 = vmatpush1.msra.mxu0 %v2391
      %2603 = vmatprep.subr.mxu0 0.0
      %2604 = vmatpush1.msra.mxu0 %v2392
      %2605 = vmatprep.subr.mxu0 0.0
      %2606 = vmatpush1.msra.mxu0 0.0
      %2607 = vmatprep.subr.mxu0 0.0
      %2608 = vmatpush1.msra.mxu0 0.0
      %2609 = vmatprep.subr.mxu0 0.0
      %2610 = vmatpush1.msra.mxu0 0.0
      %2611 = vmatprep.subr.mxu0 0.0
      %2612 = vmatpush1.msra.mxu0 0.0
      %2613 = vmatprep.subr.mxu0 0.0
      %2614 = vmatpush1.msra.mxu0 0.0
      %2615 = vmatprep.subr.mxu0 0.0
      %2616 = vmatpush1.msra.mxu0 0.0
      %2617 = vmatprep.subr.mxu0 0.0
      %2618 = vmatpush1.msra.mxu0 0.0
      %2619 = vmatprep.subr.mxu0 0.0
      %2620 = vmatpush1.msra.mxu0 0.0
      %2621 = vmatprep.subr.mxu0 0.0
      %2622 = vmatpush1.msra.mxu0 0.0
      %2623 = vmatprep.subr.mxu0 0.0
      %2624 = vmatpush1.msra.mxu0 0.0
      %2625 = vmatprep.subr.mxu0 0.0
      %2626 = vmatpush1.msra.mxu0 0.0
      %2627 = vmatprep.subr.mxu0 0.0
      %2628 = vmatpush1.msra.mxu0 0.0
      %2629 = vmatprep.subr.mxu0 0.0
      %2630 = vmatpush1.msra.mxu0 0.0
      %2631 = vmatprep.subr.mxu0 0.0
      %2632 = vmatpush1.msra.mxu0 0.0
      %2633 = vmatprep.subr.mxu0 0.0
      %2634 = vmatpush1.msra.mxu0 0.0
      %2635 = vmatprep.subr.mxu0 0.0
      %2636 = vmatpush1.msra.mxu0 0.0
      %2637 = vmatprep.subr.mxu0 0.0
      %2638 = vmatpush1.msra.mxu0 0.0
      %2639 = vmatprep.subr.mxu0 0.0
      %2640 = vmatpush1.msra.mxu0 0.0
      %2641 = vmatprep.subr.mxu0 0.0
      %2642 = vmatpush1.msra.mxu0 0.0
      %2643 = vmatprep.subr.mxu0 0.0
      %2644 = vmatpush1.msra.mxu0 0.0
      %2645 = vmatprep.subr.mxu0 0.0
      %2646 = vmatpush1.msra.mxu0 0.0
      %2647 = vmatprep.subr.mxu0 0.0
      %2648 = vmatpush1.msra.mxu0 0.0
      %2649 = vmatprep.subr.mxu0 0.0
      %2650 = vmatpush1.msra.mxu0 0.0
      %2651 = vmatprep.subr.mxu0 0.0
      %2652 = vmatpush1.msra.mxu0 0.0
      %2653 = vmatprep.mubr.f32.mxu0 0.0
      %2654 = vmatmul.mubr.f32.gmra.mrb[0].mxu0 %v2398
      %v2655 = vpop.f32.mrb[0].mxu0
      %v2656 = vadd.f32 %v2396, %v2655
      %v2657 = vpop.f32.mrb[0].mxu0
      %2658 = vmatprep.mubr.f32.mxu0 0.0
      %2659 = vmatmul.mubr.f32.gmra.mrb[0].mxu0 %v2401
      %v2660 = vpop.f32.mrb[0].mxu0
      %v2661 = vadd.f32 %v2396, %v2660
      %v2662 = vpop.f32.mrb[0].mxu0
      %2663 = vmatprep.mubr.f32.mxu0 0.0
      %2664 = vmatmul.mubr.f32.gmra.mrb[0].mxu0 %v2404
      %v2665 = vpop.f32.mrb[0].mxu0
      %v2666 = vadd.f32 %v2396, %v2665
      %v2667 = vpop.f32.mrb[0].mxu0
      %2668 = vmatprep.mubr.f32.mxu0 0.0
      %2669 = vmatmul.mubr.f32.gmra.mrb[0].mxu0 %v2407
      %v2670 = vpop.f32.mrb[0].mxu0
      %v2671 = vadd.f32 %v2396, %v2670
      %v2672 = vpop.f32.mrb[0].mxu0
      %2673 = vmatprep.mubr.f32.mxu0 0.0
      %2674 = vmatmul.mubr.f32.gmra.mrb[0].mxu0 %v2410
      %v2675 = vpop.f32.mrb[0].mxu0
      %v2676 = vadd.f32 %v2396, %v2675
      %v2677 = vpop.f32.mrb[0].mxu0
      %2678 = vmatprep.mubr.f32.mxu0 0.0
      %2679 = vmatmul.mubr.f32.gmra.mrb[0].mxu0 %v2413
      %v2680 = vpop.f32.mrb[0].mxu0
      %v2681 = vadd.f32 %v2396, %v2680
      %v2682 = vpop.f32.mrb[0].mxu0
      %2683 = vmatprep.mubr.f32.mxu0 0.0
      %2684 = vmatmul.mubr.f32.gmra.mrb[0].mxu0 %v2416
      %v2685 = vpop.f32.mrb[0].mxu0
      %v2686 = vadd.f32 %v2396, %v2685
      %v2687 = vpop.f32.mrb[0].mxu0
      %2688 = vmatprep.mubr.f32.mxu0 0.0
      %2689 = vmatmul.mubr.f32.gmra.mrb[0].mxu0 %v2419
      %v2690 = vpop.f32.mrb[0].mxu0
      %v2691 = vadd.f32 %v2396, %v2690
      %v2692 = vpop.f32.mrb[0].mxu0
      %2693 = vmatprep.mubr.f32.mxu0 0.0
      %2694 = vmatmul.mubr.f32.gmra.mrb[0].mxu0 %v2422
      %v2695 = vpop.f32.mrb[0].mxu0
      %v2696 = vadd.f32 %v2396, %v2695
      %v2697 = vpop.f32.mrb[0].mxu0
      %2698 = vmatprep.mubr.f32.mxu0 0.0
      %2699 = vmatmul.mubr.f32.gmra.mrb[0].mxu0 %v2425
      %v2700 = vpop.f32.mrb[0].mxu0
      %v2701 = vadd.f32 %v2396, %v2700
      %v2702 = vpop.f32.mrb[0].mxu0
      %2703 = vmatprep.mubr.f32.mxu0 0.0
      %2704 = vmatmul.mubr.f32.gmra.mrb[0].mxu0 %v2428
      %v2705 = vpop.f32.mrb[0].mxu0
      %v2706 = vadd.f32 %v2396, %v2705
      %v2707 = vpop.f32.mrb[0].mxu0
      %2708 = vmatprep.mubr.f32.mxu0 0.0
      %2709 = vmatmul.mubr.f32.gmra.mrb[0].mxu0 %v2431
      %v2710 = vpop.f32.mrb[0].mxu0
      %v2711 = vadd.f32 %v2396, %v2710
      %v2712 = vpop.f32.mrb[0].mxu0
      %2713 = vmatprep.mubr.f32.mxu0 0.0
      %2714 = vmatmul.mubr.f32.gmra.mrb[0].mxu0 %v2434
      %v2715 = vpop.f32.mrb[0].mxu0
      %v2716 = vadd.f32 %v2396, %v2715
      %v2717 = vpop.f32.mrb[0].mxu0
      %2718 = vmatprep.mubr.f32.mxu0 0.0
      %2719 = vmatmul.mubr.f32.gmra.mrb[0].mxu0 %v2437
      %v2720 = vpop.f32.mrb[0].mxu0
      %v2721 = vadd.f32 %v2396, %v2720
      %v2722 = vpop.f32.mrb[0].mxu0
      %2723 = vmatprep.mubr.f32.mxu0 0.0
      %2724 = vmatmul.mubr.f32.gmra.mrb[0].mxu0 %v2440
      %v2725 = vpop.f32.mrb[0].mxu0
      %v2726 = vadd.f32 %v2396, %v2725
      %v2727 = vpop.f32.mrb[0].mxu0
      %2728 = vmatprep.mubr.f32.mxu0 0.0
      %2729 = vmatmul.mubr.f32.gmra.mrb[0].mxu0 %v2443
      %v2730 = vpop.f32.mrb[0].mxu0
      %v2731 = vadd.f32 %v2396, %v2730
      %v2732 = vpop.f32.mrb[0].mxu0
      %2733 = vmatprep.mubr.f32.mxu0 0.0
      %2734 = vmatmul.mubr.f32.gmra.mrb[0].mxu0 %v2446
      %v2735 = vpop.f32.mrb[0].mxu0
      %v2736 = vadd.f32 %v2396, %v2735
      %v2737 = vpop.f32.mrb[0].mxu0
      %2738 = vmatprep.mubr.f32.mxu0 0.0
      %2739 = vmatmul.mubr.f32.gmra.mrb[0].mxu0 %v2449
      %v2740 = vpop.f32.mrb[0].mxu0
      %v2741 = vadd.f32 %v2396, %v2740
      %v2742 = vpop.f32.mrb[0].mxu0
      %2743 = vmatprep.mubr.f32.mxu0 0.0
      %2744 = vmatmul.mubr.f32.gmra.mrb[0].mxu0 %v2452
      %v2745 = vpop.f32.mrb[0].mxu0
      %v2746 = vadd.f32 %v2396, %v2745
      %v2747 = vpop.f32.mrb[0].mxu0
      %2748 = vmatprep.mubr.f32.mxu0 0.0
      %2749 = vmatmul.mubr.f32.gmra.mrb[0].mxu0 %v2455
      %v2750 = vpop.f32.mrb[0].mxu0
      %v2751 = vadd.f32 %v2396, %v2750
      %v2752 = vpop.f32.mrb[0].mxu0
      %2753 = vmatprep.mubr.f32.mxu0 0.0
      %2754 = vmatmul.mubr.f32.gmra.mrb[0].mxu0 %v2458
      %v2755 = vpop.f32.mrb[0].mxu0
      %v2756 = vadd.f32 %v2396, %v2755
      %v2757 = vpop.f32.mrb[0].mxu0
      %2758 = vmatprep.mubr.f32.mxu0 0.0
      %2759 = vmatmul.mubr.f32.gmra.mrb[0].mxu0 %v2461
      %v2760 = vpop.f32.mrb[0].mxu0
      %v2761 = vadd.f32 %v2396, %v2760
      %v2762 = vpop.f32.mrb[0].mxu0
      %2763 = vmatprep.mubr.f32.mxu0 0.0
      %2764 = vmatmul.mubr.f32.gmra.mrb[0].mxu0 %v2464
      %v2765 = vpop.f32.mrb[0].mxu0
      %v2766 = vadd.f32 %v2396, %v2765
      %v2767 = vpop.f32.mrb[0].mxu0
      %2768 = vmatprep.mubr.f32.mxu0 0.0
      %2769 = vmatmul.mubr.f32.gmra.mrb[0].mxu0 %v2467
      %v2770 = vpop.f32.mrb[0].mxu0
      %v2771 = vadd.f32 %v2396, %v2770
      %v2772 = vpop.f32.mrb[0].mxu0
      %2773 = vmatprep.mubr.f32.mxu0 0.0
      %2774 = vmatmul.mubr.f32.gmra.mrb[0].mxu0 %v2470
      %v2775 = vpop.f32.mrb[0].mxu0
      %v2776 = vadd.f32 %v2396, %v2775
      %v2777 = vpop.f32.mrb[0].mxu0
      %2778 = vmatprep.mubr.f32.mxu0 0.0
      %2779 = vmatmul.mubr.f32.gmra.mrb[0].mxu0 %v2473
      %v2780 = vpop.f32.mrb[0].mxu0
      %v2781 = vadd.f32 %v2396, %v2780
      %v2782 = vpop.f32.mrb[0].mxu0
      %2783 = vmatprep.mubr.f32.mxu0 0.0
      %2784 = vmatmul.mubr.f32.gmra.mrb[0].mxu0 %v2476
      %v2785 = vpop.f32.mrb[0].mxu0
      %v2786 = vadd.f32 %v2396, %v2785
      %v2787 = vpop.f32.mrb[0].mxu0
      %2788 = vmatprep.mubr.f32.mxu0 0.0
      %2789 = vmatmul.mubr.f32.gmra.mrb[0].mxu0 %v2479
      %v2790 = vpop.f32.mrb[0].mxu0
      %v2791 = vadd.f32 %v2396, %v2790
      %v2792 = vpop.f32.mrb[0].mxu0
      %2793 = vmatprep.mubr.f32.mxu0 0.0
      %2794 = vmatmul.mubr.f32.gmra.mrb[0].mxu0 %v2482
      %v2795 = vpop.f32.mrb[0].mxu0
      %v2796 = vadd.f32 %v2396, %v2795
      %v2797 = vpop.f32.mrb[0].mxu0
      %2798 = vmatprep.mubr.f32.mxu0 0.0
      %2799 = vmatmul.mubr.f32.gmra.mrb[0].mxu0 %v2485
      %v2800 = vpop.f32.mrb[0].mxu0
      %v2801 = vadd.f32 %v2396, %v2800
      %v2802 = vpop.f32.mrb[0].mxu0
      %2803 = vmatprep.mubr.f32.mxu0 0.0
      %2804 = vmatmul.mubr.f32.gmra.mrb[0].mxu0 %v2488
      %v2805 = vpop.f32.mrb[0].mxu0
      %v2806 = vadd.f32 %v2396, %v2805
      %v2807 = vpop.f32.mrb[0].mxu0
      %2808 = vmatprep.mubr.f32.mxu0 0.0
      %2809 = vmatmul.mubr.f32.gmra.mrb[0].mxu0 %v2491
      %v2810 = vpop.f32.mrb[0].mxu0
      %v2811 = vadd.f32 %v2396, %v2810
      %v2812 = vpop.f32.mrb[0].mxu0
      %2813 = vmatprep.mubr.f32.mxu0 0.0
      %2814 = vmatmul.mubr.f32.gmra.mrb[0].mxu0 %v2494
      %v2815 = vpop.f32.mrb[0].mxu0
      %v2816 = vadd.f32 %v2396, %v2815
      %v2817 = vpop.f32.mrb[0].mxu0
      %2818 = vmatprep.mubr.f32.mxu0 0.0
      %2819 = vmatmul.mubr.f32.gmra.mrb[0].mxu0 %v2497
      %v2820 = vpop.f32.mrb[0].mxu0
      %v2821 = vadd.f32 %v2396, %v2820
      %v2822 = vpop.f32.mrb[0].mxu0
      %2823 = vmatprep.mubr.f32.mxu0 0.0
      %2824 = vmatmul.mubr.f32.gmra.mrb[0].mxu0 %v2500
      %v2825 = vpop.f32.mrb[0].mxu0
      %v2826 = vadd.f32 %v2396, %v2825
      %v2827 = vpop.f32.mrb[0].mxu0
      %2828 = vmatprep.mubr.f32.mxu0 0.0
      %2829 = vmatmul.mubr.f32.gmra.mrb[0].mxu0 %v2503
      %v2830 = vpop.f32.mrb[0].mxu0
      %v2831 = vadd.f32 %v2396, %v2830
      %v2832 = vpop.f32.mrb[0].mxu0
      %2833 = vmatprep.mubr.f32.mxu0 0.0
      %2834 = vmatmul.mubr.f32.gmra.mrb[0].mxu0 %v2506
      %v2835 = vpop.f32.mrb[0].mxu0
      %v2836 = vadd.f32 %v2396, %v2835
      %v2837 = vpop.f32.mrb[0].mxu0
      %2838 = vmatprep.mubr.f32.mxu0 0.0
      %2839 = vmatmul.mubr.f32.gmra.mrb[0].mxu0 %v2509
      %v2840 = vpop.f32.mrb[0].mxu0
      %v2841 = vadd.f32 %v2396, %v2840
      %v2842 = vpop.f32.mrb[0].mxu0
      %2843 = vmatprep.mubr.f32.mxu0 0.0
      %2844 = vmatmul.mubr.f32.gmra.mrb[0].mxu0 %v2512
      %v2845 = vpop.f32.mrb[0].mxu0
      %v2846 = vadd.f32 %v2396, %v2845
      %v2847 = vpop.f32.mrb[0].mxu0
      %2848 = vmatprep.mubr.f32.mxu0 0.0
      %2849 = vmatmul.mubr.f32.gmra.mrb[0].mxu0 %v2515
      %v2850 = vpop.f32.mrb[0].mxu0
      %v2851 = vadd.f32 %v2396, %v2850
      %v2852 = vpop.f32.mrb[0].mxu0
      %2853 = vmatprep.mubr.f32.mxu0 0.0
      %2854 = vmatmul.mubr.f32.gmra.mrb[0].mxu0 %v2518
      %v2855 = vpop.f32.mrb[0].mxu0
      %v2856 = vadd.f32 %v2396, %v2855
      %v2857 = vpop.f32.mrb[0].mxu0
      %2858 = vmatprep.mubr.f32.mxu0 0.0
      %2859 = vmatmul.mubr.f32.gmra.mrb[0].mxu0 %v2521
      %v2860 = vpop.f32.mrb[0].mxu0
      %v2861 = vadd.f32 %v2396, %v2860
      %v2862 = vpop.f32.mrb[0].mxu0
      %2863 = vmatprep.mubr.f32.mxu0 0.0
      %2864 = vmatmul.mubr.f32.gmra.mrb[0].mxu0 %v2524
      %v2865 = vpop.f32.mrb[0].mxu0
      %v2866 = vadd.f32 %v2396, %v2865
      %v2867 = vpop.f32.mrb[0].mxu0
      %2868 = vmatprep.mubr.f32.mxu0 0.0
      %2869 = vmatmul.mubr.f32.gmra.mrb[0].mxu0 %v2527
      %v2870 = vpop.f32.mrb[0].mxu0
      %v2871 = vadd.f32 %v2396, %v2870
      %v2872 = vpop.f32.mrb[0].mxu0
      %2873 = vmatprep.mubr.f32.mxu0 0.0
      %2874 = vmatmul.mubr.f32.gmra.mrb[0].mxu0 %v2530
      %v2875 = vpop.f32.mrb[0].mxu0
      %v2876 = vadd.f32 %v2396, %v2875
      %v2877 = vpop.f32.mrb[0].mxu0
      %2878 = vmatprep.mubr.f32.mxu0 0.0
      %2879 = vmatmul.mubr.f32.gmra.mrb[0].mxu0 %v2533
      %v2880 = vpop.f32.mrb[0].mxu0
      %v2881 = vadd.f32 %v2396, %v2880
      %v2882 = vpop.f32.mrb[0].mxu0
      %2883 = vmatprep.mubr.f32.mxu0 0.0
      %2884 = vmatmul.mubr.f32.gmra.mrb[0].mxu0 %v2536
      %v2885 = vpop.f32.mrb[0].mxu0
      %v2886 = vadd.f32 %v2396, %v2885
      %v2887 = vpop.f32.mrb[0].mxu0
      %2888 = vmatprep.mubr.f32.mxu0 0.0
      %2889 = vmatmul.mubr.f32.gmra.mrb[0].mxu0 %v2539
      %v2890 = vpop.f32.mrb[0].mxu0
      %v2891 = vadd.f32 %v2396, %v2890
      %v2892 = vpop.f32.mrb[0].mxu0
      %2893 = vmatprep.mubr.f32.mxu0 0.0
      %2894 = vmatmul.mubr.f32.gmra.mrb[0].mxu0 %v2542
      %v2895 = vpop.f32.mrb[0].mxu0
      %v2896 = vadd.f32 %v2396, %v2895
      %v2897 = vpop.f32.mrb[0].mxu0
      %2898 = vmatprep.mubr.f32.mxu0 0.0
      %2899 = vmatmul.mubr.f32.gmra.mrb[0].mxu0 %v2545
      %v2900 = vpop.f32.mrb[0].mxu0
      %v2901 = vadd.f32 %v2396, %v2900
      %v2902 = vpop.f32.mrb[0].mxu0
      %2903 = vmatprep.mubr.f32.mxu0 0.0
      %2904 = vmatmul.mubr.f32.gmra.mrb[0].mxu0 %v2548
      %v2905 = vpop.f32.mrb[0].mxu0
      %v2906 = vadd.f32 %v2396, %v2905
      %v2907 = vpop.f32.mrb[0].mxu0
      %2908 = vmatprep.mubr.f32.mxu0 0.0
      %2909 = vmatmul.mubr.f32.gmra.mrb[0].mxu0 %v2551
      %v2910 = vpop.f32.mrb[0].mxu0
      %v2911 = vadd.f32 %v2396, %v2910
      %v2912 = vpop.f32.mrb[0].mxu0
      %2913 = vmatprep.mubr.f32.mxu0 0.0
      %2914 = vmatmul.mubr.f32.gmra.mrb[0].mxu0 %v2554
      %v2915 = vpop.f32.mrb[0].mxu0
      %v2916 = vadd.f32 %v2396, %v2915
      %v2917 = vpop.f32.mrb[0].mxu0
      %2918 = vmatprep.mubr.f32.mxu0 0.0
      %2919 = vmatmul.mubr.f32.gmra.mrb[0].mxu0 %v2557
      %v2920 = vpop.f32.mrb[0].mxu0
      %v2921 = vadd.f32 %v2396, %v2920
      %v2922 = vpop.f32.mrb[0].mxu0
      %2923 = vmatprep.mubr.f32.mxu0 0.0
      %2924 = vmatmul.mubr.f32.gmra.mrb[0].mxu0 %v2560
      %v2925 = vpop.f32.mrb[0].mxu0
      %v2926 = vadd.f32 %v2396, %v2925
      %v2927 = vpop.f32.mrb[0].mxu0
      %2928 = vmatprep.mubr.f32.mxu0 0.0
      %2929 = vmatmul.mubr.f32.gmra.mrb[0].mxu0 %v2563
      %v2930 = vpop.f32.mrb[0].mxu0
      %v2931 = vadd.f32 %v2396, %v2930
      %v2932 = vpop.f32.mrb[0].mxu0
      %2933 = vmatprep.mubr.f32.mxu0 0.0
      %2934 = vmatmul.mubr.f32.gmra.mrb[0].mxu0 %v2566
      %v2935 = vpop.f32.mrb[0].mxu0
      %v2936 = vadd.f32 %v2396, %v2935
      %v2937 = vpop.f32.mrb[0].mxu0
      %2938 = vmatprep.mubr.f32.mxu0 0.0
      %2939 = vmatmul.mubr.f32.gmra.mrb[0].mxu0 %v2569
      %v2940 = vpop.f32.mrb[0].mxu0
      %v2941 = vadd.f32 %v2396, %v2940
      %v2942 = vpop.f32.mrb[0].mxu0
      %2943 = vmatprep.mubr.f32.mxu0 0.0
      %2944 = vmatmul.mubr.f32.gmra.mrb[0].mxu0 %v2572
      %v2945 = vpop.f32.mrb[0].mxu0
      %v2946 = vadd.f32 %v2396, %v2945
      %v2947 = vpop.f32.mrb[0].mxu0
      %2948 = vmatprep.mubr.f32.mxu0 0.0
      %2949 = vmatmul.mubr.f32.gmra.mrb[0].mxu0 %v2575
      %v2950 = vpop.f32.mrb[0].mxu0
      %v2951 = vadd.f32 %v2396, %v2950
      %v2952 = vpop.f32.mrb[0].mxu0
      %2953 = vmatprep.mubr.f32.mxu0 0.0
      %2954 = vmatmul.mubr.f32.gmra.mrb[0].mxu0 %v2578
      %v2955 = vpop.f32.mrb[0].mxu0
      %v2956 = vadd.f32 %v2396, %v2955
      %v2957 = vpop.f32.mrb[0].mxu0
      %2958 = vmatprep.mubr.f32.mxu0 0.0
      %2959 = vmatmul.mubr.f32.gmra.mrb[0].mxu0 %v2581
      %v2960 = vpop.f32.mrb[0].mxu0
      %v2961 = vadd.f32 %v2396, %v2960
      %v2962 = vpop.f32.mrb[0].mxu0
      %2963 = vmatprep.mubr.f32.mxu0 0.0
      %2964 = vmatmul.mubr.f32.gmra.mrb[0].mxu0 %v2584
      %v2965 = vpop.f32.mrb[0].mxu0
      %v2966 = vadd.f32 %v2396, %v2965
      %v2967 = vpop.f32.mrb[0].mxu0
      %2968 = vmatprep.mubr.f32.mxu0 0.0
      %2969 = vmatmul.mubr.f32.gmra.mrb[0].mxu0 %v2587
      %v2970 = vpop.f32.mrb[0].mxu0
      %v2971 = vadd.f32 %v2396, %v2970
      %v2972 = vpop.f32.mrb[0].mxu0
      %2973 = vdwg.mxu0
      %v2974 = vtanh.pop %v2656
      %v2975 = vtanh.pop %v2661
      %v2976 = vtanh.pop %v2666
      %v2977 = vtanh.pop %v2671
      %v2978 = vtanh.pop %v2676
      %v2979 = vtanh.pop %v2681
      %v2980 = vtanh.pop %v2686
      %v2981 = vtanh.pop %v2691
      %v2982 = vtanh.pop %v2696
      %v2983 = vtanh.pop %v2701
      %v2984 = vtanh.pop %v2706
      %v2985 = vtanh.pop %v2711
      %v2986 = vtanh.pop %v2716
      %v2987 = vtanh.pop %v2721
      %v2988 = vtanh.pop %v2726
      %v2989 = vtanh.pop %v2731
      %v2990 = vtanh.pop %v2736
      %v2991 = vtanh.pop %v2741
      %v2992 = vtanh.pop %v2746
      %v2993 = vtanh.pop %v2751
      %v2994 = vtanh.pop %v2756
      %v2995 = vtanh.pop %v2761
      %v2996 = vtanh.pop %v2766
      %v2997 = vtanh.pop %v2771
      %v2998 = vtanh.pop %v2776
      %v2999 = vtanh.pop %v2781
      %v3000 = vtanh.pop %v2786
      %v3001 = vtanh.pop %v2791
      %v3002 = vtanh.pop %v2796
      %v3003 = vtanh.pop %v2801
      %v3004 = vtanh.pop %v2806
      %v3005 = vtanh.pop %v2811
      %v3006 = vtanh.pop %v2816
      %v3007 = vtanh.pop %v2821
      %v3008 = vtanh.pop %v2826
      %v3009 = vtanh.pop %v2831
      %v3010 = vtanh.pop %v2836
      %v3011 = vtanh.pop %v2841
      %v3012 = vtanh.pop %v2846
      %v3013 = vtanh.pop %v2851
      %v3014 = vtanh.pop %v2856
      %v3015 = vtanh.pop %v2861
      %v3016 = vtanh.pop %v2866
      %v3017 = vtanh.pop %v2871
      %v3018 = vtanh.pop %v2876
      %v3019 = vtanh.pop %v2881
      %v3020 = vtanh.pop %v2886
      %v3021 = vtanh.pop %v2891
      %v3022 = vtanh.pop %v2896
      %v3023 = vtanh.pop %v2901
      %v3024 = vtanh.pop %v2906
      %v3025 = vtanh.pop %v2911
      %v3026 = vtanh.pop %v2916
      %v3027 = vtanh.pop %v2921
      %v3028 = vtanh.pop %v2926
      %v3029 = vtanh.pop %v2931
      %v3030 = vtanh.pop %v2936
      %v3031 = vtanh.pop %v2941
      %v3032 = vtanh.pop %v2946
      %v3033 = vtanh.pop %v2951
      %v3034 = vtanh.pop %v2956
      %v3035 = vtanh.pop %v2961
      %v3036 = vtanh.pop %v2966
      %v3037 = vtanh.pop %v2971
      %v3038 = vmul.f32 %v2974, 100.0
      %v3039 = vmul.f32 %v2975, 100.0
      %v3040 = vmul.f32 %v2976, 100.0
      %v3041 = vmul.f32 %v2977, 100.0
      %v3042 = vmul.f32 %v2978, 100.0
      %v3043 = vmul.f32 %v2979, 100.0
      %v3044 = vmul.f32 %v2980, 100.0
      %v3045 = vmul.f32 %v2981, 100.0
      %v3046 = vmul.f32 %v2982, 100.0
      %v3047 = vmul.f32 %v2983, 100.0
      %v3048 = vmul.f32 %v2984, 100.0
      %v3049 = vmul.f32 %v2985, 100.0
      %v3050 = vmul.f32 %v2986, 100.0
      %v3051 = vmul.f32 %v2987, 100.0
      %v3052 = vmul.f32 %v2988, 100.0
      %v3053 = vmul.f32 %v2989, 100.0
      %v3054 = vmul.f32 %v2990, 100.0
      %v3055 = vmul.f32 %v2991, 100.0
      %v3056 = vmul.f32 %v2992, 100.0
      %v3057 = vmul.f32 %v2993, 100.0
      %v3058 = vmul.f32 %v2994, 100.0
      %v3059 = vmul.f32 %v2995, 100.0
      %v3060 = vmul.f32 %v2996, 100.0
      %v3061 = vmul.f32 %v2997, 100.0
      %v3062 = vmul.f32 %v2998, 100.0
      %v3063 = vmul.f32 %v2999, 100.0
      %v3064 = vmul.f32 %v3000, 100.0
      %v3065 = vmul.f32 %v3001, 100.0
      %v3066 = vmul.f32 %v3002, 100.0
      %v3067 = vmul.f32 %v3003, 100.0
      %v3068 = vmul.f32 %v3004, 100.0
      %v3069 = vmul.f32 %v3005, 100.0
      %v3070 = vmul.f32 %v3006, 100.0
      %v3071 = vmul.f32 %v3007, 100.0
      %v3072 = vmul.f32 %v3008, 100.0
      %v3073 = vmul.f32 %v3009, 100.0
      %v3074 = vmul.f32 %v3010, 100.0
      %v3075 = vmul.f32 %v3011, 100.0
      %v3076 = vmul.f32 %v3012, 100.0
      %v3077 = vmul.f32 %v3013, 100.0
      %v3078 = vmul.f32 %v3014, 100.0
      %v3079 = vmul.f32 %v3015, 100.0
      %v3080 = vmul.f32 %v3016, 100.0
      %v3081 = vmul.f32 %v3017, 100.0
      %v3082 = vmul.f32 %v3018, 100.0
      %v3083 = vmul.f32 %v3019, 100.0
      %v3084 = vmul.f32 %v3020, 100.0
      %v3085 = vmul.f32 %v3021, 100.0
      %v3086 = vmul.f32 %v3022, 100.0
      %v3087 = vmul.f32 %v3023, 100.0
      %v3088 = vmul.f32 %v3024, 100.0
      %v3089 = vmul.f32 %v3025, 100.0
      %v3090 = vmul.f32 %v3026, 100.0
      %v3091 = vmul.f32 %v3027, 100.0
      %v3092 = vmul.f32 %v3028, 100.0
      %v3093 = vmul.f32 %v3029, 100.0
      %v3094 = vmul.f32 %v3030, 100.0
      %v3095 = vmul.f32 %v3031, 100.0
      %v3096 = vmul.f32 %v3032, 100.0
      %v3097 = vmul.f32 %v3033, 100.0
      %v3098 = vmul.f32 %v3034, 100.0
      %v3099 = vmul.f32 %v3035, 100.0
      %v3100 = vmul.f32 %v3036, 100.0
      %v3101 = vmul.f32 %v3037, 100.0
      %vm3102 = vcmask 15360
      %v3103 = vsel %vm3102, %v3038, inf
      %3104 = vmin.xlane.f32.xlu0 %v3103
      %v3105 = vpop.xlane.xlu0 %3104
      %v3106 = vsel %vm3102, %v3039, inf
      %3107 = vmin.xlane.f32.xlu0 %v3106
      %v3108 = vpop.xlane.xlu0 %3107
      %v3109 = vsel %vm3102, %v3040, inf
      %3110 = vmin.xlane.f32.xlu0 %v3109
      %v3111 = vpop.xlane.xlu0 %3110
      %v3112 = vsel %vm3102, %v3041, inf
      %3113 = vmin.xlane.f32.xlu0 %v3112
      %v3114 = vpop.xlane.xlu0 %3113
      %v3115 = vsel %vm3102, %v3042, inf
      %3116 = vmin.xlane.f32.xlu0 %v3115
      %v3117 = vpop.xlane.xlu0 %3116
      %v3118 = vsel %vm3102, %v3043, inf
      %3119 = vmin.xlane.f32.xlu0 %v3118
      %v3120 = vpop.xlane.xlu0 %3119
      %v3121 = vsel %vm3102, %v3044, inf
      %3122 = vmin.xlane.f32.xlu0 %v3121
      %v3123 = vpop.xlane.xlu0 %3122
      %v3124 = vsel %vm3102, %v3045, inf
      %3125 = vmin.xlane.f32.xlu0 %v3124
      %v3126 = vpop.xlane.xlu0 %3125
      %v3127 = vsel %vm3102, %v3046, inf
      %3128 = vmin.xlane.f32.xlu0 %v3127
      %v3129 = vpop.xlane.xlu0 %3128
      %v3130 = vsel %vm3102, %v3047, inf
      %3131 = vmin.xlane.f32.xlu0 %v3130
      %v3132 = vpop.xlane.xlu0 %3131
      %v3133 = vsel %vm3102, %v3048, inf
      %3134 = vmin.xlane.f32.xlu0 %v3133
      %v3135 = vpop.xlane.xlu0 %3134
      %v3136 = vsel %vm3102, %v3049, inf
      %3137 = vmin.xlane.f32.xlu0 %v3136
      %v3138 = vpop.xlane.xlu0 %3137
      %v3139 = vsel %vm3102, %v3050, inf
      %3140 = vmin.xlane.f32.xlu0 %v3139
      %v3141 = vpop.xlane.xlu0 %3140
      %v3142 = vsel %vm3102, %v3051, inf
      %3143 = vmin.xlane.f32.xlu0 %v3142
      %v3144 = vpop.xlane.xlu0 %3143
      %v3145 = vsel %vm3102, %v3052, inf
      %3146 = vmin.xlane.f32.xlu0 %v3145
      %v3147 = vpop.xlane.xlu0 %3146
      %v3148 = vsel %vm3102, %v3053, inf
      %3149 = vmin.xlane.f32.xlu0 %v3148
      %v3150 = vpop.xlane.xlu0 %3149
      %v3151 = vsel %vm3102, %v3054, inf
      %3152 = vmin.xlane.f32.xlu0 %v3151
      %v3153 = vpop.xlane.xlu0 %3152
      %v3154 = vsel %vm3102, %v3055, inf
      %3155 = vmin.xlane.f32.xlu0 %v3154
      %v3156 = vpop.xlane.xlu0 %3155
      %v3157 = vsel %vm3102, %v3056, inf
      %3158 = vmin.xlane.f32.xlu0 %v3157
      %v3159 = vpop.xlane.xlu0 %3158
      %v3160 = vsel %vm3102, %v3057, inf
      %3161 = vmin.xlane.f32.xlu0 %v3160
      %v3162 = vpop.xlane.xlu0 %3161
      %v3163 = vsel %vm3102, %v3058, inf
      %3164 = vmin.xlane.f32.xlu0 %v3163
      %v3165 = vpop.xlane.xlu0 %3164
      %v3166 = vsel %vm3102, %v3059, inf
      %3167 = vmin.xlane.f32.xlu0 %v3166
      %v3168 = vpop.xlane.xlu0 %3167
      %v3169 = vsel %vm3102, %v3060, inf
      %3170 = vmin.xlane.f32.xlu0 %v3169
      %v3171 = vpop.xlane.xlu0 %3170
      %v3172 = vsel %vm3102, %v3061, inf
      %3173 = vmin.xlane.f32.xlu0 %v3172
      %v3174 = vpop.xlane.xlu0 %3173
      %v3175 = vsel %vm3102, %v3062, inf
      %3176 = vmin.xlane.f32.xlu0 %v3175
      %v3177 = vpop.xlane.xlu0 %3176
      %v3178 = vsel %vm3102, %v3063, inf
      %3179 = vmin.xlane.f32.xlu0 %v3178
      %v3180 = vpop.xlane.xlu0 %3179
      %v3181 = vsel %vm3102, %v3064, inf
      %3182 = vmin.xlane.f32.xlu0 %v3181
      %v3183 = vpop.xlane.xlu0 %3182
      %v3184 = vsel %vm3102, %v3065, inf
      %3185 = vmin.xlane.f32.xlu0 %v3184
      %v3186 = vpop.xlane.xlu0 %3185
      %v3187 = vsel %vm3102, %v3066, inf
      %3188 = vmin.xlane.f32.xlu0 %v3187
      %v3189 = vpop.xlane.xlu0 %3188
      %v3190 = vsel %vm3102, %v3067, inf
      %3191 = vmin.xlane.f32.xlu0 %v3190
      %v3192 = vpop.xlane.xlu0 %3191
      %v3193 = vsel %vm3102, %v3068, inf
      %3194 = vmin.xlane.f32.xlu0 %v3193
      %v3195 = vpop.xlane.xlu0 %3194
      %v3196 = vsel %vm3102, %v3069, inf
      %3197 = vmin.xlane.f32.xlu0 %v3196
      %v3198 = vpop.xlane.xlu0 %3197
      %v3199 = vsel %vm3102, %v3070, inf
      %3200 = vmin.xlane.f32.xlu0 %v3199
      %v3201 = vpop.xlane.xlu0 %3200
      %v3202 = vsel %vm3102, %v3071, inf
      %3203 = vmin.xlane.f32.xlu0 %v3202
      %v3204 = vpop.xlane.xlu0 %3203
      %v3205 = vsel %vm3102, %v3072, inf
      %3206 = vmin.xlane.f32.xlu0 %v3205
      %v3207 = vpop.xlane.xlu0 %3206
      %v3208 = vsel %vm3102, %v3073, inf
      %3209 = vmin.xlane.f32.xlu0 %v3208
      %v3210 = vpop.xlane.xlu0 %3209
      %v3211 = vsel %vm3102, %v3074, inf
      %3212 = vmin.xlane.f32.xlu0 %v3211
      %v3213 = vpop.xlane.xlu0 %3212
      %v3214 = vsel %vm3102, %v3075, inf
      %3215 = vmin.xlane.f32.xlu0 %v3214
      %v3216 = vpop.xlane.xlu0 %3215
      %v3217 = vsel %vm3102, %v3076, inf
      %3218 = vmin.xlane.f32.xlu0 %v3217
      %v3219 = vpop.xlane.xlu0 %3218
      %v3220 = vsel %vm3102, %v3077, inf
      %3221 = vmin.xlane.f32.xlu0 %v3220
      %v3222 = vpop.xlane.xlu0 %3221
      %v3223 = vsel %vm3102, %v3078, inf
      %3224 = vmin.xlane.f32.xlu0 %v3223
      %v3225 = vpop.xlane.xlu0 %3224
      %v3226 = vsel %vm3102, %v3079, inf
      %3227 = vmin.xlane.f32.xlu0 %v3226
      %v3228 = vpop.xlane.xlu0 %3227
      %v3229 = vsel %vm3102, %v3080, inf
      %3230 = vmin.xlane.f32.xlu0 %v3229
      %v3231 = vpop.xlane.xlu0 %3230
      %v3232 = vsel %vm3102, %v3081, inf
      %3233 = vmin.xlane.f32.xlu0 %v3232
      %v3234 = vpop.xlane.xlu0 %3233
      %v3235 = vsel %vm3102, %v3082, inf
      %3236 = vmin.xlane.f32.xlu0 %v3235
      %v3237 = vpop.xlane.xlu0 %3236
      %v3238 = vsel %vm3102, %v3083, inf
      %3239 = vmin.xlane.f32.xlu0 %v3238
      %v3240 = vpop.xlane.xlu0 %3239
      %v3241 = vsel %vm3102, %v3084, inf
      %3242 = vmin.xlane.f32.xlu0 %v3241
      %v3243 = vpop.xlane.xlu0 %3242
      %v3244 = vsel %vm3102, %v3085, inf
      %3245 = vmin.xlane.f32.xlu0 %v3244
      %v3246 = vpop.xlane.xlu0 %3245
      %v3247 = vsel %vm3102, %v3086, inf
      %3248 = vmin.xlane.f32.xlu0 %v3247
      %v3249 = vpop.xlane.xlu0 %3248
      %v3250 = vsel %vm3102, %v3087, inf
      %3251 = vmin.xlane.f32.xlu0 %v3250
      %v3252 = vpop.xlane.xlu0 %3251
      %v3253 = vsel %vm3102, %v3088, inf
      %3254 = vmin.xlane.f32.xlu0 %v3253
      %v3255 = vpop.xlane.xlu0 %3254
      %v3256 = vsel %vm3102, %v3089, inf
      %3257 = vmin.xlane.f32.xlu0 %v3256
      %v3258 = vpop.xlane.xlu0 %3257
      %v3259 = vsel %vm3102, %v3090, inf
      %3260 = vmin.xlane.f32.xlu0 %v3259
      %v3261 = vpop.xlane.xlu0 %3260
      %v3262 = vsel %vm3102, %v3091, inf
      %3263 = vmin.xlane.f32.xlu0 %v3262
      %v3264 = vpop.xlane.xlu0 %3263
      %v3265 = vsel %vm3102, %v3092, inf
      %3266 = vmin.xlane.f32.xlu0 %v3265
      %v3267 = vpop.xlane.xlu0 %3266
      %v3268 = vsel %vm3102, %v3093, inf
      %3269 = vmin.xlane.f32.xlu0 %v3268
      %v3270 = vpop.xlane.xlu0 %3269
      %v3271 = vsel %vm3102, %v3094, inf
      %3272 = vmin.xlane.f32.xlu0 %v3271
      %v3273 = vpop.xlane.xlu0 %3272
      %v3274 = vsel %vm3102, %v3095, inf
      %3275 = vmin.xlane.f32.xlu0 %v3274
      %v3276 = vpop.xlane.xlu0 %3275
      %v3277 = vsel %vm3102, %v3096, inf
      %3278 = vmin.xlane.f32.xlu0 %v3277
      %v3279 = vpop.xlane.xlu0 %3278
      %v3280 = vsel %vm3102, %v3097, inf
      %3281 = vmin.xlane.f32.xlu0 %v3280
      %v3282 = vpop.xlane.xlu0 %3281
      %v3283 = vsel %vm3102, %v3098, inf
      %3284 = vmin.xlane.f32.xlu0 %v3283
      %v3285 = vpop.xlane.xlu0 %3284
      %v3286 = vsel %vm3102, %v3099, inf
      %3287 = vmin.xlane.f32.xlu0 %v3286
      %v3288 = vpop.xlane.xlu0 %3287
      %v3289 = vsel %vm3102, %v3100, inf
      %3290 = vmin.xlane.f32.xlu0 %v3289
      %v3291 = vpop.xlane.xlu0 %3290
      %v3292 = vsel %vm3102, %v3101, inf
      %3293 = vmin.xlane.f32.xlu0 %v3292
      %v3294 = vpop.xlane.xlu0 %3293
      %vm3295 = vcmask 7168
      %3296 = vst.msk [vmem:[%s302] sm:$0xff] %vm3295, %v3105
      %3297 = vst.msk [vmem:[%s302 + $0x8] sm:$0xff] %vm3295, %v3108
      %3298 = vst.msk [vmem:[%s302 + $0x10] sm:$0xff] %vm3295, %v3111
      %3299 = vst.msk [vmem:[%s302 + $0x18] sm:$0xff] %vm3295, %v3114
      %3300 = vst.msk [vmem:[%s302 + $0x20] sm:$0xff] %vm3295, %v3117
      %3301 = vst.msk [vmem:[%s302 + $0x28] sm:$0xff] %vm3295, %v3120
      %3302 = vst.msk [vmem:[%s302 + $0x30] sm:$0xff] %vm3295, %v3123
      %3303 = vst.msk [vmem:[%s302 + $0x38] sm:$0xff] %vm3295, %v3126
      %3304 = vst.msk [vmem:[%s302 + $0x40] sm:$0xff] %vm3295, %v3129
      %3305 = vst.msk [vmem:[%s302 + $0x48] sm:$0xff] %vm3295, %v3132
      %3306 = vst.msk [vmem:[%s302 + $0x50] sm:$0xff] %vm3295, %v3135
      %3307 = vst.msk [vmem:[%s302 + $0x58] sm:$0xff] %vm3295, %v3138
      %3308 = vst.msk [vmem:[%s302 + $0x60] sm:$0xff] %vm3295, %v3141
      %3309 = vst.msk [vmem:[%s302 + $0x68] sm:$0xff] %vm3295, %v3144
      %3310 = vst.msk [vmem:[%s302 + $0x70] sm:$0xff] %vm3295, %v3147
      %3311 = vst.msk [vmem:[%s302 + $0x78] sm:$0xff] %vm3295, %v3150
      %3312 = vst.msk [vmem:[%s302 + $0x80] sm:$0xff] %vm3295, %v3153
      %3313 = vst.msk [vmem:[%s302 + $0x88] sm:$0xff] %vm3295, %v3156
      %3314 = vst.msk [vmem:[%s302 + $0x90] sm:$0xff] %vm3295, %v3159
      %3315 = vst.msk [vmem:[%s302 + $0x98] sm:$0xff] %vm3295, %v3162
      %3316 = vst.msk [vmem:[%s302 + $0xa0] sm:$0xff] %vm3295, %v3165
      %3317 = vst.msk [vmem:[%s302 + $0xa8] sm:$0xff] %vm3295, %v3168
      %3318 = vst.msk [vmem:[%s302 + $0xb0] sm:$0xff] %vm3295, %v3171
      %3319 = vst.msk [vmem:[%s302 + $0xb8] sm:$0xff] %vm3295, %v3174
      %3320 = vst.msk [vmem:[%s302 + $0xc0] sm:$0xff] %vm3295, %v3177
      %3321 = vst.msk [vmem:[%s302 + $0xc8] sm:$0xff] %vm3295, %v3180
      %3322 = vst.msk [vmem:[%s302 + $0xd0] sm:$0xff] %vm3295, %v3183
      %3323 = vst.msk [vmem:[%s302 + $0xd8] sm:$0xff] %vm3295, %v3186
      %3324 = vst.msk [vmem:[%s302 + $0xe0] sm:$0xff] %vm3295, %v3189
      %3325 = vst.msk [vmem:[%s302 + $0xe8] sm:$0xff] %vm3295, %v3192
      %3326 = vst.msk [vmem:[%s302 + $0xf0] sm:$0xff] %vm3295, %v3195
      %3327 = vst.msk [vmem:[%s302 + $0xf8] sm:$0xff] %vm3295, %v3198
      %3328 = vst.msk [vmem:[%s302 + $0x100] sm:$0xff] %vm3295, %v3201
      %3329 = vst.msk [vmem:[%s302 + $0x108] sm:$0xff] %vm3295, %v3204
      %3330 = vst.msk [vmem:[%s302 + $0x110] sm:$0xff] %vm3295, %v3207
      %3331 = vst.msk [vmem:[%s302 + $0x118] sm:$0xff] %vm3295, %v3210
      %3332 = vst.msk [vmem:[%s302 + $0x120] sm:$0xff] %vm3295, %v3213
      %3333 = vst.msk [vmem:[%s302 + $0x128] sm:$0xff] %vm3295, %v3216
      %3334 = vst.msk [vmem:[%s302 + $0x130] sm:$0xff] %vm3295, %v3219
      %3335 = vst.msk [vmem:[%s302 + $0x138] sm:$0xff] %vm3295, %v3222
      %3336 = vst.msk [vmem:[%s302 + $0x140] sm:$0xff] %vm3295, %v3225
      %3337 = vst.msk [vmem:[%s302 + $0x148] sm:$0xff] %vm3295, %v3228
      %3338 = vst.msk [vmem:[%s302 + $0x150] sm:$0xff] %vm3295, %v3231
      %3339 = vst.msk [vmem:[%s302 + $0x158] sm:$0xff] %vm3295, %v3234
      %3340 = vst.msk [vmem:[%s302 + $0x160] sm:$0xff] %vm3295, %v3237
      %3341 = vst.msk [vmem:[%s302 + $0x168] sm:$0xff] %vm3295, %v3240
      %3342 = vst.msk [vmem:[%s302 + $0x170] sm:$0xff] %vm3295, %v3243
      %3343 = vst.msk [vmem:[%s302 + $0x178] sm:$0xff] %vm3295, %v3246
      %3344 = vst.msk [vmem:[%s302 + $0x180] sm:$0xff] %vm3295, %v3249
      %3345 = vst.msk [vmem:[%s302 + $0x188] sm:$0xff] %vm3295, %v3252
      %3346 = vst.msk [vmem:[%s302 + $0x190] sm:$0xff] %vm3295, %v3255
      %3347 = vst.msk [vmem:[%s302 + $0x198] sm:$0xff] %vm3295, %v3258
      %3348 = vst.msk [vmem:[%s302 + $0x1a0] sm:$0xff] %vm3295, %v3261
      %3349 = vst.msk [vmem:[%s302 + $0x1a8] sm:$0xff] %vm3295, %v3264
      %3350 = vst.msk [vmem:[%s302 + $0x1b0] sm:$0xff] %vm3295, %v3267
      %3351 = vst.msk [vmem:[%s302 + $0x1b8] sm:$0xff] %vm3295, %v3270
      %3352 = vst.msk [vmem:[%s302 + $0x1c0] sm:$0xff] %vm3295, %v3273
      %3353 = vst.msk [vmem:[%s302 + $0x1c8] sm:$0xff] %vm3295, %v3276
      %3354 = vst.msk [vmem:[%s302 + $0x1d0] sm:$0xff] %vm3295, %v3279
      %3355 = vst.msk [vmem:[%s302 + $0x1d8] sm:$0xff] %vm3295, %v3282
      %3356 = vst.msk [vmem:[%s302 + $0x1e0] sm:$0xff] %vm3295, %v3285
      %3357 = vst.msk [vmem:[%s302 + $0x1e8] sm:$0xff] %vm3295, %v3288
      %3358 = vst.msk [vmem:[%s302 + $0x1f0] sm:$0xff] %vm3295, %v3291
      %3359 = vst.msk [vmem:[%s302 + $0x1f8] sm:$0xff] %vm3295, %v3294
      %s3360 = smul.u32 64, %s18
      %p3361 = scmp.lt.s32.totalorder %s3360, 127
      %s3362 = scalar_select %p3361, %s3360, 127
      %s3363 = smul.addr %s3362, 8
      %s3364 = scalar_lea.vmem %s7, %s3363
      // Predicated region
      $region49: #{tpu_custom_call.1} parent=47 // pred_check
        %p3365 = pneg %p193
      $region50: #{tpu_custom_call.1} parent=47 // pred_check_branch
        %3367 = sbr.rel (%p3365) target = $region52
      $region51: #{tpu_custom_call.1} parent=47 // pred_region
        %s3368 = smul.u32 64, %s18
      $region52: #{tpu_custom_call.1} parent=47 // pred_fallthru
        _
    $region48: #{tpu_custom_call.1} parent=5 // pred_fallthru
      _
    %p3369 = scmp.le.s32.totalorder 2, %s13
    // Predicated region
    $region53: #{tpu_custom_call.1} parent=5 // pred_check
      %p3370 = pneg %p3369
    $region54: #{tpu_custom_call.1} parent=5 // pred_check_branch
      %3372 = sbr.rel (%p3370) target = $region56
    $region55: #{tpu_custom_call.1} parent=5 // pred_region
      %s3373 = ssub.s32 %s13, 2
      // Predicated region
      $region57: #{tpu_custom_call.1} parent=55 // pred_check
        %p3374 = pneg %p199
      $region58: #{tpu_custom_call.1} parent=55 // pred_check_branch
        %3376 = sbr.rel (%p3374) target = $region60
      $region59: #{tpu_custom_call.1} parent=55 // pred_region
        %s3377 = smul.u32 64, %s19
        %p3378 = scmp.lt.s32.totalorder %s3377, 127
        %s3379 = scalar_select %p3378, %s3377, 127
        %s3380 = smul.addr %s3379, 8
        %s3381 = scalar_lea.vmem %s7, %s3380
      $region60: #{tpu_custom_call.1} parent=55 // pred_fallthru
        _
    $region56: #{tpu_custom_call.1} parent=5 // pred_fallthru
      _
  $region6: #{tpu_custom_call.1} parent=0 // loop_footer
    %s17 = sadd.s32 1, %s13
  $region7: #{tpu_custom_call.1} parent=0 // loop_footer_branch
    %12 = sbr.rel target = $region3
  $region8: #{tpu_custom_call.1} parent=0 // loop_exit
    _

</llo_original>
